<compile_context>
chip_gen: v6e
topology: v6e:2x2x1
jax: 0.10.0
libtpu: 0.0.40
codegen_flags: <defaults>
</compile_context>

<pallas_src>
import functools
import math

import jax
import jax.numpy as jnp
from jax import lax
from jax.experimental import pallas as pl
from jax.experimental.pallas import tpu as pltpu

_BN_EPS = 1e-5
# TODO(synk): verify against upstream pytorch-AE; nn.LeakyReLU default is 0.01.
_LEAKY_SLOPE = 0.2


def _round_up(x, m):
    return (x + m - 1) // m * m


# ----------------------------------------------------------------------------
# Fused Pallas kernel: o = act(x @ w + shift)
#   x, w are bf16 (native MXU path, half the DMA bytes), accumulation + epilogue
#   in f32. BN scale is pre-folded into w's columns.
# ----------------------------------------------------------------------------
def _fused_matmul_kernel(x_ref, w_ref, shift_ref, o_ref, *, act):
    y = jnp.dot(x_ref[...], w_ref[...], preferred_element_type=jnp.float32)
    y = y + shift_ref[...]
    if act == "leaky_relu":
        y = jnp.where(y > 0, y, _LEAKY_SLOPE * y)
    elif act == "relu":
        y = jnp.maximum(y, 0.0)
    elif act == "sigmoid":
        y = jax.nn.sigmoid(y)
    elif act != "none":
        raise ValueError(act)
    o_ref[...] = y.astype(o_ref.dtype)


def _pick_tm(m):
    # Biggest tile that fits comfortably; single grid step for MNIST-scale M.
    if m <= 512:
        return _round_up(m, 8)
    for tm in (512, 384, 256, 128):
        if m % tm == 0:
            return tm
    return 256


def fused_matmul(x, w_bf16, shift, act, n_valid):
    """act(x @ w + shift). w is pre-padded (lanes multiple of 128) bf16."""
    m, k = x.shape
    k2, n_pad = w_bf16.shape
    assert k == k2 and n_pad % 128 == 0
    tm = _pick_tm(m)
    m_pad = _round_up(m, tm)
    xb = x.astype(jnp.bfloat16)
    if m_pad != m:  # only materialize a pad copy for the ragged tail
        xb = jnp.pad(xb, ((0, m_pad - m), (0, 0)))

    out = pl.pallas_call(
        functools.partial(_fused_matmul_kernel, act=act),
        out_shape=jax.ShapeDtypeStruct((m_pad, n_pad), jnp.float32),
        grid_spec=pltpu.PrefetchScalarGridSpec(
            num_scalar_prefetch=0,
            grid=(m_pad // tm,),
            in_specs=[
                pl.BlockSpec((tm, k), lambda i: (i, 0)),
                pl.BlockSpec((k, n_pad), lambda i: (0, 0)),
                pl.BlockSpec((1, n_pad), lambda i: (0, 0)),
            ],
            out_specs=pl.BlockSpec((tm, n_pad), lambda i: (i, 0)),
        ),
        compiler_params=pltpu.CompilerParams(
            dimension_semantics=("parallel",)),
    )(xb, w_bf16, shift)
    return out[:m, :n_valid]


def _matmul_layer(x2d, layer):
    return fused_matmul(x2d, layer["w"], layer["shift"], layer["act"], layer["n"])


# ----------------------------------------------------------------------------
# Conv2d lowering (NHWC im2col glue; feature order (kh, kw, C) matches the
# pre-transposed weight, so no activation transposes anywhere).
# ----------------------------------------------------------------------------
def _im2col_nhwc(x, k, stride, pad):
    b, h, w, c = x.shape
    if pad:
        x = jnp.pad(x, ((0, 0), (pad, pad), (pad, pad), (0, 0)))
    oh = (h + 2 * pad - k) // stride + 1
    ow = (w + 2 * pad - k) // stride + 1
    cols = []
    for i in range(k):
        for j in range(k):
            cols.append(x[:, i:i + (oh - 1) * stride + 1:stride,
                             j:j + (ow - 1) * stride + 1:stride, :])
    col = jnp.concatenate(cols, axis=-1)               # (b, oh, ow, k*k*c)
    return col.reshape(b * oh * ow, k * k * c), oh, ow


def conv2d_nhwc(x, layer):
    b = x.shape[0]
    col, oh, ow = _im2col_nhwc(x, layer["k"], layer["stride"], layer["pad"])
    y = _matmul_layer(col, layer)
    return y.reshape(b, oh, ow, layer["cout"])


# ----------------------------------------------------------------------------
# ConvTranspose2d via the sub-pixel method: each of the stride**2 output-pixel
# parities is a stride-1 convolution with a small sub-kernel; all parities
# share ONE im2col and ONE matmul whose output columns are (r, c, Cout),
# followed by depth-to-space + crop. No zero-dilated input is ever built.
# ----------------------------------------------------------------------------
def _subpixel_plan(k, s, p):
    rho = [(r + p) % s for r in range(s)]
    nu = [len(range(rho[r], k, s)) for r in range(s)]
    dd = [(r + p) // s for r in range(s)]
    o_raw = [dd[r] - nu[r] + 1 for r in range(s)]
    lpad = max(0, max(-o for o in o_raw))
    off = [o + lpad for o in o_raw]
    o_min = min(off)
    kw = max(off[r] + nu[r] for r in range(s)) - o_min
    taps = []
    for r in range(s):
        t = []
        for u in range(nu[r]):
            t.append((off[r] - o_min + u, s * (nu[r] - 1 - u) + rho[r]))
        taps.append(t)
    return dict(k=k, s=s, p=p, lpad=lpad, o_min=o_min, kw=kw, taps=taps)


def conv_transpose_nhwc(x, layer):
    b, h, w, cin = x.shape
    plan = layer["plan"]
    s, k, p = plan["s"], plan["k"], plan["p"]
    lpad, o_min, kw = plan["lpad"], plan["o_min"], plan["kw"]
    oh = (h - 1) * s - 2 * p + k
    ow = (w - 1) * s - 2 * p + k
    th = max(-(-(oh - r) // s) for r in range(s))      # max parity row count
    tw = max(-(-(ow - r) // s) for r in range(s))
    rh = max(0, (th - 1) + o_min + kw - (lpad + h))
    rw = max(0, (tw - 1) + o_min + kw - (lpad + w))
    xp = jnp.pad(x, ((0, 0), (lpad, rh), (lpad, rw), (0, 0)))
    cols = []
    for wi in range(kw):
        for wj in range(kw):
            cols.append(xp[:, o_min + wi:o_min + wi + th,
                              o_min + wj:o_min + wj + tw, :])
    col = jnp.concatenate(cols, axis=-1).reshape(b * th * tw, kw * kw * cin)
    cout = layer["cout"]
    y = _matmul_layer(col, layer)                      # (b*th*tw, s*s*cout)
    y = y.reshape(b, th, tw, s, s, cout)
    y = y.transpose(0, 1, 3, 2, 4, 5).reshape(b, th * s, tw * s, cout)
    return y[:, :oh, :ow, :]


# ----------------------------------------------------------------------------
# One-time weight preparation (eval-mode BN fold, layout permutes, lane pad,
# bf16 cast). Runs once; activations never get transposed at runtime.
# ----------------------------------------------------------------------------
def _fold_bn(bias, bn):
    if bn is None:
        return jnp.ones_like(bias), bias
    gamma, beta, mean, var = bn
    s = gamma / jnp.sqrt(var + _BN_EPS)
    return s, (bias - mean) * s + beta


def _pack(w_kn, shift, act):
    k, n = w_kn.shape
    n_pad = _round_up(n, 128)
    w_p = jnp.pad(w_kn.astype(jnp.float32), ((0, 0), (0, n_pad - n)))
    sh_p = jnp.pad(shift.astype(jnp.float32).reshape(1, n), ((0, 0), (0, n_pad - n)))
    return {"w": w_p.astype(jnp.bfloat16), "shift": sh_p, "act": act, "n": n}


def _prep_conv(w_oihw, bias, bn, act, stride, pad):
    scale, shift = _fold_bn(bias, bn)
    cout, cin, kh, kw = w_oihw.shape
    wf = w_oihw * scale[:, None, None, None]
    w_kn = wf.transpose(2, 3, 1, 0).reshape(kh * kw * cin, cout)   # (kh,kw,Cin)->rows
    d = _pack(w_kn, shift, act)
    d.update(k=kh, stride=stride, pad=pad, cout=cout)
    return d


def _prep_linear(w_oi, bias, bn, act):
    scale, shift = _fold_bn(bias, bn)
    return _pack((w_oi * scale[:, None]).T, shift, act)


def _prep_enc_fc(w_oi, bias, bn, act, c, h, w):
    # PyTorch flattens the encoder feature map in (C,H,W) order; our activations
    # are NHWC, so permute the weight rows once here instead of the activation.
    scale, shift = _fold_bn(bias, bn)
    w_kn = (w_oi * scale[:, None]).T                                # (C*H*W, emb)
    w_kn = w_kn.reshape(c, h, w, -1).transpose(1, 2, 0, 3).reshape(c * h * w, -1)
    return _pack(w_kn, shift, act)


def _prep_deconv_1x1(w_iokk, bias, bn, act):
    # ConvTranspose2d(stride=1, pad=0) on a 1x1 spatial input is exactly a
    # linear layer: y[b, i, j, o] = sum_c x[b, c] * w[c, o, i, j].
    scale, shift = _fold_bn(bias, bn)
    cin, cout, k, _ = w_iokk.shape
    wf = w_iokk * scale[None, :, None, None]
    w_kn = wf.transpose(0, 2, 3, 1).reshape(cin, k * k * cout)
    sh = jnp.broadcast_to(shift, (k, k, cout)).reshape(-1)
    d = _pack(w_kn, sh, act)
    d.update(oh=k, ow=k, cout=cout)
    return d


def _prep_deconv_subpixel(w_iokk, bias, bn, act, stride, pad):
    scale, shift = _fold_bn(bias, bn)
    cin, cout, k, _ = w_iokk.shape
    plan = _subpixel_plan(k, stride, pad)
    kw = plan["kw"]
    wf = w_iokk * scale[None, :, None, None]
    wbig = jnp.zeros((kw, kw, cin, stride, stride, cout), jnp.float32)
    for r in range(stride):
        for c in range(stride):
            for wi, i in plan["taps"][r]:
                for wj, j in plan["taps"][c]:
                    wbig = wbig.at[wi, wj, :, r, c, :].set(wf[:, :, i, j])
    w_kn = wbig.reshape(kw * kw * cin, stride * stride * cout)
    sh = jnp.broadcast_to(shift, (stride, stride, cout)).reshape(-1)
    d = _pack(w_kn, sh, act)
    d.update(plan=plan, cout=cout)
    return d


def prepare_params(params):
    e, d = params["enc"], params["dec"]
    z = lambda n: jnp.zeros((n,), jnp.float32)          # deconvs have bias=False
    return {
        "c1": _prep_conv(e["c1_w"], e["c1_b"], None, "leaky_relu", 2, 1),
        "c2": _prep_conv(e["c2_w"], e["c2_b"], e["bn2"], "leaky_relu", 2, 1),
        "c3": _prep_conv(e["c3_w"], e["c3_b"], e["bn3"], "leaky_relu", 2, 1),
        "c4": _prep_conv(e["c4_w"], e["c4_b"], e["bn4"], "leaky_relu", 2, 1),
        "fc": _prep_enc_fc(e["fc_w"], e["fc_b"], e["bn_fc"], "leaky_relu", 128, 2, 2),
        "dfc": _prep_linear(d["fc_w"], d["fc_b"], d["bn_fc"], "relu"),
        "d1": _prep_deconv_1x1(d["d1_w"], z(64), d["bn1"], "relu"),
        "d2": _prep_deconv_subpixel(d["d2_w"], z(32), d["bn2"], "relu", 2, 1),
        "d3": _prep_deconv_subpixel(d["d3_w"], z(16), d["bn3"], "relu", 2, 1),
        "d4": _prep_deconv_subpixel(d["d4_w"], z(1), None, "sigmoid", 2, 1),
    }


# ----------------------------------------------------------------------------
# Parameters (deterministic synthetic init, PyTorch layouts)
# ----------------------------------------------------------------------------
def init_params(key, embedding_size):
    keys = iter(jax.random.split(key, 64))

    def conv_p(cout, cin, k):
        bound = 1.0 / math.sqrt(cin * k * k)
        w = jax.random.uniform(next(keys), (cout, cin, k, k), jnp.float32, -bound, bound)
        b = jax.random.uniform(next(keys), (cout,), jnp.float32, -bound, bound)
        return w, b

    def deconv_p(cin, cout, k):
        bound = 1.0 / math.sqrt(cout * k * k)
        return jax.random.uniform(next(keys), (cin, cout, k, k), jnp.float32, -bound, bound)

    def linear_p(nout, nin):
        bound = 1.0 / math.sqrt(nin)
        w = jax.random.uniform(next(keys), (nout, nin), jnp.float32, -bound, bound)
        b = jax.random.uniform(next(keys), (nout,), jnp.float32, -bound, bound)
        return w, b

    def bn_p(n):
        gamma = 1.0 + 0.1 * jax.random.normal(next(keys), (n,), jnp.float32)
        beta = 0.1 * jax.random.normal(next(keys), (n,), jnp.float32)
        mean = 0.1 * jax.random.normal(next(keys), (n,), jnp.float32)
        var = jax.random.uniform(next(keys), (n,), jnp.float32, 0.5, 1.5)
        return gamma, beta, mean, var

    enc = {}
    enc["c1_w"], enc["c1_b"] = conv_p(16, 1, 4)
    enc["c2_w"], enc["c2_b"] = conv_p(32, 16, 4)
    enc["bn2"] = bn_p(32)
    enc["c3_w"], enc["c3_b"] = conv_p(64, 32, 4)
    enc["bn3"] = bn_p(64)
    enc["c4_w"], enc["c4_b"] = conv_p(128, 64, 3)
    enc["bn4"] = bn_p(128)
    enc["fc_w"], enc["fc_b"] = linear_p(embedding_size, 128 * 2 * 2)
    enc["bn_fc"] = bn_p(embedding_size)

    dec = {}
    dec["fc_w"], dec["fc_b"] = linear_p(512, embedding_size)
    dec["bn_fc"] = bn_p(512)
    dec["d1_w"] = deconv_p(512, 64, 4)
    dec["bn1"] = bn_p(64)
    dec["d2_w"] = deconv_p(64, 32, 3)
    dec["bn2"] = bn_p(32)
    dec["d3_w"] = deconv_p(32, 16, 4)
    dec["bn3"] = bn_p(16)
    dec["d4_w"] = deconv_p(16, 1, 4)
    return {"enc": enc, "dec": dec}


# ----------------------------------------------------------------------------
# Network.forward: z = encode(x.view(-1, 784)); return decode(z)
# ----------------------------------------------------------------------------
def network_forward(prep, x):
    xf = x.reshape(-1, 784)                            # x.view(-1, 784)
    b = xf.shape[0]

    # ---- CNN_Encoder (NHWC activations end-to-end) ----
    h = xf.reshape(b, 28, 28, 1)
    h = conv2d_nhwc(h, prep["c1"])                     # (b,14,14, 16)
    h = conv2d_nhwc(h, prep["c2"])                     # (b, 7, 7, 32)
    h = conv2d_nhwc(h, prep["c3"])                     # (b, 3, 3, 64)
    h = conv2d_nhwc(h, prep["c4"])                     # (b, 2, 2,128)
    z = _matmul_layer(h.reshape(b, -1), prep["fc"])    # (b, emb)

    # ---- CNN_Decoder ----
    h = _matmul_layer(z, prep["dfc"])                  # (b, 512)
    l1 = prep["d1"]                                    # deconv on 1x1 == linear
    h = _matmul_layer(h, l1).reshape(b, l1["oh"], l1["ow"], l1["cout"])  # (b,4,4,64)
    h = conv_transpose_nhwc(h, prep["d2"])             # (b, 7, 7, 32)
    h = conv_transpose_nhwc(h, prep["d3"])             # (b,14,14, 16)
    h = conv_transpose_nhwc(h, prep["d4"])             # (b,28,28,  1)
    return h.reshape(b, 784)


# ----------------------------------------------------------------------------
# Pure-JAX reference (lax convolutions, same bf16 operand rounding) used to
# validate the im2col / sub-pixel / layout lowering end to end.
# ----------------------------------------------------------------------------
def reference_forward(params, x):
    r16 = lambda a: a.astype(jnp.bfloat16).astype(jnp.float32)
    dn = ("NCHW", "OIHW", "NCHW")

    def act(y, kind):
        if kind == "leaky_relu":
            return jnp.where(y > 0, y, _LEAKY_SLOPE * y)
        if kind == "relu":
            return jnp.maximum(y, 0.0)
        if kind == "sigmoid":
            return jax.nn.sigmoid(y)
        return y

    def conv(h, w, bias, bn, kind, stride, pad):
        s, sh = _fold_bn(bias, bn)
        wf = w * s[:, None, None, None]
        y = lax.conv_general_dilated(
            r16(h), r16(wf), (stride, stride), [(pad, pad), (pad, pad)],
            dimension_numbers=dn, precision=lax.Precision.HIGHEST)
        return act(y + sh.reshape(1, -1, 1, 1), kind)

    def deconv(h, w, bias, bn, kind, stride, pad):
        s, sh = _fold_bn(bias, bn)
        k = w.shape[2]
        wf = w * s[None, :, None, None]
        wc = jnp.flip(wf, (2, 3)).transpose(1, 0, 2, 3)
        y = lax.conv_general_dilated(
            r16(h), r16(wc), (1, 1), [(k - 1 - pad,) * 2] * 2,
            lhs_dilation=(stride, stride),
            dimension_numbers=dn, precision=lax.Precision.HIGHEST)
        return act(y + sh.reshape(1, -1, 1, 1), kind)

    def linear(h, w, bias, bn, kind):
        s, sh = _fold_bn(bias, bn)
        y = jnp.dot(r16(h), r16((w * s[:, None]).T), precision=lax.Precision.HIGHEST)
        return act(y + sh, kind)

    e, d = params["enc"], params["dec"]
    z0 = lambda n: jnp.zeros((n,), jnp.float32)
    xf = x.reshape(-1, 784)
    b = xf.shape[0]
    h = xf.reshape(b, 1, 28, 28)
    h = conv(h, e["c1_w"], e["c1_b"], None, "leaky_relu", 2, 1)
    h = conv(h, e["c2_w"], e["c2_b"], e["bn2"], "leaky_relu", 2, 1)
    h = conv(h, e["c3_w"], e["c3_b"], e["bn3"], "leaky_relu", 2, 1)
    h = conv(h, e["c4_w"], e["c4_b"], e["bn4"], "leaky_relu", 2, 1)
    z = linear(h.reshape(b, -1), e["fc_w"], e["fc_b"], e["bn_fc"], "leaky_relu")
    h = linear(z, d["fc_w"], d["fc_b"], d["bn_fc"], "relu")
    h = h.reshape(b, 512, 1, 1)
    h = deconv(h, d["d1_w"], z0(64), d["bn1"], "relu", 1, 0)
    h = deconv(h, d["d2_w"], z0(32), d["bn2"], "relu", 2, 1)
    h = deconv(h, d["d3_w"], z0(16), d["bn3"], "relu", 2, 1)
    h = deconv(h, d["d4_w"], z0(1), None, "sigmoid", 2, 1)
    return h.reshape(b, 784)


if __name__ == "__main__":
    key = jax.random.PRNGKey(0)
    pkey, xkey = jax.random.split(key)
    embedding_size = 32
    params = init_params(pkey, embedding_size)
    prep = prepare_params(params)          # one-time weight preprocessing

    # MNIST-like batch (Network flattens it to (-1, 784) itself).
    x = jax.random.uniform(xkey, (2, 1, 28, 28), jnp.float32)

    fwd = jax.jit(functools.partial(network_forward, prep))
    out = fwd(x)
    jax.block_until_ready(out)

    assert out.shape == (2, 784), out.shape
    assert bool(jnp.all(jnp.isfinite(out)))
    assert bool(jnp.all((out >= 0.0) & (out <= 1.0)))  # sigmoid output

    # Validate the Pallas lowering against a pure-JAX/XLA reference that uses
    # the same bf16 operand rounding (remaining diff = accumulation order only).
    ref = jax.jit(functools.partial(reference_forward, params))(x)
    max_err = float(jnp.max(jnp.abs(out - ref)))
    assert max_err < 2e-2, f"mismatch vs pure-JAX reference: {max_err}"
    print("KERNEL_OK")
</pallas_src>

<mosaic_0001>
module attributes {stable_mosaic.version = 11 : i64} {
  func.func @_fused_matmul_kernel(%arg0: i32, %arg1: memref<392x16xbf16, #tpu.memory_space<vmem>>, %arg2: memref<16x128xbf16, #tpu.memory_space<vmem>>, %arg3: memref<1x128xf32, #tpu.memory_space<vmem>>, %arg4: memref<392x128xf32, #tpu.memory_space<vmem>>) attributes {dimension_semantics = [#tpu.dimension_semantics<parallel>], iteration_bounds = array<i64: 1>, scalar_prefetch = 0 : i64, scratch_operands = 0 : i64, tpu.core_type = #tpu.core_type<tc>, window_params = [{transform_indices = @transform_0, window_bounds = array<i64: 392, 16>}, {pipeline_mode = #tpu.pipeline_mode<synchronous>, transform_indices = @transform_1, window_bounds = array<i64: 16, 128>}, {pipeline_mode = #tpu.pipeline_mode<synchronous>, transform_indices = @transform_2, window_bounds = array<i64: 1, 128>}, {transform_indices = @transform_3, window_bounds = array<i64: 392, 128>}]} {
    %c0 = arith.constant 0 : index
    %c0_0 = arith.constant 0 : index
    %0 = vector.load %arg1[%c0, %c0_0] : memref<392x16xbf16, #tpu.memory_space<vmem>>, vector<392x16xbf16>
    %c0_1 = arith.constant 0 : index
    %c0_2 = arith.constant 0 : index
    %1 = vector.load %arg2[%c0_1, %c0_2] : memref<16x128xbf16, #tpu.memory_space<vmem>>, vector<16x128xbf16>
    %cst = arith.constant dense<0.000000e+00> : vector<392x128xf32>
    %2 = tpu.matmul %0, %1, %cst {dimension_numbers = #tpu.dot_dimension_numbers<[1], [0], [0], [1], [0, 0, 1, 1], [], []>} : vector<392x16xbf16>, vector<16x128xbf16>, vector<392x128xf32> -> vector<392x128xf32>
    %c0_3 = arith.constant 0 : index
    %c0_4 = arith.constant 0 : index
    %3 = vector.load %arg3[%c0_3, %c0_4] : memref<1x128xf32, #tpu.memory_space<vmem>>, vector<1x128xf32>
    %4 = vector.broadcast %3 : vector<1x128xf32> to vector<392x128xf32>
    %5 = arith.addf %2, %4 : vector<392x128xf32>
    %cst_5 = arith.constant 0.000000e+00 : f32
    %6 = vector.broadcast %cst_5 : f32 to vector<392x128xf32>
    %7 = arith.cmpf ogt, %5, %6 : vector<392x128xf32>
    %cst_6 = arith.constant 2.000000e-01 : f32
    %8 = vector.broadcast %cst_6 : f32 to vector<392x128xf32>
    %9 = arith.mulf %8, %5 : vector<392x128xf32>
    %10 = arith.select %7, %5, %9 : vector<392x128xi1>, vector<392x128xf32>
    %c0_7 = arith.constant 0 : index
    %c0_8 = arith.constant 0 : index
    %11 = vector.load %arg4[%c0_7, %c0_8] : memref<392x128xf32, #tpu.memory_space<vmem>>, vector<392x128xf32>
    tpu.vector_store %arg4[%c0_7, %c0_8], %10 {strides = array<i32>} : memref<392x128xf32, #tpu.memory_space<vmem>>, vector<392x128xf32>,
    return
  }
  func.func @transform_0(%arg0: i32) -> (i32, i32) {
    %c0_i32 = arith.constant 0 : i32
    %c0_i32_0 = arith.constant 0 : i32
    return %arg0, %c0_i32 : i32, i32
  }
  func.func @transform_1(%arg0: i32) -> (i32, i32) {
    %c0_i32 = arith.constant 0 : i32
    %c0_i32_0 = arith.constant 0 : i32
    %c0_i32_1 = arith.constant 0 : i32
    return %c0_i32, %c0_i32_0 : i32, i32
  }
  func.func @transform_2(%arg0: i32) -> (i32, i32) {
    %c0_i32 = arith.constant 0 : i32
    %c0_i32_0 = arith.constant 0 : i32
    %c0_i32_1 = arith.constant 0 : i32
    return %c0_i32, %c0_i32_0 : i32, i32
  }
  func.func @transform_3(%arg0: i32) -> (i32, i32) {
    %c0_i32 = arith.constant 0 : i32
    %c0_i32_0 = arith.constant 0 : i32
    return %arg0, %c0_i32 : i32, i32
  }
}

module attributes {stable_mosaic.version = 11 : i64} {
  func.func @_fused_matmul_kernel(%arg0: i32, %arg1: memref<104x256xbf16, #tpu.memory_space<vmem>>, %arg2: memref<256x128xbf16, #tpu.memory_space<vmem>>, %arg3: memref<1x128xf32, #tpu.memory_space<vmem>>, %arg4: memref<104x128xf32, #tpu.memory_space<vmem>>) attributes {dimension_semantics = [#tpu.dimension_semantics<parallel>], iteration_bounds = array<i64: 1>, scalar_prefetch = 0 : i64, scratch_operands = 0 : i64, tpu.core_type = #tpu.core_type<tc>, window_params = [{transform_indices = @transform_0, window_bounds = array<i64: 104, 256>}, {pipeline_mode = #tpu.pipeline_mode<synchronous>, transform_indices = @transform_1, window_bounds = array<i64: 256, 128>}, {pipeline_mode = #tpu.pipeline_mode<synchronous>, transform_indices = @transform_2, window_bounds = array<i64: 1, 128>}, {transform_indices = @transform_3, window_bounds = array<i64: 104, 128>}]} {
    %c0 = arith.constant 0 : index
    %c0_0 = arith.constant 0 : index
    %0 = vector.load %arg1[%c0, %c0_0] : memref<104x256xbf16, #tpu.memory_space<vmem>>, vector<104x256xbf16>
    %c0_1 = arith.constant 0 : index
    %c0_2 = arith.constant 0 : index
    %1 = vector.load %arg2[%c0_1, %c0_2] : memref<256x128xbf16, #tpu.memory_space<vmem>>, vector<256x128xbf16>
    %cst = arith.constant dense<0.000000e+00> : vector<104x128xf32>
    %2 = tpu.matmul %0, %1, %cst {dimension_numbers = #tpu.dot_dimension_numbers<[1], [0], [0], [1], [0, 0, 1, 1], [], []>} : vector<104x256xbf16>, vector<256x128xbf16>, vector<104x128xf32> -> vector<104x128xf32>
    %c0_3 = arith.constant 0 : index
    %c0_4 = arith.constant 0 : index
    %3 = vector.load %arg3[%c0_3, %c0_4] : memref<1x128xf32, #tpu.memory_space<vmem>>, vector<1x128xf32>
    %4 = vector.broadcast %3 : vector<1x128xf32> to vector<104x128xf32>
    %5 = arith.addf %2, %4 : vector<104x128xf32>
    %cst_5 = arith.constant 0.000000e+00 : f32
    %6 = vector.broadcast %cst_5 : f32 to vector<104x128xf32>
    %7 = arith.cmpf ogt, %5, %6 : vector<104x128xf32>
    %cst_6 = arith.constant 2.000000e-01 : f32
    %8 = vector.broadcast %cst_6 : f32 to vector<104x128xf32>
    %9 = arith.mulf %8, %5 : vector<104x128xf32>
    %10 = arith.select %7, %5, %9 : vector<104x128xi1>, vector<104x128xf32>
    %c0_7 = arith.constant 0 : index
    %c0_8 = arith.constant 0 : index
    %11 = vector.load %arg4[%c0_7, %c0_8] : memref<104x128xf32, #tpu.memory_space<vmem>>, vector<104x128xf32>
    tpu.vector_store %arg4[%c0_7, %c0_8], %10 {strides = array<i32>} : memref<104x128xf32, #tpu.memory_space<vmem>>, vector<104x128xf32>,
    return
  }
  func.func @transform_0(%arg0: i32) -> (i32, i32) {
    %c0_i32 = arith.constant 0 : i32
    %c0_i32_0 = arith.constant 0 : i32
    return %arg0, %c0_i32 : i32, i32
  }
  func.func @transform_1(%arg0: i32) -> (i32, i32) {
    %c0_i32 = arith.constant 0 : i32
    %c0_i32_0 = arith.constant 0 : i32
    %c0_i32_1 = arith.constant 0 : i32
    return %c0_i32, %c0_i32_0 : i32, i32
  }
  func.func @transform_2(%arg0: i32) -> (i32, i32) {
    %c0_i32 = arith.constant 0 : i32
    %c0_i32_0 = arith.constant 0 : i32
    %c0_i32_1 = arith.constant 0 : i32
    return %c0_i32, %c0_i32_0 : i32, i32
  }
  func.func @transform_3(%arg0: i32) -> (i32, i32) {
    %c0_i32 = arith.constant 0 : i32
    %c0_i32_0 = arith.constant 0 : i32
    return %arg0, %c0_i32 : i32, i32
  }
}

module attributes {stable_mosaic.version = 11 : i64} {
  func.func @_fused_matmul_kernel(%arg0: i32, %arg1: memref<24x512xbf16, #tpu.memory_space<vmem>>, %arg2: memref<512x128xbf16, #tpu.memory_space<vmem>>, %arg3: memref<1x128xf32, #tpu.memory_space<vmem>>, %arg4: memref<24x128xf32, #tpu.memory_space<vmem>>) attributes {dimension_semantics = [#tpu.dimension_semantics<parallel>], iteration_bounds = array<i64: 1>, scalar_prefetch = 0 : i64, scratch_operands = 0 : i64, tpu.core_type = #tpu.core_type<tc>, window_params = [{transform_indices = @transform_0, window_bounds = array<i64: 24, 512>}, {pipeline_mode = #tpu.pipeline_mode<synchronous>, transform_indices = @transform_1, window_bounds = array<i64: 512, 128>}, {pipeline_mode = #tpu.pipeline_mode<synchronous>, transform_indices = @transform_2, window_bounds = array<i64: 1, 128>}, {transform_indices = @transform_3, window_bounds = array<i64: 24, 128>}]} {
    %c0 = arith.constant 0 : index
    %c0_0 = arith.constant 0 : index
    %0 = vector.load %arg1[%c0, %c0_0] : memref<24x512xbf16, #tpu.memory_space<vmem>>, vector<24x512xbf16>
    %c0_1 = arith.constant 0 : index
    %c0_2 = arith.constant 0 : index
    %1 = vector.load %arg2[%c0_1, %c0_2] : memref<512x128xbf16, #tpu.memory_space<vmem>>, vector<512x128xbf16>
    %cst = arith.constant dense<0.000000e+00> : vector<24x128xf32>
    %2 = tpu.matmul %0, %1, %cst {dimension_numbers = #tpu.dot_dimension_numbers<[1], [0], [0], [1], [0, 0, 1, 1], [], []>} : vector<24x512xbf16>, vector<512x128xbf16>, vector<24x128xf32> -> vector<24x128xf32>
    %c0_3 = arith.constant 0 : index
    %c0_4 = arith.constant 0 : index
    %3 = vector.load %arg3[%c0_3, %c0_4] : memref<1x128xf32, #tpu.memory_space<vmem>>, vector<1x128xf32>
    %4 = vector.broadcast %3 : vector<1x128xf32> to vector<24x128xf32>
    %5 = arith.addf %2, %4 : vector<24x128xf32>
    %cst_5 = arith.constant 0.000000e+00 : f32
    %6 = vector.broadcast %cst_5 : f32 to vector<24x128xf32>
    %7 = arith.cmpf ogt, %5, %6 : vector<24x128xf32>
    %cst_6 = arith.constant 2.000000e-01 : f32
    %8 = vector.broadcast %cst_6 : f32 to vector<24x128xf32>
    %9 = arith.mulf %8, %5 : vector<24x128xf32>
    %10 = arith.select %7, %5, %9 : vector<24x128xi1>, vector<24x128xf32>
    %c0_7 = arith.constant 0 : index
    %c0_8 = arith.constant 0 : index
    %11 = vector.load %arg4[%c0_7, %c0_8] : memref<24x128xf32, #tpu.memory_space<vmem>>, vector<24x128xf32>
    tpu.vector_store %arg4[%c0_7, %c0_8], %10 {strides = array<i32>} : memref<24x128xf32, #tpu.memory_space<vmem>>, vector<24x128xf32>,
    return
  }
  func.func @transform_0(%arg0: i32) -> (i32, i32) {
    %c0_i32 = arith.constant 0 : i32
    %c0_i32_0 = arith.constant 0 : i32
    return %arg0, %c0_i32 : i32, i32
  }
  func.func @transform_1(%arg0: i32) -> (i32, i32) {
    %c0_i32 = arith.constant 0 : i32
    %c0_i32_0 = arith.constant 0 : i32
    %c0_i32_1 = arith.constant 0 : i32
    return %c0_i32, %c0_i32_0 : i32, i32
  }
  func.func @transform_2(%arg0: i32) -> (i32, i32) {
    %c0_i32 = arith.constant 0 : i32
    %c0_i32_0 = arith.constant 0 : i32
    %c0_i32_1 = arith.constant 0 : i32
    return %c0_i32, %c0_i32_0 : i32, i32
  }
  func.func @transform_3(%arg0: i32) -> (i32, i32) {
    %c0_i32 = arith.constant 0 : i32
    %c0_i32_0 = arith.constant 0 : i32
    return %arg0, %c0_i32 : i32, i32
  }
}

module attributes {stable_mosaic.version = 11 : i64} {
  func.func @_fused_matmul_kernel(%arg0: i32, %arg1: memref<8x576xbf16, #tpu.memory_space<vmem>>, %arg2: memref<576x128xbf16, #tpu.memory_space<vmem>>, %arg3: memref<1x128xf32, #tpu.memory_space<vmem>>, %arg4: memref<8x128xf32, #tpu.memory_space<vmem>>) attributes {dimension_semantics = [#tpu.dimension_semantics<parallel>], iteration_bounds = array<i64: 1>, scalar_prefetch = 0 : i64, scratch_operands = 0 : i64, tpu.core_type = #tpu.core_type<tc>, window_params = [{transform_indices = @transform_0, window_bounds = array<i64: 8, 576>}, {pipeline_mode = #tpu.pipeline_mode<synchronous>, transform_indices = @transform_1, window_bounds = array<i64: 576, 128>}, {pipeline_mode = #tpu.pipeline_mode<synchronous>, transform_indices = @transform_2, window_bounds = array<i64: 1, 128>}, {transform_indices = @transform_3, window_bounds = array<i64: 8, 128>}]} {
    %c0 = arith.constant 0 : index
    %c0_0 = arith.constant 0 : index
    %0 = vector.load %arg1[%c0, %c0_0] : memref<8x576xbf16, #tpu.memory_space<vmem>>, vector<8x576xbf16>
    %c0_1 = arith.constant 0 : index
    %c0_2 = arith.constant 0 : index
    %1 = vector.load %arg2[%c0_1, %c0_2] : memref<576x128xbf16, #tpu.memory_space<vmem>>, vector<576x128xbf16>
    %cst = arith.constant dense<0.000000e+00> : vector<8x128xf32>
    %2 = tpu.matmul %0, %1, %cst {dimension_numbers = #tpu.dot_dimension_numbers<[1], [0], [0], [1], [0, 0, 1, 1], [], []>} : vector<8x576xbf16>, vector<576x128xbf16>, vector<8x128xf32> -> vector<8x128xf32>
    %c0_3 = arith.constant 0 : index
    %c0_4 = arith.constant 0 : index
    %3 = vector.load %arg3[%c0_3, %c0_4] : memref<1x128xf32, #tpu.memory_space<vmem>>, vector<1x128xf32>
    %4 = vector.broadcast %3 : vector<1x128xf32> to vector<8x128xf32>
    %5 = arith.addf %2, %4 : vector<8x128xf32>
    %cst_5 = arith.constant 0.000000e+00 : f32
    %6 = vector.broadcast %cst_5 : f32 to vector<8x128xf32>
    %7 = arith.cmpf ogt, %5, %6 : vector<8x128xf32>
    %cst_6 = arith.constant 2.000000e-01 : f32
    %8 = vector.broadcast %cst_6 : f32 to vector<8x128xf32>
    %9 = arith.mulf %8, %5 : vector<8x128xf32>
    %10 = arith.select %7, %5, %9 : vector<8x128xi1>, vector<8x128xf32>
    %c0_7 = arith.constant 0 : index
    %c0_8 = arith.constant 0 : index
    %11 = vector.load %arg4[%c0_7, %c0_8] : memref<8x128xf32, #tpu.memory_space<vmem>>, vector<8x128xf32>
    tpu.vector_store %arg4[%c0_7, %c0_8], %10 {strides = array<i32>} : memref<8x128xf32, #tpu.memory_space<vmem>>, vector<8x128xf32>,
    return
  }
  func.func @transform_0(%arg0: i32) -> (i32, i32) {
    %c0_i32 = arith.constant 0 : i32
    %c0_i32_0 = arith.constant 0 : i32
    return %arg0, %c0_i32 : i32, i32
  }
  func.func @transform_1(%arg0: i32) -> (i32, i32) {
    %c0_i32 = arith.constant 0 : i32
    %c0_i32_0 = arith.constant 0 : i32
    %c0_i32_1 = arith.constant 0 : i32
    return %c0_i32, %c0_i32_0 : i32, i32
  }
  func.func @transform_2(%arg0: i32) -> (i32, i32) {
    %c0_i32 = arith.constant 0 : i32
    %c0_i32_0 = arith.constant 0 : i32
    %c0_i32_1 = arith.constant 0 : i32
    return %c0_i32, %c0_i32_0 : i32, i32
  }
  func.func @transform_3(%arg0: i32) -> (i32, i32) {
    %c0_i32 = arith.constant 0 : i32
    %c0_i32_0 = arith.constant 0 : i32
    return %arg0, %c0_i32 : i32, i32
  }
}

module attributes {stable_mosaic.version = 11 : i64} {
  func.func @_fused_matmul_kernel(%arg0: i32, %arg1: memref<8x32xbf16, #tpu.memory_space<vmem>>, %arg2: memref<32x512xbf16, #tpu.memory_space<vmem>>, %arg3: memref<1x512xf32, #tpu.memory_space<vmem>>, %arg4: memref<8x512xf32, #tpu.memory_space<vmem>>) attributes {dimension_semantics = [#tpu.dimension_semantics<parallel>], iteration_bounds = array<i64: 1>, scalar_prefetch = 0 : i64, scratch_operands = 0 : i64, tpu.core_type = #tpu.core_type<tc>, window_params = [{transform_indices = @transform_0, window_bounds = array<i64: 8, 32>}, {pipeline_mode = #tpu.pipeline_mode<synchronous>, transform_indices = @transform_1, window_bounds = array<i64: 32, 512>}, {pipeline_mode = #tpu.pipeline_mode<synchronous>, transform_indices = @transform_2, window_bounds = array<i64: 1, 512>}, {transform_indices = @transform_3, window_bounds = array<i64: 8, 512>}]} {
    %c0 = arith.constant 0 : index
    %c0_0 = arith.constant 0 : index
    %0 = vector.load %arg1[%c0, %c0_0] : memref<8x32xbf16, #tpu.memory_space<vmem>>, vector<8x32xbf16>
    %c0_1 = arith.constant 0 : index
    %c0_2 = arith.constant 0 : index
    %1 = vector.load %arg2[%c0_1, %c0_2] : memref<32x512xbf16, #tpu.memory_space<vmem>>, vector<32x512xbf16>
    %cst = arith.constant dense<0.000000e+00> : vector<8x512xf32>
    %2 = tpu.matmul %0, %1, %cst {dimension_numbers = #tpu.dot_dimension_numbers<[1], [0], [0], [1], [0, 0, 1, 1], [], []>} : vector<8x32xbf16>, vector<32x512xbf16>, vector<8x512xf32> -> vector<8x512xf32>
    %c0_3 = arith.constant 0 : index
    %c0_4 = arith.constant 0 : index
    %3 = vector.load %arg3[%c0_3, %c0_4] : memref<1x512xf32, #tpu.memory_space<vmem>>, vector<1x512xf32>
    %4 = vector.broadcast %3 : vector<1x512xf32> to vector<8x512xf32>
    %5 = arith.addf %2, %4 : vector<8x512xf32>
    %cst_5 = arith.constant 0.000000e+00 : f32
    %6 = vector.broadcast %cst_5 : f32 to vector<8x512xf32>
    %7 = arith.maximumf %5, %6 : vector<8x512xf32>
    %c0_6 = arith.constant 0 : index
    %c0_7 = arith.constant 0 : index
    %8 = vector.load %arg4[%c0_6, %c0_7] : memref<8x512xf32, #tpu.memory_space<vmem>>, vector<8x512xf32>
    tpu.vector_store %arg4[%c0_6, %c0_7], %7 {strides = array<i32>} : memref<8x512xf32, #tpu.memory_space<vmem>>, vector<8x512xf32>,
    return
  }
  func.func @transform_0(%arg0: i32) -> (i32, i32) {
    %c0_i32 = arith.constant 0 : i32
    %c0_i32_0 = arith.constant 0 : i32
    return %arg0, %c0_i32 : i32, i32
  }
  func.func @transform_1(%arg0: i32) -> (i32, i32) {
    %c0_i32 = arith.constant 0 : i32
    %c0_i32_0 = arith.constant 0 : i32
    %c0_i32_1 = arith.constant 0 : i32
    return %c0_i32, %c0_i32_0 : i32, i32
  }
  func.func @transform_2(%arg0: i32) -> (i32, i32) {
    %c0_i32 = arith.constant 0 : i32
    %c0_i32_0 = arith.constant 0 : i32
    %c0_i32_1 = arith.constant 0 : i32
    return %c0_i32, %c0_i32_0 : i32, i32
  }
  func.func @transform_3(%arg0: i32) -> (i32, i32) {
    %c0_i32 = arith.constant 0 : i32
    %c0_i32_0 = arith.constant 0 : i32
    return %arg0, %c0_i32 : i32, i32
  }
}

module attributes {stable_mosaic.version = 11 : i64} {
  func.func @_fused_matmul_kernel(%arg0: i32, %arg1: memref<8x512xbf16, #tpu.memory_space<vmem>>, %arg2: memref<512x128xbf16, #tpu.memory_space<vmem>>, %arg3: memref<1x128xf32, #tpu.memory_space<vmem>>, %arg4: memref<8x128xf32, #tpu.memory_space<vmem>>) attributes {dimension_semantics = [#tpu.dimension_semantics<parallel>], iteration_bounds = array<i64: 1>, scalar_prefetch = 0 : i64, scratch_operands = 0 : i64, tpu.core_type = #tpu.core_type<tc>, window_params = [{transform_indices = @transform_0, window_bounds = array<i64: 8, 512>}, {pipeline_mode = #tpu.pipeline_mode<synchronous>, transform_indices = @transform_1, window_bounds = array<i64: 512, 128>}, {pipeline_mode = #tpu.pipeline_mode<synchronous>, transform_indices = @transform_2, window_bounds = array<i64: 1, 128>}, {transform_indices = @transform_3, window_bounds = array<i64: 8, 128>}]} {
    %c0 = arith.constant 0 : index
    %c0_0 = arith.constant 0 : index
    %0 = vector.load %arg1[%c0, %c0_0] : memref<8x512xbf16, #tpu.memory_space<vmem>>, vector<8x512xbf16>
    %c0_1 = arith.constant 0 : index
    %c0_2 = arith.constant 0 : index
    %1 = vector.load %arg2[%c0_1, %c0_2] : memref<512x128xbf16, #tpu.memory_space<vmem>>, vector<512x128xbf16>
    %cst = arith.constant dense<0.000000e+00> : vector<8x128xf32>
    %2 = tpu.matmul %0, %1, %cst {dimension_numbers = #tpu.dot_dimension_numbers<[1], [0], [0], [1], [0, 0, 1, 1], [], []>} : vector<8x512xbf16>, vector<512x128xbf16>, vector<8x128xf32> -> vector<8x128xf32>
    %c0_3 = arith.constant 0 : index
    %c0_4 = arith.constant 0 : index
    %3 = vector.load %arg3[%c0_3, %c0_4] : memref<1x128xf32, #tpu.memory_space<vmem>>, vector<1x128xf32>
    %4 = vector.broadcast %3 : vector<1x128xf32> to vector<8x128xf32>
    %5 = arith.addf %2, %4 : vector<8x128xf32>
    %cst_5 = arith.constant 0.000000e+00 : f32
    %6 = vector.broadcast %cst_5 : f32 to vector<8x128xf32>
    %7 = arith.cmpf ogt, %5, %6 : vector<8x128xf32>
    %cst_6 = arith.constant 2.000000e-01 : f32
    %8 = vector.broadcast %cst_6 : f32 to vector<8x128xf32>
    %9 = arith.mulf %8, %5 : vector<8x128xf32>
    %10 = arith.select %7, %5, %9 : vector<8x128xi1>, vector<8x128xf32>
    %c0_7 = arith.constant 0 : index
    %c0_8 = arith.constant 0 : index
    %11 = vector.load %arg4[%c0_7, %c0_8] : memref<8x128xf32, #tpu.memory_space<vmem>>, vector<8x128xf32>
    tpu.vector_store %arg4[%c0_7, %c0_8], %10 {strides = array<i32>} : memref<8x128xf32, #tpu.memory_space<vmem>>, vector<8x128xf32>,
    return
  }
  func.func @transform_0(%arg0: i32) -> (i32, i32) {
    %c0_i32 = arith.constant 0 : i32
    %c0_i32_0 = arith.constant 0 : i32
    return %arg0, %c0_i32 : i32, i32
  }
  func.func @transform_1(%arg0: i32) -> (i32, i32) {
    %c0_i32 = arith.constant 0 : i32
    %c0_i32_0 = arith.constant 0 : i32
    %c0_i32_1 = arith.constant 0 : i32
    return %c0_i32, %c0_i32_0 : i32, i32
  }
  func.func @transform_2(%arg0: i32) -> (i32, i32) {
    %c0_i32 = arith.constant 0 : i32
    %c0_i32_0 = arith.constant 0 : i32
    %c0_i32_1 = arith.constant 0 : i32
    return %c0_i32, %c0_i32_0 : i32, i32
  }
  func.func @transform_3(%arg0: i32) -> (i32, i32) {
    %c0_i32 = arith.constant 0 : i32
    %c0_i32_0 = arith.constant 0 : i32
    return %arg0, %c0_i32 : i32, i32
  }
}

module attributes {stable_mosaic.version = 11 : i64} {
  func.func @_fused_matmul_kernel(%arg0: i32, %arg1: memref<8x512xbf16, #tpu.memory_space<vmem>>, %arg2: memref<512x1024xbf16, #tpu.memory_space<vmem>>, %arg3: memref<1x1024xf32, #tpu.memory_space<vmem>>, %arg4: memref<8x1024xf32, #tpu.memory_space<vmem>>) attributes {dimension_semantics = [#tpu.dimension_semantics<parallel>], iteration_bounds = array<i64: 1>, scalar_prefetch = 0 : i64, scratch_operands = 0 : i64, tpu.core_type = #tpu.core_type<tc>, window_params = [{transform_indices = @transform_0, window_bounds = array<i64: 8, 512>}, {pipeline_mode = #tpu.pipeline_mode<synchronous>, transform_indices = @transform_1, window_bounds = array<i64: 512, 1024>}, {pipeline_mode = #tpu.pipeline_mode<synchronous>, transform_indices = @transform_2, window_bounds = array<i64: 1, 1024>}, {transform_indices = @transform_3, window_bounds = array<i64: 8, 1024>}]} {
    %c0 = arith.constant 0 : index
    %c0_0 = arith.constant 0 : index
    %0 = vector.load %arg1[%c0, %c0_0] : memref<8x512xbf16, #tpu.memory_space<vmem>>, vector<8x512xbf16>
    %c0_1 = arith.constant 0 : index
    %c0_2 = arith.constant 0 : index
    %1 = vector.load %arg2[%c0_1, %c0_2] : memref<512x1024xbf16, #tpu.memory_space<vmem>>, vector<512x1024xbf16>
    %cst = arith.constant dense<0.000000e+00> : vector<8x1024xf32>
    %2 = tpu.matmul %0, %1, %cst {dimension_numbers = #tpu.dot_dimension_numbers<[1], [0], [0], [1], [0, 0, 1, 1], [], []>} : vector<8x512xbf16>, vector<512x1024xbf16>, vector<8x1024xf32> -> vector<8x1024xf32>
    %c0_3 = arith.constant 0 : index
    %c0_4 = arith.constant 0 : index
    %3 = vector.load %arg3[%c0_3, %c0_4] : memref<1x1024xf32, #tpu.memory_space<vmem>>, vector<1x1024xf32>
    %4 = vector.broadcast %3 : vector<1x1024xf32> to vector<8x1024xf32>
    %5 = arith.addf %2, %4 : vector<8x1024xf32>
    %cst_5 = arith.constant 0.000000e+00 : f32
    %6 = vector.broadcast %cst_5 : f32 to vector<8x1024xf32>
    %7 = arith.maximumf %5, %6 : vector<8x1024xf32>
    %c0_6 = arith.constant 0 : index
    %c0_7 = arith.constant 0 : index
    %8 = vector.load %arg4[%c0_6, %c0_7] : memref<8x1024xf32, #tpu.memory_space<vmem>>, vector<8x1024xf32>
    tpu.vector_store %arg4[%c0_6, %c0_7], %7 {strides = array<i32>} : memref<8x1024xf32, #tpu.memory_space<vmem>>, vector<8x1024xf32>,
    return
  }
  func.func @transform_0(%arg0: i32) -> (i32, i32) {
    %c0_i32 = arith.constant 0 : i32
    %c0_i32_0 = arith.constant 0 : i32
    return %arg0, %c0_i32 : i32, i32
  }
  func.func @transform_1(%arg0: i32) -> (i32, i32) {
    %c0_i32 = arith.constant 0 : i32
    %c0_i32_0 = arith.constant 0 : i32
    %c0_i32_1 = arith.constant 0 : i32
    return %c0_i32, %c0_i32_0 : i32, i32
  }
  func.func @transform_2(%arg0: i32) -> (i32, i32) {
    %c0_i32 = arith.constant 0 : i32
    %c0_i32_0 = arith.constant 0 : i32
    %c0_i32_1 = arith.constant 0 : i32
    return %c0_i32, %c0_i32_0 : i32, i32
  }
  func.func @transform_3(%arg0: i32) -> (i32, i32) {
    %c0_i32 = arith.constant 0 : i32
    %c0_i32_0 = arith.constant 0 : i32
    return %arg0, %c0_i32 : i32, i32
  }
}

module attributes {stable_mosaic.version = 11 : i64} {
  func.func @_fused_matmul_kernel(%arg0: i32, %arg1: memref<32x256xbf16, #tpu.memory_space<vmem>>, %arg2: memref<256x128xbf16, #tpu.memory_space<vmem>>, %arg3: memref<1x128xf32, #tpu.memory_space<vmem>>, %arg4: memref<32x128xf32, #tpu.memory_space<vmem>>) attributes {dimension_semantics = [#tpu.dimension_semantics<parallel>], iteration_bounds = array<i64: 1>, scalar_prefetch = 0 : i64, scratch_operands = 0 : i64, tpu.core_type = #tpu.core_type<tc>, window_params = [{transform_indices = @transform_0, window_bounds = array<i64: 32, 256>}, {pipeline_mode = #tpu.pipeline_mode<synchronous>, transform_indices = @transform_1, window_bounds = array<i64: 256, 128>}, {pipeline_mode = #tpu.pipeline_mode<synchronous>, transform_indices = @transform_2, window_bounds = array<i64: 1, 128>}, {transform_indices = @transform_3, window_bounds = array<i64: 32, 128>}]} {
    %c0 = arith.constant 0 : index
    %c0_0 = arith.constant 0 : index
    %0 = vector.load %arg1[%c0, %c0_0] : memref<32x256xbf16, #tpu.memory_space<vmem>>, vector<32x256xbf16>
    %c0_1 = arith.constant 0 : index
    %c0_2 = arith.constant 0 : index
    %1 = vector.load %arg2[%c0_1, %c0_2] : memref<256x128xbf16, #tpu.memory_space<vmem>>, vector<256x128xbf16>
    %cst = arith.constant dense<0.000000e+00> : vector<32x128xf32>
    %2 = tpu.matmul %0, %1, %cst {dimension_numbers = #tpu.dot_dimension_numbers<[1], [0], [0], [1], [0, 0, 1, 1], [], []>} : vector<32x256xbf16>, vector<256x128xbf16>, vector<32x128xf32> -> vector<32x128xf32>
    %c0_3 = arith.constant 0 : index
    %c0_4 = arith.constant 0 : index
    %3 = vector.load %arg3[%c0_3, %c0_4] : memref<1x128xf32, #tpu.memory_space<vmem>>, vector<1x128xf32>
    %4 = vector.broadcast %3 : vector<1x128xf32> to vector<32x128xf32>
    %5 = arith.addf %2, %4 : vector<32x128xf32>
    %cst_5 = arith.constant 0.000000e+00 : f32
    %6 = vector.broadcast %cst_5 : f32 to vector<32x128xf32>
    %7 = arith.maximumf %5, %6 : vector<32x128xf32>
    %c0_6 = arith.constant 0 : index
    %c0_7 = arith.constant 0 : index
    %8 = vector.load %arg4[%c0_6, %c0_7] : memref<32x128xf32, #tpu.memory_space<vmem>>, vector<32x128xf32>
    tpu.vector_store %arg4[%c0_6, %c0_7], %7 {strides = array<i32>} : memref<32x128xf32, #tpu.memory_space<vmem>>, vector<32x128xf32>,
    return
  }
  func.func @transform_0(%arg0: i32) -> (i32, i32) {
    %c0_i32 = arith.constant 0 : i32
    %c0_i32_0 = arith.constant 0 : i32
    return %arg0, %c0_i32 : i32, i32
  }
  func.func @transform_1(%arg0: i32) -> (i32, i32) {
    %c0_i32 = arith.constant 0 : i32
    %c0_i32_0 = arith.constant 0 : i32
    %c0_i32_1 = arith.constant 0 : i32
    return %c0_i32, %c0_i32_0 : i32, i32
  }
  func.func @transform_2(%arg0: i32) -> (i32, i32) {
    %c0_i32 = arith.constant 0 : i32
    %c0_i32_0 = arith.constant 0 : i32
    %c0_i32_1 = arith.constant 0 : i32
    return %c0_i32, %c0_i32_0 : i32, i32
  }
  func.func @transform_3(%arg0: i32) -> (i32, i32) {
    %c0_i32 = arith.constant 0 : i32
    %c0_i32_0 = arith.constant 0 : i32
    return %arg0, %c0_i32 : i32, i32
  }
}

module attributes {stable_mosaic.version = 11 : i64} {
  func.func @_fused_matmul_kernel(%arg0: i32, %arg1: memref<104x288xbf16, #tpu.memory_space<vmem>>, %arg2: memref<288x128xbf16, #tpu.memory_space<vmem>>, %arg3: memref<1x128xf32, #tpu.memory_space<vmem>>, %arg4: memref<104x128xf32, #tpu.memory_space<vmem>>) attributes {dimension_semantics = [#tpu.dimension_semantics<parallel>], iteration_bounds = array<i64: 1>, scalar_prefetch = 0 : i64, scratch_operands = 0 : i64, tpu.core_type = #tpu.core_type<tc>, window_params = [{transform_indices = @transform_0, window_bounds = array<i64: 104, 288>}, {pipeline_mode = #tpu.pipeline_mode<synchronous>, transform_indices = @transform_1, window_bounds = array<i64: 288, 128>}, {pipeline_mode = #tpu.pipeline_mode<synchronous>, transform_indices = @transform_2, window_bounds = array<i64: 1, 128>}, {transform_indices = @transform_3, window_bounds = array<i64: 104, 128>}]} {
    %c0 = arith.constant 0 : index
    %c0_0 = arith.constant 0 : index
    %0 = vector.load %arg1[%c0, %c0_0] : memref<104x288xbf16, #tpu.memory_space<vmem>>, vector<104x288xbf16>
    %c0_1 = arith.constant 0 : index
    %c0_2 = arith.constant 0 : index
    %1 = vector.load %arg2[%c0_1, %c0_2] : memref<288x128xbf16, #tpu.memory_space<vmem>>, vector<288x128xbf16>
    %cst = arith.constant dense<0.000000e+00> : vector<104x128xf32>
    %2 = tpu.matmul %0, %1, %cst {dimension_numbers = #tpu.dot_dimension_numbers<[1], [0], [0], [1], [0, 0, 1, 1], [], []>} : vector<104x288xbf16>, vector<288x128xbf16>, vector<104x128xf32> -> vector<104x128xf32>
    %c0_3 = arith.constant 0 : index
    %c0_4 = arith.constant 0 : index
    %3 = vector.load %arg3[%c0_3, %c0_4] : memref<1x128xf32, #tpu.memory_space<vmem>>, vector<1x128xf32>
    %4 = vector.broadcast %3 : vector<1x128xf32> to vector<104x128xf32>
    %5 = arith.addf %2, %4 : vector<104x128xf32>
    %cst_5 = arith.constant 0.000000e+00 : f32
    %6 = vector.broadcast %cst_5 : f32 to vector<104x128xf32>
    %7 = arith.maximumf %5, %6 : vector<104x128xf32>
    %c0_6 = arith.constant 0 : index
    %c0_7 = arith.constant 0 : index
    %8 = vector.load %arg4[%c0_6, %c0_7] : memref<104x128xf32, #tpu.memory_space<vmem>>, vector<104x128xf32>
    tpu.vector_store %arg4[%c0_6, %c0_7], %7 {strides = array<i32>} : memref<104x128xf32, #tpu.memory_space<vmem>>, vector<104x128xf32>,
    return
  }
  func.func @transform_0(%arg0: i32) -> (i32, i32) {
    %c0_i32 = arith.constant 0 : i32
    %c0_i32_0 = arith.constant 0 : i32
    return %arg0, %c0_i32 : i32, i32
  }
  func.func @transform_1(%arg0: i32) -> (i32, i32) {
    %c0_i32 = arith.constant 0 : i32
    %c0_i32_0 = arith.constant 0 : i32
    %c0_i32_1 = arith.constant 0 : i32
    return %c0_i32, %c0_i32_0 : i32, i32
  }
  func.func @transform_2(%arg0: i32) -> (i32, i32) {
    %c0_i32 = arith.constant 0 : i32
    %c0_i32_0 = arith.constant 0 : i32
    %c0_i32_1 = arith.constant 0 : i32
    return %c0_i32, %c0_i32_0 : i32, i32
  }
  func.func @transform_3(%arg0: i32) -> (i32, i32) {
    %c0_i32 = arith.constant 0 : i32
    %c0_i32_0 = arith.constant 0 : i32
    return %arg0, %c0_i32 : i32, i32
  }
}

module attributes {stable_mosaic.version = 11 : i64} {
  func.func @_fused_matmul_kernel(%arg0: i32, %arg1: memref<392x144xbf16, #tpu.memory_space<vmem>>, %arg2: memref<144x128xbf16, #tpu.memory_space<vmem>>, %arg3: memref<1x128xf32, #tpu.memory_space<vmem>>, %arg4: memref<392x128xf32, #tpu.memory_space<vmem>>) attributes {dimension_semantics = [#tpu.dimension_semantics<parallel>], iteration_bounds = array<i64: 1>, scalar_prefetch = 0 : i64, scratch_operands = 0 : i64, tpu.core_type = #tpu.core_type<tc>, window_params = [{transform_indices = @transform_0, window_bounds = array<i64: 392, 144>}, {pipeline_mode = #tpu.pipeline_mode<synchronous>, transform_indices = @transform_1, window_bounds = array<i64: 144, 128>}, {pipeline_mode = #tpu.pipeline_mode<synchronous>, transform_indices = @transform_2, window_bounds = array<i64: 1, 128>}, {transform_indices = @transform_3, window_bounds = array<i64: 392, 128>}]} {
    %c0 = arith.constant 0 : index
    %c0_0 = arith.constant 0 : index
    %0 = vector.load %arg1[%c0, %c0_0] : memref<392x144xbf16, #tpu.memory_space<vmem>>, vector<392x144xbf16>
    %c0_1 = arith.constant 0 : index
    %c0_2 = arith.constant 0 : index
    %1 = vector.load %arg2[%c0_1, %c0_2] : memref<144x128xbf16, #tpu.memory_space<vmem>>, vector<144x128xbf16>
    %cst = arith.constant dense<0.000000e+00> : vector<392x128xf32>
    %2 = tpu.matmul %0, %1, %cst {dimension_numbers = #tpu.dot_dimension_numbers<[1], [0], [0], [1], [0, 0, 1, 1], [], []>} : vector<392x144xbf16>, vector<144x128xbf16>, vector<392x128xf32> -> vector<392x128xf32>
    %c0_3 = arith.constant 0 : index
    %c0_4 = arith.constant 0 : index
    %3 = vector.load %arg3[%c0_3, %c0_4] : memref<1x128xf32, #tpu.memory_space<vmem>>, vector<1x128xf32>
    %4 = vector.broadcast %3 : vector<1x128xf32> to vector<392x128xf32>
    %5 = arith.addf %2, %4 : vector<392x128xf32>
    %6 = arith.negf %5 : vector<392x128xf32>
    %7 = math.exp %6 : vector<392x128xf32>
    %cst_5 = arith.constant 1.000000e+00 : f32
    %8 = vector.broadcast %cst_5 : f32 to vector<392x128xf32>
    %9 = arith.addf %8, %7 : vector<392x128xf32>
    %10 = arith.divf %8, %9 : vector<392x128xf32>
    %c0_6 = arith.constant 0 : index
    %c0_7 = arith.constant 0 : index
    %11 = vector.load %arg4[%c0_6, %c0_7] : memref<392x128xf32, #tpu.memory_space<vmem>>, vector<392x128xf32>
    tpu.vector_store %arg4[%c0_6, %c0_7], %10 {strides = array<i32>} : memref<392x128xf32, #tpu.memory_space<vmem>>, vector<392x128xf32>,
    return
  }
  func.func @transform_0(%arg0: i32) -> (i32, i32) {
    %c0_i32 = arith.constant 0 : i32
    %c0_i32_0 = arith.constant 0 : i32
    return %arg0, %c0_i32 : i32, i32
  }
  func.func @transform_1(%arg0: i32) -> (i32, i32) {
    %c0_i32 = arith.constant 0 : i32
    %c0_i32_0 = arith.constant 0 : i32
    %c0_i32_1 = arith.constant 0 : i32
    return %c0_i32, %c0_i32_0 : i32, i32
  }
  func.func @transform_2(%arg0: i32) -> (i32, i32) {
    %c0_i32 = arith.constant 0 : i32
    %c0_i32_0 = arith.constant 0 : i32
    %c0_i32_1 = arith.constant 0 : i32
    return %c0_i32, %c0_i32_0 : i32, i32
  }
  func.func @transform_3(%arg0: i32) -> (i32, i32) {
    %c0_i32 = arith.constant 0 : i32
    %c0_i32_0 = arith.constant 0 : i32
    return %arg0, %c0_i32 : i32, i32
  }
}

</mosaic_0001>

<llo_original>
// kernel: network_forward.10
$region0: #{network_forward.10}
  #allocation0 [shape = 'u32[]', space=smem, size = 0x4, offset = 0x4, fixed_abs, tag = 'smem constant byte address 0x4 - core index']
  #allocation1 [shape = 'u32[144,128]{1,0:T(1,128)}', space=vmem, size = 0x12000, scoped, tag = 'internal scratch']
  %s0 = inlined_call_operand.vmem [shape: bf16[392,16], index: 0, kind: input, shape index: {}]
  %s1 = inlined_call_operand.vmem [shape: bf16[16,128], index: 1, kind: input, shape index: {}]
  %s2 = inlined_call_operand.vmem [shape: f32[1,128], index: 2, kind: input, shape index: {}]
  %s3 = inlined_call_operand.vmem [shape: f32[392,128], index: 3, kind: output, shape index: {}]
  %s4 = sld [smem:[#allocation0]]
  $region22: #{network_forward.10} parent=0
    _
  %s6 = ssub.s32 1, %s4
  %s7 = scalar_select 0, %s6, %s4
  // Predicated region
  $region2: #{network_forward.10} parent=0 // pred_check
    _
  $region3: #{network_forward.10} parent=0 // pred_check_branch
    %9 = sbr.rel (0) target = $region5
  $region4: #{network_forward.10} parent=0 // pred_region
    _
  $region5: #{network_forward.10} parent=0 // pred_fallthru
    _
  // Predicated region
  $region6: #{network_forward.10} parent=0 // pred_check
    _
  $region7: #{network_forward.10} parent=0 // pred_check_branch
    %11 = sbr.rel (0) target = $region9
  $region8: #{network_forward.10} parent=0 // pred_region
    _
  $region9: #{network_forward.10} parent=0 // pred_fallthru
    _
  // Predicated region
  $region10: #{network_forward.10} parent=0 // pred_check
    _
  $region11: #{network_forward.10} parent=0 // pred_check_branch
    %13 = sbr.rel (0) target = $region13
  $region12: #{network_forward.10} parent=0 // pred_region
    _
  $region13: #{network_forward.10} parent=0 // pred_fallthru
    _
  %v15 = vld [vmem:[%s0] sm:$0xf]
  %v16 = vld [vmem:[%s0 + $0x4] sm:$0xf]
  %v17 = vld [vmem:[%s0 + $0x8] sm:$0xf]
  %v18 = vld [vmem:[%s0 + $0xc] sm:$0xf]
  %v19 = vld [vmem:[%s0 + $0x10] sm:$0xf]
  %v20 = vld [vmem:[%s0 + $0x14] sm:$0xf]
  %v21 = vld [vmem:[%s0 + $0x18] sm:$0xf]
  %v22 = vld [vmem:[%s0 + $0x1c] sm:$0xf]
  %v23 = vld [vmem:[%s0 + $0x20] sm:$0xf]
  %v24 = vld [vmem:[%s0 + $0x24] sm:$0xf]
  %v25 = vld [vmem:[%s0 + $0x28] sm:$0xf]
  %v26 = vld [vmem:[%s0 + $0x2c] sm:$0xf]
  %v27 = vld [vmem:[%s0 + $0x30] sm:$0xf]
  %v28 = vld [vmem:[%s0 + $0x34] sm:$0xf]
  %v29 = vld [vmem:[%s0 + $0x38] sm:$0xf]
  %v30 = vld [vmem:[%s0 + $0x3c] sm:$0xf]
  %v31 = vld [vmem:[%s0 + $0x40] sm:$0xf]
  %v32 = vld [vmem:[%s0 + $0x44] sm:$0xf]
  %v33 = vld [vmem:[%s0 + $0x48] sm:$0xf]
  %v34 = vld [vmem:[%s0 + $0x4c] sm:$0xf]
  %v35 = vld [vmem:[%s0 + $0x50] sm:$0xf]
  %v36 = vld [vmem:[%s0 + $0x54] sm:$0xf]
  %v37 = vld [vmem:[%s0 + $0x58] sm:$0xf]
  %v38 = vld [vmem:[%s0 + $0x5c] sm:$0xf]
  %v39 = vld [vmem:[%s0 + $0x60] sm:$0xf]
  %v40 = vld [vmem:[%s0 + $0x64] sm:$0xf]
  %v41 = vld [vmem:[%s0 + $0x68] sm:$0xf]
  %v42 = vld [vmem:[%s0 + $0x6c] sm:$0xf]
  %v43 = vld [vmem:[%s0 + $0x70] sm:$0xf]
  %v44 = vld [vmem:[%s0 + $0x74] sm:$0xf]
  %v45 = vld [vmem:[%s0 + $0x78] sm:$0xf]
  %v46 = vld [vmem:[%s0 + $0x7c] sm:$0xf]
  %v47 = vld [vmem:[%s0 + $0x80] sm:$0xf]
  %v48 = vld [vmem:[%s0 + $0x84] sm:$0xf]
  %v49 = vld [vmem:[%s0 + $0x88] sm:$0xf]
  %v50 = vld [vmem:[%s0 + $0x8c] sm:$0xf]
  %v51 = vld [vmem:[%s0 + $0x90] sm:$0xf]
  %v52 = vld [vmem:[%s0 + $0x94] sm:$0xf]
  %v53 = vld [vmem:[%s0 + $0x98] sm:$0xf]
  %v54 = vld [vmem:[%s0 + $0x9c] sm:$0xf]
  %v55 = vld [vmem:[%s0 + $0xa0] sm:$0xf]
  %v56 = vld [vmem:[%s0 + $0xa4] sm:$0xf]
  %v57 = vld [vmem:[%s0 + $0xa8] sm:$0xf]
  %v58 = vld [vmem:[%s0 + $0xac] sm:$0xf]
  %v59 = vld [vmem:[%s0 + $0xb0] sm:$0xf]
  %v60 = vld [vmem:[%s0 + $0xb4] sm:$0xf]
  %v61 = vld [vmem:[%s0 + $0xb8] sm:$0xf]
  %v62 = vld [vmem:[%s0 + $0xbc] sm:$0xf]
  %v63 = vld [vmem:[%s0 + $0xc0] sm:$0xf]
  %v64 = vld [vmem:[%s1] sm:$0xf]
  %v65 = vld [vmem:[%s1 + $0x4] sm:$0xf]
  %v66 = vld [vmem:[%s2] sm:$0x1]
  %v68 = vlaneseq
  %v69 = vshrl.u32 %v68, 7
  %v70 = vsub.s32 0, %v69
  %v71 = vrot.slane %v66, %v70
  %v122 = vunpack.c.l.b16 %v15
  %v123 = vunpack.c.l.b16 %v16
  %v124 = vunpack.c.l.b16 %v17
  %v125 = vunpack.c.l.b16 %v18
  %v126 = vunpack.c.l.b16 %v19
  %v127 = vunpack.c.l.b16 %v20
  %v128 = vunpack.c.l.b16 %v21
  %v129 = vunpack.c.l.b16 %v22
  %v130 = vunpack.c.l.b16 %v23
  %v131 = vunpack.c.l.b16 %v24
  %v132 = vunpack.c.l.b16 %v25
  %v133 = vunpack.c.l.b16 %v26
  %v134 = vunpack.c.l.b16 %v27
  %v135 = vunpack.c.l.b16 %v28
  %v136 = vunpack.c.l.b16 %v29
  %v137 = vunpack.c.l.b16 %v30
  %v138 = vunpack.c.l.b16 %v31
  %v139 = vunpack.c.l.b16 %v32
  %v140 = vunpack.c.l.b16 %v33
  %v141 = vunpack.c.l.b16 %v34
  %v142 = vunpack.c.l.b16 %v35
  %v143 = vunpack.c.l.b16 %v36
  %v144 = vunpack.c.l.b16 %v37
  %v145 = vunpack.c.l.b16 %v38
  %v146 = vunpack.c.l.b16 %v39
  %v147 = vunpack.c.l.b16 %v40
  %v148 = vunpack.c.l.b16 %v41
  %v149 = vunpack.c.l.b16 %v42
  %v150 = vunpack.c.l.b16 %v43
  %v151 = vunpack.c.l.b16 %v44
  %v152 = vunpack.c.l.b16 %v45
  %v153 = vunpack.c.l.b16 %v46
  %v154 = vunpack.c.l.b16 %v47
  %v155 = vunpack.c.l.b16 %v48
  %v156 = vunpack.c.l.b16 %v49
  %v157 = vunpack.c.l.b16 %v50
  %v158 = vunpack.c.l.b16 %v51
  %v159 = vunpack.c.l.b16 %v52
  %v160 = vunpack.c.l.b16 %v53
  %v161 = vunpack.c.l.b16 %v54
  %v162 = vunpack.c.l.b16 %v55
  %v163 = vunpack.c.l.b16 %v56
  %v164 = vunpack.c.l.b16 %v57
  %v165 = vunpack.c.l.b16 %v58
  %v166 = vunpack.c.l.b16 %v59
  %v167 = vunpack.c.l.b16 %v60
  %v168 = vunpack.c.l.b16 %v61
  %v169 = vunpack.c.l.b16 %v62
  %v170 = vunpack.c.l.b16 %v63
  %v171 = vpack.c.b16 %v123, %v122
  %v172 = vpack.c.b16 %v125, %v124
  %v173 = vpack.c.b16 %v127, %v126
  %v174 = vpack.c.b16 %v129, %v128
  %v175 = vpack.c.b16 %v131, %v130
  %v176 = vpack.c.b16 %v133, %v132
  %v177 = vpack.c.b16 %v135, %v134
  %v178 = vpack.c.b16 %v137, %v136
  %v179 = vpack.c.b16 %v139, %v138
  %v180 = vpack.c.b16 %v141, %v140
  %v181 = vpack.c.b16 %v143, %v142
  %v182 = vpack.c.b16 %v145, %v144
  %v183 = vpack.c.b16 %v147, %v146
  %v184 = vpack.c.b16 %v149, %v148
  %v185 = vpack.c.b16 %v151, %v150
  %v186 = vpack.c.b16 %v153, %v152
  %v187 = vpack.c.b16 %v155, %v154
  %v188 = vpack.c.b16 %v157, %v156
  %v189 = vpack.c.b16 %v159, %v158
  %v190 = vpack.c.b16 %v161, %v160
  %v191 = vpack.c.b16 %v163, %v162
  %v192 = vpack.c.b16 %v165, %v164
  %v193 = vpack.c.b16 %v167, %v166
  %v194 = vpack.c.b16 %v169, %v168
  %v195 = vpack.c.b16 %v170, %v170
  %v198 = vunpack.c.l.b16 %v64
  %v199 = vunpack.c.l.b16 %v65
  %v200 = vpack.c.b16 %v199, %v198
  %vm202 = vcmask 130048
  %v204 = vsel %vm202, %v171, 0
  %v207 = vsel %vm202, %v172, 0
  %v210 = vsel %vm202, %v173, 0
  %v213 = vsel %vm202, %v174, 0
  %v216 = vsel %vm202, %v175, 0
  %v219 = vsel %vm202, %v176, 0
  %v222 = vsel %vm202, %v177, 0
  %v225 = vsel %vm202, %v178, 0
  %v228 = vsel %vm202, %v179, 0
  %v231 = vsel %vm202, %v180, 0
  %v234 = vsel %vm202, %v181, 0
  %v237 = vsel %vm202, %v182, 0
  %v240 = vsel %vm202, %v183, 0
  %v243 = vsel %vm202, %v184, 0
  %v246 = vsel %vm202, %v185, 0
  %v249 = vsel %vm202, %v186, 0
  %v252 = vsel %vm202, %v187, 0
  %v255 = vsel %vm202, %v188, 0
  %v258 = vsel %vm202, %v189, 0
  %v261 = vsel %vm202, %v190, 0
  %v264 = vsel %vm202, %v191, 0
  %v267 = vsel %vm202, %v192, 0
  %v270 = vsel %vm202, %v193, 0
  %v273 = vsel %vm202, %v194, 0
  %v276 = vsel %vm202, %v195, 0
  %278 = vmatprep.subr.bf16.mxu0 0
  %279 = vmatpush1.bf16.msra.mxu0 0
  %280 = vmatprep.subr.bf16.mxu0 0
  %281 = vmatpush1.bf16.msra.mxu0 0
  %282 = vmatprep.subr.bf16.mxu0 0
  %283 = vmatpush1.bf16.msra.mxu0 0
  %284 = vmatprep.subr.bf16.mxu0 0
  %285 = vmatpush1.bf16.msra.mxu0 0
  %286 = vmatprep.subr.bf16.mxu0 0
  %287 = vmatpush1.bf16.msra.mxu0 0
  %288 = vmatprep.subr.bf16.mxu0 0
  %289 = vmatpush1.bf16.msra.mxu0 0
  %290 = vmatprep.subr.bf16.mxu0 0
  %291 = vmatpush1.bf16.msra.mxu0 0
  %292 = vmatprep.subr.bf16.mxu0 0
  %293 = vmatpush1.bf16.msra.mxu0 %v200
  %294 = vmatprep.subr.bf16.mxu0 0
  %295 = vmatpush2.bf16.msra.mxu0 0
  %296 = vmatprep.subr.bf16.mxu0 0
  %297 = vmatpush2.bf16.msra.mxu0 0
  %298 = vmatprep.subr.bf16.mxu0 0
  %299 = vmatpush2.bf16.msra.mxu0 0
  %300 = vmatprep.subr.bf16.mxu0 0
  %301 = vmatpush2.bf16.msra.mxu0 0
  %302 = vmatprep.subr.bf16.mxu0 0
  %303 = vmatpush2.bf16.msra.mxu0 0
  %304 = vmatprep.subr.bf16.mxu0 0
  %305 = vmatpush2.bf16.msra.mxu0 0
  %306 = vmatprep.subr.bf16.mxu0 0
  %307 = vmatpush2.bf16.msra.mxu0 0
  %308 = vmatprep.subr.bf16.mxu0 0
  %309 = vmatpush2.bf16.msra.mxu0 0
  %310 = vmatprep.mubr.bf16.mxu0 0
  %311 = vmatmul.mubr.bf16.gmra.mxu0 %v204
  %v312 = vpop.f32.mrf.mxu0
  %v313 = vadd.f32 %v71, %v312
  %v314 = vpop.f32.mrf.mxu0
  %v315 = vpop.f32.mrf.mxu0
  %v316 = vadd.f32 %v71, %v315
  %v317 = vpop.f32.mrf.mxu0
  %318 = vmatprep.mubr.bf16.mxu0 0
  %319 = vmatmul.mubr.bf16.gmra.mxu0 %v207
  %v320 = vpop.f32.mrf.mxu0
  %v321 = vadd.f32 %v71, %v320
  %v322 = vpop.f32.mrf.mxu0
  %v323 = vpop.f32.mrf.mxu0
  %v324 = vadd.f32 %v71, %v323
  %v325 = vpop.f32.mrf.mxu0
  %326 = vmatprep.mubr.bf16.mxu0 0
  %327 = vmatmul.mubr.bf16.gmra.mxu0 %v210
  %v328 = vpop.f32.mrf.mxu0
  %v329 = vadd.f32 %v71, %v328
  %v330 = vpop.f32.mrf.mxu0
  %v331 = vpop.f32.mrf.mxu0
  %v332 = vadd.f32 %v71, %v331
  %v333 = vpop.f32.mrf.mxu0
  %334 = vmatprep.mubr.bf16.mxu0 0
  %335 = vmatmul.mubr.bf16.gmra.mxu0 %v213
  %v336 = vpop.f32.mrf.mxu0
  %v337 = vadd.f32 %v71, %v336
  %v338 = vpop.f32.mrf.mxu0
  %v339 = vpop.f32.mrf.mxu0
  %v340 = vadd.f32 %v71, %v339
  %v341 = vpop.f32.mrf.mxu0
  %342 = vmatprep.mubr.bf16.mxu0 0
  %343 = vmatmul.mubr.bf16.gmra.mxu0 %v216
  %v344 = vpop.f32.mrf.mxu0
  %v345 = vadd.f32 %v71, %v344
  %v346 = vpop.f32.mrf.mxu0
  %v347 = vpop.f32.mrf.mxu0
  %v348 = vadd.f32 %v71, %v347
  %v349 = vpop.f32.mrf.mxu0
  %350 = vmatprep.mubr.bf16.mxu0 0
  %351 = vmatmul.mubr.bf16.gmra.mxu0 %v219
  %v352 = vpop.f32.mrf.mxu0
  %v353 = vadd.f32 %v71, %v352
  %v354 = vpop.f32.mrf.mxu0
  %v355 = vpop.f32.mrf.mxu0
  %v356 = vadd.f32 %v71, %v355
  %v357 = vpop.f32.mrf.mxu0
  %358 = vmatprep.mubr.bf16.mxu0 0
  %359 = vmatmul.mubr.bf16.gmra.mxu0 %v222
  %v360 = vpop.f32.mrf.mxu0
  %v361 = vadd.f32 %v71, %v360
  %v362 = vpop.f32.mrf.mxu0
  %v363 = vpop.f32.mrf.mxu0
  %v364 = vadd.f32 %v71, %v363
  %v365 = vpop.f32.mrf.mxu0
  %366 = vmatprep.mubr.bf16.mxu0 0
  %367 = vmatmul.mubr.bf16.gmra.mxu0 %v225
  %v368 = vpop.f32.mrf.mxu0
  %v369 = vadd.f32 %v71, %v368
  %v370 = vpop.f32.mrf.mxu0
  %v371 = vpop.f32.mrf.mxu0
  %v372 = vadd.f32 %v71, %v371
  %v373 = vpop.f32.mrf.mxu0
  %374 = vmatprep.mubr.bf16.mxu0 0
  %375 = vmatmul.mubr.bf16.gmra.mxu0 %v228
  %v376 = vpop.f32.mrf.mxu0
  %v377 = vadd.f32 %v71, %v376
  %v378 = vpop.f32.mrf.mxu0
  %v379 = vpop.f32.mrf.mxu0
  %v380 = vadd.f32 %v71, %v379
  %v381 = vpop.f32.mrf.mxu0
  %382 = vmatprep.mubr.bf16.mxu0 0
  %383 = vmatmul.mubr.bf16.gmra.mxu0 %v231
  %v384 = vpop.f32.mrf.mxu0
  %v385 = vadd.f32 %v71, %v384
  %v386 = vpop.f32.mrf.mxu0
  %v387 = vpop.f32.mrf.mxu0
  %v388 = vadd.f32 %v71, %v387
  %v389 = vpop.f32.mrf.mxu0
  %390 = vmatprep.mubr.bf16.mxu0 0
  %391 = vmatmul.mubr.bf16.gmra.mxu0 %v234
  %v392 = vpop.f32.mrf.mxu0
  %v393 = vadd.f32 %v71, %v392
  %v394 = vpop.f32.mrf.mxu0
  %v395 = vpop.f32.mrf.mxu0
  %v396 = vadd.f32 %v71, %v395
  %v397 = vpop.f32.mrf.mxu0
  %398 = vmatprep.mubr.bf16.mxu0 0
  %399 = vmatmul.mubr.bf16.gmra.mxu0 %v237
  %v400 = vpop.f32.mrf.mxu0
  %v401 = vadd.f32 %v71, %v400
  %v402 = vpop.f32.mrf.mxu0
  %v403 = vpop.f32.mrf.mxu0
  %v404 = vadd.f32 %v71, %v403
  %v405 = vpop.f32.mrf.mxu0
  %406 = vmatprep.mubr.bf16.mxu0 0
  %407 = vmatmul.mubr.bf16.gmra.mxu0 %v240
  %v408 = vpop.f32.mrf.mxu0
  %v409 = vadd.f32 %v71, %v408
  %v410 = vpop.f32.mrf.mxu0
  %v411 = vpop.f32.mrf.mxu0
  %v412 = vadd.f32 %v71, %v411
  %v413 = vpop.f32.mrf.mxu0
  %414 = vmatprep.mubr.bf16.mxu0 0
  %415 = vmatmul.mubr.bf16.gmra.mxu0 %v243
  %v416 = vpop.f32.mrf.mxu0
  %v417 = vadd.f32 %v71, %v416
  %v418 = vpop.f32.mrf.mxu0
  %v419 = vpop.f32.mrf.mxu0
  %v420 = vadd.f32 %v71, %v419
  %v421 = vpop.f32.mrf.mxu0
  %422 = vmatprep.mubr.bf16.mxu0 0
  %423 = vmatmul.mubr.bf16.gmra.mxu0 %v246
  %v424 = vpop.f32.mrf.mxu0
  %v425 = vadd.f32 %v71, %v424
  %v426 = vpop.f32.mrf.mxu0
  %v427 = vpop.f32.mrf.mxu0
  %v428 = vadd.f32 %v71, %v427
  %v429 = vpop.f32.mrf.mxu0
  %430 = vmatprep.mubr.bf16.mxu0 0
  %431 = vmatmul.mubr.bf16.gmra.mxu0 %v249
  %v432 = vpop.f32.mrf.mxu0
  %v433 = vadd.f32 %v71, %v432
  %v434 = vpop.f32.mrf.mxu0
  %v435 = vpop.f32.mrf.mxu0
  %v436 = vadd.f32 %v71, %v435
  %v437 = vpop.f32.mrf.mxu0
  %438 = vmatprep.mubr.bf16.mxu0 0
  %439 = vmatmul.mubr.bf16.gmra.mxu0 %v252
  %v440 = vpop.f32.mrf.mxu0
  %v441 = vadd.f32 %v71, %v440
  %v442 = vpop.f32.mrf.mxu0
  %v443 = vpop.f32.mrf.mxu0
  %v444 = vadd.f32 %v71, %v443
  %v445 = vpop.f32.mrf.mxu0
  %446 = vmatprep.mubr.bf16.mxu0 0
  %447 = vmatmul.mubr.bf16.gmra.mxu0 %v255
  %v448 = vpop.f32.mrf.mxu0
  %v449 = vadd.f32 %v71, %v448
  %v450 = vpop.f32.mrf.mxu0
  %v451 = vpop.f32.mrf.mxu0
  %v452 = vadd.f32 %v71, %v451
  %v453 = vpop.f32.mrf.mxu0
  %454 = vmatprep.mubr.bf16.mxu0 0
  %455 = vmatmul.mubr.bf16.gmra.mxu0 %v258
  %v456 = vpop.f32.mrf.mxu0
  %v457 = vadd.f32 %v71, %v456
  %v458 = vpop.f32.mrf.mxu0
  %v459 = vpop.f32.mrf.mxu0
  %v460 = vadd.f32 %v71, %v459
  %v461 = vpop.f32.mrf.mxu0
  %462 = vmatprep.mubr.bf16.mxu0 0
  %463 = vmatmul.mubr.bf16.gmra.mxu0 %v261
  %v464 = vpop.f32.mrf.mxu0
  %v465 = vadd.f32 %v71, %v464
  %v466 = vpop.f32.mrf.mxu0
  %v467 = vpop.f32.mrf.mxu0
  %v468 = vadd.f32 %v71, %v467
  %v469 = vpop.f32.mrf.mxu0
  %470 = vmatprep.mubr.bf16.mxu0 0
  %471 = vmatmul.mubr.bf16.gmra.mxu0 %v264
  %v472 = vpop.f32.mrf.mxu0
  %v473 = vadd.f32 %v71, %v472
  %v474 = vpop.f32.mrf.mxu0
  %v475 = vpop.f32.mrf.mxu0
  %v476 = vadd.f32 %v71, %v475
  %v477 = vpop.f32.mrf.mxu0
  %478 = vmatprep.mubr.bf16.mxu0 0
  %479 = vmatmul.mubr.bf16.gmra.mxu0 %v267
  %v480 = vpop.f32.mrf.mxu0
  %v481 = vadd.f32 %v71, %v480
  %v482 = vpop.f32.mrf.mxu0
  %v483 = vpop.f32.mrf.mxu0
  %v484 = vadd.f32 %v71, %v483
  %v485 = vpop.f32.mrf.mxu0
  %486 = vmatprep.mubr.bf16.mxu0 0
  %487 = vmatmul.mubr.bf16.gmra.mxu0 %v270
  %v488 = vpop.f32.mrf.mxu0
  %v489 = vadd.f32 %v71, %v488
  %v490 = vpop.f32.mrf.mxu0
  %v491 = vpop.f32.mrf.mxu0
  %v492 = vadd.f32 %v71, %v491
  %v493 = vpop.f32.mrf.mxu0
  %494 = vmatprep.mubr.bf16.mxu0 0
  %495 = vmatmul.mubr.bf16.gmra.mxu0 %v273
  %v496 = vpop.f32.mrf.mxu0
  %v497 = vadd.f32 %v71, %v496
  %v498 = vpop.f32.mrf.mxu0
  %v499 = vpop.f32.mrf.mxu0
  %v500 = vadd.f32 %v71, %v499
  %v501 = vpop.f32.mrf.mxu0
  %502 = vmatprep.mubr.bf16.mxu0 0
  %503 = vmatmul.mubr.bf16.gmra.mxu0 %v276
  %v504 = vpop.f32.mrf.mxu0
  %v505 = vadd.f32 %v71, %v504
  %v506 = vpop.f32.mrf.mxu0
  %v507 = vpop.f32.mrf.mxu0
  %v508 = vpop.f32.mrf.mxu0
  %509 = vdwg.mxu0
  %vm510 = vcmp.gt.f32.partialorder %v313, 0.0
  %vm511 = vcmp.gt.f32.partialorder %v316, 0.0
  %vm512 = vcmp.gt.f32.partialorder %v321, 0.0
  %vm513 = vcmp.gt.f32.partialorder %v324, 0.0
  %vm514 = vcmp.gt.f32.partialorder %v329, 0.0
  %vm515 = vcmp.gt.f32.partialorder %v332, 0.0
  %vm516 = vcmp.gt.f32.partialorder %v337, 0.0
  %vm517 = vcmp.gt.f32.partialorder %v340, 0.0
  %vm518 = vcmp.gt.f32.partialorder %v345, 0.0
  %vm519 = vcmp.gt.f32.partialorder %v348, 0.0
  %vm520 = vcmp.gt.f32.partialorder %v353, 0.0
  %vm521 = vcmp.gt.f32.partialorder %v356, 0.0
  %vm522 = vcmp.gt.f32.partialorder %v361, 0.0
  %vm523 = vcmp.gt.f32.partialorder %v364, 0.0
  %vm524 = vcmp.gt.f32.partialorder %v369, 0.0
  %vm525 = vcmp.gt.f32.partialorder %v372, 0.0
  %vm526 = vcmp.gt.f32.partialorder %v377, 0.0
  %vm527 = vcmp.gt.f32.partialorder %v380, 0.0
  %vm528 = vcmp.gt.f32.partialorder %v385, 0.0
  %vm529 = vcmp.gt.f32.partialorder %v388, 0.0
  %vm530 = vcmp.gt.f32.partialorder %v393, 0.0
  %vm531 = vcmp.gt.f32.partialorder %v396, 0.0
  %vm532 = vcmp.gt.f32.partialorder %v401, 0.0
  %vm533 = vcmp.gt.f32.partialorder %v404, 0.0
  %vm534 = vcmp.gt.f32.partialorder %v409, 0.0
  %vm535 = vcmp.gt.f32.partialorder %v412, 0.0
  %vm536 = vcmp.gt.f32.partialorder %v417, 0.0
  %vm537 = vcmp.gt.f32.partialorder %v420, 0.0
  %vm538 = vcmp.gt.f32.partialorder %v425, 0.0
  %vm539 = vcmp.gt.f32.partialorder %v428, 0.0
  %vm540 = vcmp.gt.f32.partialorder %v433, 0.0
  %vm541 = vcmp.gt.f32.partialorder %v436, 0.0
  %vm542 = vcmp.gt.f32.partialorder %v441, 0.0
  %vm543 = vcmp.gt.f32.partialorder %v444, 0.0
  %vm544 = vcmp.gt.f32.partialorder %v449, 0.0
  %vm545 = vcmp.gt.f32.partialorder %v452, 0.0
  %vm546 = vcmp.gt.f32.partialorder %v457, 0.0
  %vm547 = vcmp.gt.f32.partialorder %v460, 0.0
  %vm548 = vcmp.gt.f32.partialorder %v465, 0.0
  %vm549 = vcmp.gt.f32.partialorder %v468, 0.0
  %vm550 = vcmp.gt.f32.partialorder %v473, 0.0
  %vm551 = vcmp.gt.f32.partialorder %v476, 0.0
  %vm552 = vcmp.gt.f32.partialorder %v481, 0.0
  %vm553 = vcmp.gt.f32.partialorder %v484, 0.0
  %vm554 = vcmp.gt.f32.partialorder %v489, 0.0
  %vm555 = vcmp.gt.f32.partialorder %v492, 0.0
  %vm556 = vcmp.gt.f32.partialorder %v497, 0.0
  %vm557 = vcmp.gt.f32.partialorder %v500, 0.0
  %vm558 = vcmp.gt.f32.partialorder %v505, 0.0
  %v559 = vmul.f32 %v313, 0.2
  %v560 = vmul.f32 %v316, 0.2
  %v561 = vmul.f32 %v321, 0.2
  %v562 = vmul.f32 %v324, 0.2
  %v563 = vmul.f32 %v329, 0.2
  %v564 = vmul.f32 %v332, 0.2
  %v565 = vmul.f32 %v337, 0.2
  %v566 = vmul.f32 %v340, 0.2
  %v567 = vmul.f32 %v345, 0.2
  %v568 = vmul.f32 %v348, 0.2
  %v569 = vmul.f32 %v353, 0.2
  %v570 = vmul.f32 %v356, 0.2
  %v571 = vmul.f32 %v361, 0.2
  %v572 = vmul.f32 %v364, 0.2
  %v573 = vmul.f32 %v369, 0.2
  %v574 = vmul.f32 %v372, 0.2
  %v575 = vmul.f32 %v377, 0.2
  %v576 = vmul.f32 %v380, 0.2
  %v577 = vmul.f32 %v385, 0.2
  %v578 = vmul.f32 %v388, 0.2
  %v579 = vmul.f32 %v393, 0.2
  %v580 = vmul.f32 %v396, 0.2
  %v581 = vmul.f32 %v401, 0.2
  %v582 = vmul.f32 %v404, 0.2
  %v583 = vmul.f32 %v409, 0.2
  %v584 = vmul.f32 %v412, 0.2
  %v585 = vmul.f32 %v417, 0.2
  %v586 = vmul.f32 %v420, 0.2
  %v587 = vmul.f32 %v425, 0.2
  %v588 = vmul.f32 %v428, 0.2
  %v589 = vmul.f32 %v433, 0.2
  %v590 = vmul.f32 %v436, 0.2
  %v591 = vmul.f32 %v441, 0.2
  %v592 = vmul.f32 %v444, 0.2
  %v593 = vmul.f32 %v449, 0.2
  %v594 = vmul.f32 %v452, 0.2
  %v595 = vmul.f32 %v457, 0.2
  %v596 = vmul.f32 %v460, 0.2
  %v597 = vmul.f32 %v465, 0.2
  %v598 = vmul.f32 %v468, 0.2
  %v599 = vmul.f32 %v473, 0.2
  %v600 = vmul.f32 %v476, 0.2
  %v601 = vmul.f32 %v481, 0.2
  %v602 = vmul.f32 %v484, 0.2
  %v603 = vmul.f32 %v489, 0.2
  %v604 = vmul.f32 %v492, 0.2
  %v605 = vmul.f32 %v497, 0.2
  %v606 = vmul.f32 %v500, 0.2
  %v607 = vmul.f32 %v505, 0.2
  %v608 = vsel %vm510, %v313, %v559
  %v609 = vsel %vm511, %v316, %v560
  %v610 = vsel %vm512, %v321, %v561
  %v611 = vsel %vm513, %v324, %v562
  %v612 = vsel %vm514, %v329, %v563
  %v613 = vsel %vm515, %v332, %v564
  %v614 = vsel %vm516, %v337, %v565
  %v615 = vsel %vm517, %v340, %v566
  %v616 = vsel %vm518, %v345, %v567
  %v617 = vsel %vm519, %v348, %v568
  %v618 = vsel %vm520, %v353, %v569
  %v619 = vsel %vm521, %v356, %v570
  %v620 = vsel %vm522, %v361, %v571
  %v621 = vsel %vm523, %v364, %v572
  %v622 = vsel %vm524, %v369, %v573
  %v623 = vsel %vm525, %v372, %v574
  %v624 = vsel %vm526, %v377, %v575
  %v625 = vsel %vm527, %v380, %v576
  %v626 = vsel %vm528, %v385, %v577
  %v627 = vsel %vm529, %v388, %v578
  %v628 = vsel %vm530, %v393, %v579
  %v629 = vsel %vm531, %v396, %v580
  %v630 = vsel %vm532, %v401, %v581
  %v631 = vsel %vm533, %v404, %v582
  %v632 = vsel %vm534, %v409, %v583
  %v633 = vsel %vm535, %v412, %v584
  %v634 = vsel %vm536, %v417, %v585
  %v635 = vsel %vm537, %v420, %v586
  %v636 = vsel %vm538, %v425, %v587
  %v637 = vsel %vm539, %v428, %v588
  %v638 = vsel %vm540, %v433, %v589
  %v639 = vsel %vm541, %v436, %v590
  %v640 = vsel %vm542, %v441, %v591
  %v641 = vsel %vm543, %v444, %v592
  %v642 = vsel %vm544, %v449, %v593
  %v643 = vsel %vm545, %v452, %v594
  %v644 = vsel %vm546, %v457, %v595
  %v645 = vsel %vm547, %v460, %v596
  %v646 = vsel %vm548, %v465, %v597
  %v647 = vsel %vm549, %v468, %v598
  %v648 = vsel %vm550, %v473, %v599
  %v649 = vsel %vm551, %v476, %v600
  %v650 = vsel %vm552, %v481, %v601
  %v651 = vsel %vm553, %v484, %v602
  %v652 = vsel %vm554, %v489, %v603
  %v653 = vsel %vm555, %v492, %v604
  %v654 = vsel %vm556, %v497, %v605
  %v655 = vsel %vm557, %v500, %v606
  %v656 = vsel %vm558, %v505, %v607
  %657 = vst [vmem:[%s3] sm:$0xff] %v608
  %658 = vst [vmem:[%s3 + $0x8] sm:$0xff] %v609
  %659 = vst [vmem:[%s3 + $0x10] sm:$0xff] %v610
  %660 = vst [vmem:[%s3 + $0x18] sm:$0xff] %v611
  %661 = vst [vmem:[%s3 + $0x20] sm:$0xff] %v612
  %662 = vst [vmem:[%s3 + $0x28] sm:$0xff] %v613
  %663 = vst [vmem:[%s3 + $0x30] sm:$0xff] %v614
  %664 = vst [vmem:[%s3 + $0x38] sm:$0xff] %v615
  %665 = vst [vmem:[%s3 + $0x40] sm:$0xff] %v616
  %666 = vst [vmem:[%s3 + $0x48] sm:$0xff] %v617
  %667 = vst [vmem:[%s3 + $0x50] sm:$0xff] %v618
  %668 = vst [vmem:[%s3 + $0x58] sm:$0xff] %v619
  %669 = vst [vmem:[%s3 + $0x60] sm:$0xff] %v620
  %670 = vst [vmem:[%s3 + $0x68] sm:$0xff] %v621
  %671 = vst [vmem:[%s3 + $0x70] sm:$0xff] %v622
  %672 = vst [vmem:[%s3 + $0x78] sm:$0xff] %v623
  %673 = vst [vmem:[%s3 + $0x80] sm:$0xff] %v624
  %674 = vst [vmem:[%s3 + $0x88] sm:$0xff] %v625
  %675 = vst [vmem:[%s3 + $0x90] sm:$0xff] %v626
  %676 = vst [vmem:[%s3 + $0x98] sm:$0xff] %v627
  %677 = vst [vmem:[%s3 + $0xa0] sm:$0xff] %v628
  %678 = vst [vmem:[%s3 + $0xa8] sm:$0xff] %v629
  %679 = vst [vmem:[%s3 + $0xb0] sm:$0xff] %v630
  %680 = vst [vmem:[%s3 + $0xb8] sm:$0xff] %v631
  %681 = vst [vmem:[%s3 + $0xc0] sm:$0xff] %v632
  %682 = vst [vmem:[%s3 + $0xc8] sm:$0xff] %v633
  %683 = vst [vmem:[%s3 + $0xd0] sm:$0xff] %v634
  %684 = vst [vmem:[%s3 + $0xd8] sm:$0xff] %v635
  %685 = vst [vmem:[%s3 + $0xe0] sm:$0xff] %v636
  %686 = vst [vmem:[%s3 + $0xe8] sm:$0xff] %v637
  %687 = vst [vmem:[%s3 + $0xf0] sm:$0xff] %v638
  %688 = vst [vmem:[%s3 + $0xf8] sm:$0xff] %v639
  %689 = vst [vmem:[%s3 + $0x100] sm:$0xff] %v640
  %690 = vst [vmem:[%s3 + $0x108] sm:$0xff] %v641
  %691 = vst [vmem:[%s3 + $0x110] sm:$0xff] %v642
  %692 = vst [vmem:[%s3 + $0x118] sm:$0xff] %v643
  %693 = vst [vmem:[%s3 + $0x120] sm:$0xff] %v644
  %694 = vst [vmem:[%s3 + $0x128] sm:$0xff] %v645
  %695 = vst [vmem:[%s3 + $0x130] sm:$0xff] %v646
  %696 = vst [vmem:[%s3 + $0x138] sm:$0xff] %v647
  %697 = vst [vmem:[%s3 + $0x140] sm:$0xff] %v648
  %698 = vst [vmem:[%s3 + $0x148] sm:$0xff] %v649
  %699 = vst [vmem:[%s3 + $0x150] sm:$0xff] %v650
  %700 = vst [vmem:[%s3 + $0x158] sm:$0xff] %v651
  %701 = vst [vmem:[%s3 + $0x160] sm:$0xff] %v652
  %702 = vst [vmem:[%s3 + $0x168] sm:$0xff] %v653
  %703 = vst [vmem:[%s3 + $0x170] sm:$0xff] %v654
  %704 = vst [vmem:[%s3 + $0x178] sm:$0xff] %v655
  %705 = vst [vmem:[%s3 + $0x180] sm:$0xff] %v656
  // Predicated region
  $region14: #{network_forward.10} parent=0 // pred_check
    _
  $region15: #{network_forward.10} parent=0 // pred_check_branch
    %707 = sbr.rel (0) target = $region17
  $region16: #{network_forward.10} parent=0 // pred_region
    _
  $region17: #{network_forward.10} parent=0 // pred_fallthru
    _
  // Predicated region
  $region18: #{network_forward.10} parent=0 // pred_check
    _
  $region19: #{network_forward.10} parent=0 // pred_check_branch
    %709 = sbr.rel (0) target = $region21
  $region20: #{network_forward.10} parent=0 // pred_region
    _
  $region21: #{network_forward.10} parent=0 // pred_fallthru
    _

// kernel: network_forward.11
$region0: #{network_forward.11}
  #allocation0 [shape = 'u32[]', space=smem, size = 0x4, offset = 0x4, fixed_abs, tag = 'smem constant byte address 0x4 - core index']
  #allocation1 [shape = 'u32[144,128]{1,0:T(1,128)}', space=vmem, size = 0x12000, scoped, tag = 'internal scratch']
  %s0 = inlined_call_operand.vmem [shape: bf16[104,256], index: 0, kind: input, shape index: {}]
  %s1 = inlined_call_operand.vmem [shape: bf16[256,128], index: 1, kind: input, shape index: {}]
  %s2 = inlined_call_operand.vmem [shape: f32[1,128], index: 2, kind: input, shape index: {}]
  %s3 = inlined_call_operand.vmem [shape: f32[104,128], index: 3, kind: output, shape index: {}]
  %s4 = sld [smem:[#allocation0]]
  $region22: #{network_forward.11} parent=0
    _
  %s6 = ssub.s32 1, %s4
  %s7 = scalar_select 0, %s6, %s4
  // Predicated region
  $region2: #{network_forward.11} parent=0 // pred_check
    _
  $region3: #{network_forward.11} parent=0 // pred_check_branch
    %9 = sbr.rel (0) target = $region5
  $region4: #{network_forward.11} parent=0 // pred_region
    _
  $region5: #{network_forward.11} parent=0 // pred_fallthru
    _
  // Predicated region
  $region6: #{network_forward.11} parent=0 // pred_check
    _
  $region7: #{network_forward.11} parent=0 // pred_check_branch
    %11 = sbr.rel (0) target = $region9
  $region8: #{network_forward.11} parent=0 // pred_region
    _
  $region9: #{network_forward.11} parent=0 // pred_fallthru
    _
  // Predicated region
  $region10: #{network_forward.11} parent=0 // pred_check
    _
  $region11: #{network_forward.11} parent=0 // pred_check_branch
    %13 = sbr.rel (0) target = $region13
  $region12: #{network_forward.11} parent=0 // pred_region
    _
  $region13: #{network_forward.11} parent=0 // pred_fallthru
    _
  %v15 = vld [vmem:[%s0] sm:$0xff]
  %v16 = vld [vmem:[%s0 + $0x8] sm:$0xff]
  %v17 = vld [vmem:[%s0 + $0x10] sm:$0xff]
  %v18 = vld [vmem:[%s0 + $0x18] sm:$0xff]
  %v19 = vld [vmem:[%s0 + $0x20] sm:$0xff]
  %v20 = vld [vmem:[%s0 + $0x28] sm:$0xff]
  %v21 = vld [vmem:[%s0 + $0x30] sm:$0xff]
  %v22 = vld [vmem:[%s0 + $0x38] sm:$0xff]
  %v23 = vld [vmem:[%s0 + $0x40] sm:$0xff]
  %v24 = vld [vmem:[%s0 + $0x48] sm:$0xff]
  %v25 = vld [vmem:[%s0 + $0x50] sm:$0xff]
  %v26 = vld [vmem:[%s0 + $0x58] sm:$0xff]
  %v27 = vld [vmem:[%s0 + $0x60] sm:$0xff]
  %v28 = vld [vmem:[%s1] sm:$0xf]
  %v29 = vld [vmem:[%s1 + $0x4] sm:$0xf]
  %v30 = vld [vmem:[%s1 + $0x8] sm:$0xf]
  %v31 = vld [vmem:[%s1 + $0xc] sm:$0xf]
  %v32 = vld [vmem:[%s1 + $0x10] sm:$0xf]
  %v33 = vld [vmem:[%s1 + $0x14] sm:$0xf]
  %v34 = vld [vmem:[%s1 + $0x18] sm:$0xf]
  %v35 = vld [vmem:[%s1 + $0x1c] sm:$0xf]
  %v36 = vld [vmem:[%s1 + $0x20] sm:$0xf]
  %v37 = vld [vmem:[%s1 + $0x24] sm:$0xf]
  %v38 = vld [vmem:[%s1 + $0x28] sm:$0xf]
  %v39 = vld [vmem:[%s1 + $0x2c] sm:$0xf]
  %v40 = vld [vmem:[%s1 + $0x30] sm:$0xf]
  %v41 = vld [vmem:[%s1 + $0x34] sm:$0xf]
  %v42 = vld [vmem:[%s1 + $0x38] sm:$0xf]
  %v43 = vld [vmem:[%s1 + $0x3c] sm:$0xf]
  %v44 = vld [vmem:[%s1 + $0x40] sm:$0xf]
  %v45 = vld [vmem:[%s1 + $0x44] sm:$0xf]
  %v46 = vld [vmem:[%s1 + $0x48] sm:$0xf]
  %v47 = vld [vmem:[%s1 + $0x4c] sm:$0xf]
  %v48 = vld [vmem:[%s1 + $0x50] sm:$0xf]
  %v49 = vld [vmem:[%s1 + $0x54] sm:$0xf]
  %v50 = vld [vmem:[%s1 + $0x58] sm:$0xf]
  %v51 = vld [vmem:[%s1 + $0x5c] sm:$0xf]
  %v52 = vld [vmem:[%s1 + $0x60] sm:$0xf]
  %v53 = vld [vmem:[%s1 + $0x64] sm:$0xf]
  %v54 = vld [vmem:[%s1 + $0x68] sm:$0xf]
  %v55 = vld [vmem:[%s1 + $0x6c] sm:$0xf]
  %v56 = vld [vmem:[%s1 + $0x70] sm:$0xf]
  %v57 = vld [vmem:[%s1 + $0x74] sm:$0xf]
  %v58 = vld [vmem:[%s1 + $0x78] sm:$0xf]
  %v59 = vld [vmem:[%s1 + $0x7c] sm:$0xf]
  %v60 = vld [vmem:[%s2] sm:$0x1]
  %v62 = vlaneseq
  %v63 = vshrl.u32 %v62, 7
  %v64 = vsub.s32 0, %v63
  %v65 = vrot.slane %v60, %v64
  %v80 = vunpack.c.l.b16 %v15
  %v81 = vunpack.c.h.b16 %v15
  %v82 = vunpack.c.l.b16 %v16
  %v83 = vunpack.c.h.b16 %v16
  %v84 = vunpack.c.l.b16 %v17
  %v85 = vunpack.c.h.b16 %v17
  %v86 = vunpack.c.l.b16 %v18
  %v87 = vunpack.c.h.b16 %v18
  %v88 = vunpack.c.l.b16 %v19
  %v89 = vunpack.c.h.b16 %v19
  %v90 = vunpack.c.l.b16 %v20
  %v91 = vunpack.c.h.b16 %v20
  %v92 = vunpack.c.l.b16 %v21
  %v93 = vunpack.c.h.b16 %v21
  %v94 = vunpack.c.l.b16 %v22
  %v95 = vunpack.c.h.b16 %v22
  %v96 = vunpack.c.l.b16 %v23
  %v97 = vunpack.c.h.b16 %v23
  %v98 = vunpack.c.l.b16 %v24
  %v99 = vunpack.c.h.b16 %v24
  %v100 = vunpack.c.l.b16 %v25
  %v101 = vunpack.c.h.b16 %v25
  %v102 = vunpack.c.l.b16 %v26
  %v103 = vunpack.c.h.b16 %v26
  %v104 = vunpack.c.l.b16 %v27
  %v105 = vunpack.c.h.b16 %v27
  %v106 = vpack.c.b16 %v82, %v80
  %v107 = vpack.c.b16 %v83, %v81
  %v108 = vpack.c.b16 %v86, %v84
  %v109 = vpack.c.b16 %v87, %v85
  %v110 = vpack.c.b16 %v90, %v88
  %v111 = vpack.c.b16 %v91, %v89
  %v112 = vpack.c.b16 %v94, %v92
  %v113 = vpack.c.b16 %v95, %v93
  %v114 = vpack.c.b16 %v98, %v96
  %v115 = vpack.c.b16 %v99, %v97
  %v116 = vpack.c.b16 %v102, %v100
  %v117 = vpack.c.b16 %v103, %v101
  %v118 = vpack.c.b16 %v104, %v104
  %v119 = vpack.c.b16 %v105, %v105
  %v166 = vunpack.c.l.b16 %v28
  %v167 = vunpack.c.l.b16 %v29
  %v168 = vunpack.c.l.b16 %v30
  %v169 = vunpack.c.l.b16 %v31
  %v170 = vunpack.c.l.b16 %v32
  %v171 = vunpack.c.l.b16 %v33
  %v172 = vunpack.c.l.b16 %v34
  %v173 = vunpack.c.l.b16 %v35
  %v174 = vunpack.c.l.b16 %v36
  %v175 = vunpack.c.l.b16 %v37
  %v176 = vunpack.c.l.b16 %v38
  %v177 = vunpack.c.l.b16 %v39
  %v178 = vunpack.c.l.b16 %v40
  %v179 = vunpack.c.l.b16 %v41
  %v180 = vunpack.c.l.b16 %v42
  %v181 = vunpack.c.l.b16 %v43
  %v182 = vunpack.c.l.b16 %v44
  %v183 = vunpack.c.l.b16 %v45
  %v184 = vunpack.c.l.b16 %v46
  %v185 = vunpack.c.l.b16 %v47
  %v186 = vunpack.c.l.b16 %v48
  %v187 = vunpack.c.l.b16 %v49
  %v188 = vunpack.c.l.b16 %v50
  %v189 = vunpack.c.l.b16 %v51
  %v190 = vunpack.c.l.b16 %v52
  %v191 = vunpack.c.l.b16 %v53
  %v192 = vunpack.c.l.b16 %v54
  %v193 = vunpack.c.l.b16 %v55
  %v194 = vunpack.c.l.b16 %v56
  %v195 = vunpack.c.l.b16 %v57
  %v196 = vunpack.c.l.b16 %v58
  %v197 = vunpack.c.l.b16 %v59
  %v198 = vpack.c.b16 %v167, %v166
  %v199 = vpack.c.b16 %v169, %v168
  %v200 = vpack.c.b16 %v171, %v170
  %v201 = vpack.c.b16 %v173, %v172
  %v202 = vpack.c.b16 %v175, %v174
  %v203 = vpack.c.b16 %v177, %v176
  %v204 = vpack.c.b16 %v179, %v178
  %v205 = vpack.c.b16 %v181, %v180
  %v206 = vpack.c.b16 %v183, %v182
  %v207 = vpack.c.b16 %v185, %v184
  %v208 = vpack.c.b16 %v187, %v186
  %v209 = vpack.c.b16 %v189, %v188
  %v210 = vpack.c.b16 %v191, %v190
  %v211 = vpack.c.b16 %v193, %v192
  %v212 = vpack.c.b16 %v195, %v194
  %v213 = vpack.c.b16 %v197, %v196
  %230 = vmatprep.subr.bf16.mxu0 0
  %231 = vmatpush1.bf16.msra.mxu0 %v205
  %232 = vmatprep.subr.bf16.mxu0 0
  %233 = vmatpush1.bf16.msra.mxu0 %v204
  %234 = vmatprep.subr.bf16.mxu0 0
  %235 = vmatpush1.bf16.msra.mxu0 %v203
  %236 = vmatprep.subr.bf16.mxu0 0
  %237 = vmatpush1.bf16.msra.mxu0 %v202
  %238 = vmatprep.subr.bf16.mxu0 0
  %239 = vmatpush1.bf16.msra.mxu0 %v201
  %240 = vmatprep.subr.bf16.mxu0 0
  %241 = vmatpush1.bf16.msra.mxu0 %v200
  %242 = vmatprep.subr.bf16.mxu0 0
  %243 = vmatpush1.bf16.msra.mxu0 %v199
  %244 = vmatprep.subr.bf16.mxu0 0
  %245 = vmatpush1.bf16.msra.mxu0 %v198
  %246 = vmatprep.subr.bf16.mxu0 0
  %247 = vmatpush2.bf16.msra.mxu0 %v213
  %248 = vmatprep.subr.bf16.mxu0 0
  %249 = vmatpush2.bf16.msra.mxu0 %v212
  %250 = vmatprep.subr.bf16.mxu0 0
  %251 = vmatpush2.bf16.msra.mxu0 %v211
  %252 = vmatprep.subr.bf16.mxu0 0
  %253 = vmatpush2.bf16.msra.mxu0 %v210
  %254 = vmatprep.subr.bf16.mxu0 0
  %255 = vmatpush2.bf16.msra.mxu0 %v209
  %256 = vmatprep.subr.bf16.mxu0 0
  %257 = vmatpush2.bf16.msra.mxu0 %v208
  %258 = vmatprep.subr.bf16.mxu0 0
  %259 = vmatpush2.bf16.msra.mxu0 %v207
  %260 = vmatprep.subr.bf16.mxu0 0
  %261 = vmatpush2.bf16.msra.mxu0 %v206
  %262 = vmatprep.mubr.bf16.mxu0 %v107
  %263 = vmatmul.mubr.bf16.gmra.mxu0 %v106
  %v264 = vpop.f32.mrf.mxu0
  %v265 = vadd.f32 %v65, %v264
  %v266 = vpop.f32.mrf.mxu0
  %v267 = vpop.f32.mrf.mxu0
  %v268 = vadd.f32 %v65, %v267
  %v269 = vpop.f32.mrf.mxu0
  %270 = vmatprep.mubr.bf16.mxu0 %v109
  %271 = vmatmul.mubr.bf16.gmra.mxu0 %v108
  %v272 = vpop.f32.mrf.mxu0
  %v273 = vadd.f32 %v65, %v272
  %v274 = vpop.f32.mrf.mxu0
  %v275 = vpop.f32.mrf.mxu0
  %v276 = vadd.f32 %v65, %v275
  %v277 = vpop.f32.mrf.mxu0
  %278 = vmatprep.mubr.bf16.mxu0 %v111
  %279 = vmatmul.mubr.bf16.gmra.mxu0 %v110
  %v280 = vpop.f32.mrf.mxu0
  %v281 = vadd.f32 %v65, %v280
  %v282 = vpop.f32.mrf.mxu0
  %v283 = vpop.f32.mrf.mxu0
  %v284 = vadd.f32 %v65, %v283
  %v285 = vpop.f32.mrf.mxu0
  %286 = vmatprep.mubr.bf16.mxu0 %v113
  %287 = vmatmul.mubr.bf16.gmra.mxu0 %v112
  %v288 = vpop.f32.mrf.mxu0
  %v289 = vadd.f32 %v65, %v288
  %v290 = vpop.f32.mrf.mxu0
  %v291 = vpop.f32.mrf.mxu0
  %v292 = vadd.f32 %v65, %v291
  %v293 = vpop.f32.mrf.mxu0
  %294 = vmatprep.mubr.bf16.mxu0 %v115
  %295 = vmatmul.mubr.bf16.gmra.mxu0 %v114
  %v296 = vpop.f32.mrf.mxu0
  %v297 = vadd.f32 %v65, %v296
  %v298 = vpop.f32.mrf.mxu0
  %v299 = vpop.f32.mrf.mxu0
  %v300 = vadd.f32 %v65, %v299
  %v301 = vpop.f32.mrf.mxu0
  %302 = vmatprep.mubr.bf16.mxu0 %v117
  %303 = vmatmul.mubr.bf16.gmra.mxu0 %v116
  %v304 = vpop.f32.mrf.mxu0
  %v305 = vadd.f32 %v65, %v304
  %v306 = vpop.f32.mrf.mxu0
  %v307 = vpop.f32.mrf.mxu0
  %v308 = vadd.f32 %v65, %v307
  %v309 = vpop.f32.mrf.mxu0
  %310 = vmatprep.mubr.bf16.mxu0 %v119
  %311 = vmatmul.mubr.bf16.gmra.mxu0 %v118
  %v312 = vpop.f32.mrf.mxu0
  %v313 = vadd.f32 %v65, %v312
  %v314 = vpop.f32.mrf.mxu0
  %v315 = vpop.f32.mrf.mxu0
  %v316 = vpop.f32.mrf.mxu0
  %317 = vdwg.mxu0
  %vm318 = vcmp.gt.f32.partialorder %v265, 0.0
  %vm319 = vcmp.gt.f32.partialorder %v268, 0.0
  %vm320 = vcmp.gt.f32.partialorder %v273, 0.0
  %vm321 = vcmp.gt.f32.partialorder %v276, 0.0
  %vm322 = vcmp.gt.f32.partialorder %v281, 0.0
  %vm323 = vcmp.gt.f32.partialorder %v284, 0.0
  %vm324 = vcmp.gt.f32.partialorder %v289, 0.0
  %vm325 = vcmp.gt.f32.partialorder %v292, 0.0
  %vm326 = vcmp.gt.f32.partialorder %v297, 0.0
  %vm327 = vcmp.gt.f32.partialorder %v300, 0.0
  %vm328 = vcmp.gt.f32.partialorder %v305, 0.0
  %vm329 = vcmp.gt.f32.partialorder %v308, 0.0
  %vm330 = vcmp.gt.f32.partialorder %v313, 0.0
  %v331 = vmul.f32 %v265, 0.2
  %v332 = vmul.f32 %v268, 0.2
  %v333 = vmul.f32 %v273, 0.2
  %v334 = vmul.f32 %v276, 0.2
  %v335 = vmul.f32 %v281, 0.2
  %v336 = vmul.f32 %v284, 0.2
  %v337 = vmul.f32 %v289, 0.2
  %v338 = vmul.f32 %v292, 0.2
  %v339 = vmul.f32 %v297, 0.2
  %v340 = vmul.f32 %v300, 0.2
  %v341 = vmul.f32 %v305, 0.2
  %v342 = vmul.f32 %v308, 0.2
  %v343 = vmul.f32 %v313, 0.2
  %v344 = vsel %vm318, %v265, %v331
  %v345 = vsel %vm319, %v268, %v332
  %v346 = vsel %vm320, %v273, %v333
  %v347 = vsel %vm321, %v276, %v334
  %v348 = vsel %vm322, %v281, %v335
  %v349 = vsel %vm323, %v284, %v336
  %v350 = vsel %vm324, %v289, %v337
  %v351 = vsel %vm325, %v292, %v338
  %v352 = vsel %vm326, %v297, %v339
  %v353 = vsel %vm327, %v300, %v340
  %v354 = vsel %vm328, %v305, %v341
  %v355 = vsel %vm329, %v308, %v342
  %v356 = vsel %vm330, %v313, %v343
  %357 = vst [vmem:[%s3] sm:$0xff] %v344
  %358 = vst [vmem:[%s3 + $0x8] sm:$0xff] %v345
  %359 = vst [vmem:[%s3 + $0x10] sm:$0xff] %v346
  %360 = vst [vmem:[%s3 + $0x18] sm:$0xff] %v347
  %361 = vst [vmem:[%s3 + $0x20] sm:$0xff] %v348
  %362 = vst [vmem:[%s3 + $0x28] sm:$0xff] %v349
  %363 = vst [vmem:[%s3 + $0x30] sm:$0xff] %v350
  %364 = vst [vmem:[%s3 + $0x38] sm:$0xff] %v351
  %365 = vst [vmem:[%s3 + $0x40] sm:$0xff] %v352
  %366 = vst [vmem:[%s3 + $0x48] sm:$0xff] %v353
  %367 = vst [vmem:[%s3 + $0x50] sm:$0xff] %v354
  %368 = vst [vmem:[%s3 + $0x58] sm:$0xff] %v355
  %369 = vst [vmem:[%s3 + $0x60] sm:$0xff] %v356
  // Predicated region
  $region14: #{network_forward.11} parent=0 // pred_check
    _
  $region15: #{network_forward.11} parent=0 // pred_check_branch
    %371 = sbr.rel (0) target = $region17
  $region16: #{network_forward.11} parent=0 // pred_region
    _
  $region17: #{network_forward.11} parent=0 // pred_fallthru
    _
  // Predicated region
  $region18: #{network_forward.11} parent=0 // pred_check
    _
  $region19: #{network_forward.11} parent=0 // pred_check_branch
    %373 = sbr.rel (0) target = $region21
  $region20: #{network_forward.11} parent=0 // pred_region
    _
  $region21: #{network_forward.11} parent=0 // pred_fallthru
    _

// kernel: network_forward.12
$region0: #{network_forward.12}
  #allocation0 [shape = 'u32[]', space=smem, size = 0x4, offset = 0x4, fixed_abs, tag = 'smem constant byte address 0x4 - core index']
  #allocation1 [shape = 'u32[144,128]{1,0:T(1,128)}', space=vmem, size = 0x12000, scoped, tag = 'internal scratch']
  %s0 = inlined_call_operand.vmem [shape: bf16[24,512], index: 0, kind: input, shape index: {}]
  %s1 = inlined_call_operand.vmem [shape: bf16[512,128], index: 1, kind: input, shape index: {}]
  %s2 = inlined_call_operand.vmem [shape: f32[1,128], index: 2, kind: input, shape index: {}]
  %s3 = inlined_call_operand.vmem [shape: f32[24,128], index: 3, kind: output, shape index: {}]
  %s4 = sld [smem:[#allocation0]]
  $region22: #{network_forward.12} parent=0
    _
  %s6 = ssub.s32 1, %s4
  %s7 = scalar_select 0, %s6, %s4
  // Predicated region
  $region2: #{network_forward.12} parent=0 // pred_check
    _
  $region3: #{network_forward.12} parent=0 // pred_check_branch
    %9 = sbr.rel (0) target = $region5
  $region4: #{network_forward.12} parent=0 // pred_region
    _
  $region5: #{network_forward.12} parent=0 // pred_fallthru
    _
  // Predicated region
  $region6: #{network_forward.12} parent=0 // pred_check
    _
  $region7: #{network_forward.12} parent=0 // pred_check_branch
    %11 = sbr.rel (0) target = $region9
  $region8: #{network_forward.12} parent=0 // pred_region
    _
  $region9: #{network_forward.12} parent=0 // pred_fallthru
    _
  // Predicated region
  $region10: #{network_forward.12} parent=0 // pred_check
    _
  $region11: #{network_forward.12} parent=0 // pred_check_branch
    %13 = sbr.rel (0) target = $region13
  $region12: #{network_forward.12} parent=0 // pred_region
    _
  $region13: #{network_forward.12} parent=0 // pred_fallthru
    _
  %v15 = vld [vmem:[%s0] sm:$0xff]
  %v16 = vld [vmem:[%s0 + $0x8] sm:$0xff]
  %v17 = vld [vmem:[%s0 + $0x10] sm:$0xff]
  %v18 = vld [vmem:[%s0 + $0x18] sm:$0xff]
  %v19 = vld [vmem:[%s0 + $0x20] sm:$0xff]
  %v20 = vld [vmem:[%s0 + $0x28] sm:$0xff]
  %v21 = vld [vmem:[%s1] sm:$0xf]
  %v22 = vld [vmem:[%s1 + $0x4] sm:$0xf]
  %v23 = vld [vmem:[%s1 + $0x8] sm:$0xf]
  %v24 = vld [vmem:[%s1 + $0xc] sm:$0xf]
  %v25 = vld [vmem:[%s1 + $0x10] sm:$0xf]
  %v26 = vld [vmem:[%s1 + $0x14] sm:$0xf]
  %v27 = vld [vmem:[%s1 + $0x18] sm:$0xf]
  %v28 = vld [vmem:[%s1 + $0x1c] sm:$0xf]
  %v29 = vld [vmem:[%s1 + $0x20] sm:$0xf]
  %v30 = vld [vmem:[%s1 + $0x24] sm:$0xf]
  %v31 = vld [vmem:[%s1 + $0x28] sm:$0xf]
  %v32 = vld [vmem:[%s1 + $0x2c] sm:$0xf]
  %v33 = vld [vmem:[%s1 + $0x30] sm:$0xf]
  %v34 = vld [vmem:[%s1 + $0x34] sm:$0xf]
  %v35 = vld [vmem:[%s1 + $0x38] sm:$0xf]
  %v36 = vld [vmem:[%s1 + $0x3c] sm:$0xf]
  %v37 = vld [vmem:[%s1 + $0x40] sm:$0xf]
  %v38 = vld [vmem:[%s1 + $0x44] sm:$0xf]
  %v39 = vld [vmem:[%s1 + $0x48] sm:$0xf]
  %v40 = vld [vmem:[%s1 + $0x4c] sm:$0xf]
  %v41 = vld [vmem:[%s1 + $0x50] sm:$0xf]
  %v42 = vld [vmem:[%s1 + $0x54] sm:$0xf]
  %v43 = vld [vmem:[%s1 + $0x58] sm:$0xf]
  %v44 = vld [vmem:[%s1 + $0x5c] sm:$0xf]
  %v45 = vld [vmem:[%s1 + $0x60] sm:$0xf]
  %v46 = vld [vmem:[%s1 + $0x64] sm:$0xf]
  %v47 = vld [vmem:[%s1 + $0x68] sm:$0xf]
  %v48 = vld [vmem:[%s1 + $0x6c] sm:$0xf]
  %v49 = vld [vmem:[%s1 + $0x70] sm:$0xf]
  %v50 = vld [vmem:[%s1 + $0x74] sm:$0xf]
  %v51 = vld [vmem:[%s1 + $0x78] sm:$0xf]
  %v52 = vld [vmem:[%s1 + $0x7c] sm:$0xf]
  %v53 = vld [vmem:[%s1 + $0x80] sm:$0xf]
  %v54 = vld [vmem:[%s1 + $0x84] sm:$0xf]
  %v55 = vld [vmem:[%s1 + $0x88] sm:$0xf]
  %v56 = vld [vmem:[%s1 + $0x8c] sm:$0xf]
  %v57 = vld [vmem:[%s1 + $0x90] sm:$0xf]
  %v58 = vld [vmem:[%s1 + $0x94] sm:$0xf]
  %v59 = vld [vmem:[%s1 + $0x98] sm:$0xf]
  %v60 = vld [vmem:[%s1 + $0x9c] sm:$0xf]
  %v61 = vld [vmem:[%s1 + $0xa0] sm:$0xf]
  %v62 = vld [vmem:[%s1 + $0xa4] sm:$0xf]
  %v63 = vld [vmem:[%s1 + $0xa8] sm:$0xf]
  %v64 = vld [vmem:[%s1 + $0xac] sm:$0xf]
  %v65 = vld [vmem:[%s1 + $0xb0] sm:$0xf]
  %v66 = vld [vmem:[%s1 + $0xb4] sm:$0xf]
  %v67 = vld [vmem:[%s1 + $0xb8] sm:$0xf]
  %v68 = vld [vmem:[%s1 + $0xbc] sm:$0xf]
  %v69 = vld [vmem:[%s1 + $0xc0] sm:$0xf]
  %v70 = vld [vmem:[%s1 + $0xc4] sm:$0xf]
  %v71 = vld [vmem:[%s1 + $0xc8] sm:$0xf]
  %v72 = vld [vmem:[%s1 + $0xcc] sm:$0xf]
  %v73 = vld [vmem:[%s1 + $0xd0] sm:$0xf]
  %v74 = vld [vmem:[%s1 + $0xd4] sm:$0xf]
  %v75 = vld [vmem:[%s1 + $0xd8] sm:$0xf]
  %v76 = vld [vmem:[%s1 + $0xdc] sm:$0xf]
  %v77 = vld [vmem:[%s1 + $0xe0] sm:$0xf]
  %v78 = vld [vmem:[%s1 + $0xe4] sm:$0xf]
  %v79 = vld [vmem:[%s1 + $0xe8] sm:$0xf]
  %v80 = vld [vmem:[%s1 + $0xec] sm:$0xf]
  %v81 = vld [vmem:[%s1 + $0xf0] sm:$0xf]
  %v82 = vld [vmem:[%s1 + $0xf4] sm:$0xf]
  %v83 = vld [vmem:[%s1 + $0xf8] sm:$0xf]
  %v84 = vld [vmem:[%s1 + $0xfc] sm:$0xf]
  %v85 = vld [vmem:[%s2] sm:$0x1]
  %v87 = vlaneseq
  %v88 = vshrl.u32 %v87, 7
  %v89 = vsub.s32 0, %v88
  %v90 = vrot.slane %v85, %v89
  %v98 = vunpack.c.l.b16 %v15
  %v99 = vunpack.c.h.b16 %v15
  %v100 = vunpack.c.l.b16 %v16
  %v101 = vunpack.c.h.b16 %v16
  %v102 = vunpack.c.l.b16 %v17
  %v103 = vunpack.c.h.b16 %v17
  %v104 = vunpack.c.l.b16 %v18
  %v105 = vunpack.c.h.b16 %v18
  %v106 = vunpack.c.l.b16 %v19
  %v107 = vunpack.c.h.b16 %v19
  %v108 = vunpack.c.l.b16 %v20
  %v109 = vunpack.c.h.b16 %v20
  %v110 = vpack.c.b16 %v102, %v98
  %v111 = vpack.c.b16 %v103, %v99
  %v112 = vpack.c.b16 %v104, %v100
  %v113 = vpack.c.b16 %v105, %v101
  %v114 = vpack.c.b16 %v106, %v106
  %v115 = vpack.c.b16 %v107, %v107
  %v116 = vpack.c.b16 %v108, %v108
  %v117 = vpack.c.b16 %v109, %v109
  %v190 = vunpack.c.l.b16 %v21
  %v191 = vunpack.c.l.b16 %v22
  %v192 = vunpack.c.l.b16 %v23
  %v193 = vunpack.c.l.b16 %v24
  %v194 = vunpack.c.l.b16 %v25
  %v195 = vunpack.c.l.b16 %v26
  %v196 = vunpack.c.l.b16 %v27
  %v197 = vunpack.c.l.b16 %v28
  %v198 = vunpack.c.l.b16 %v29
  %v199 = vunpack.c.l.b16 %v30
  %v200 = vunpack.c.l.b16 %v31
  %v201 = vunpack.c.l.b16 %v32
  %v202 = vunpack.c.l.b16 %v33
  %v203 = vunpack.c.l.b16 %v34
  %v204 = vunpack.c.l.b16 %v35
  %v205 = vunpack.c.l.b16 %v36
  %v206 = vunpack.c.l.b16 %v37
  %v207 = vunpack.c.l.b16 %v38
  %v208 = vunpack.c.l.b16 %v39
  %v209 = vunpack.c.l.b16 %v40
  %v210 = vunpack.c.l.b16 %v41
  %v211 = vunpack.c.l.b16 %v42
  %v212 = vunpack.c.l.b16 %v43
  %v213 = vunpack.c.l.b16 %v44
  %v214 = vunpack.c.l.b16 %v45
  %v215 = vunpack.c.l.b16 %v46
  %v216 = vunpack.c.l.b16 %v47
  %v217 = vunpack.c.l.b16 %v48
  %v218 = vunpack.c.l.b16 %v49
  %v219 = vunpack.c.l.b16 %v50
  %v220 = vunpack.c.l.b16 %v51
  %v221 = vunpack.c.l.b16 %v52
  %v222 = vunpack.c.l.b16 %v53
  %v223 = vunpack.c.l.b16 %v54
  %v224 = vunpack.c.l.b16 %v55
  %v225 = vunpack.c.l.b16 %v56
  %v226 = vunpack.c.l.b16 %v57
  %v227 = vunpack.c.l.b16 %v58
  %v228 = vunpack.c.l.b16 %v59
  %v229 = vunpack.c.l.b16 %v60
  %v230 = vunpack.c.l.b16 %v61
  %v231 = vunpack.c.l.b16 %v62
  %v232 = vunpack.c.l.b16 %v63
  %v233 = vunpack.c.l.b16 %v64
  %v234 = vunpack.c.l.b16 %v65
  %v235 = vunpack.c.l.b16 %v66
  %v236 = vunpack.c.l.b16 %v67
  %v237 = vunpack.c.l.b16 %v68
  %v238 = vunpack.c.l.b16 %v69
  %v239 = vunpack.c.l.b16 %v70
  %v240 = vunpack.c.l.b16 %v71
  %v241 = vunpack.c.l.b16 %v72
  %v242 = vunpack.c.l.b16 %v73
  %v243 = vunpack.c.l.b16 %v74
  %v244 = vunpack.c.l.b16 %v75
  %v245 = vunpack.c.l.b16 %v76
  %v246 = vunpack.c.l.b16 %v77
  %v247 = vunpack.c.l.b16 %v78
  %v248 = vunpack.c.l.b16 %v79
  %v249 = vunpack.c.l.b16 %v80
  %v250 = vunpack.c.l.b16 %v81
  %v251 = vunpack.c.l.b16 %v82
  %v252 = vunpack.c.l.b16 %v83
  %v253 = vunpack.c.l.b16 %v84
  %v254 = vpack.c.b16 %v191, %v190
  %v255 = vpack.c.b16 %v193, %v192
  %v256 = vpack.c.b16 %v195, %v194
  %v257 = vpack.c.b16 %v197, %v196
  %v258 = vpack.c.b16 %v199, %v198
  %v259 = vpack.c.b16 %v201, %v200
  %v260 = vpack.c.b16 %v203, %v202
  %v261 = vpack.c.b16 %v205, %v204
  %v262 = vpack.c.b16 %v207, %v206
  %v263 = vpack.c.b16 %v209, %v208
  %v264 = vpack.c.b16 %v211, %v210
  %v265 = vpack.c.b16 %v213, %v212
  %v266 = vpack.c.b16 %v215, %v214
  %v267 = vpack.c.b16 %v217, %v216
  %v268 = vpack.c.b16 %v219, %v218
  %v269 = vpack.c.b16 %v221, %v220
  %v270 = vpack.c.b16 %v223, %v222
  %v271 = vpack.c.b16 %v225, %v224
  %v272 = vpack.c.b16 %v227, %v226
  %v273 = vpack.c.b16 %v229, %v228
  %v274 = vpack.c.b16 %v231, %v230
  %v275 = vpack.c.b16 %v233, %v232
  %v276 = vpack.c.b16 %v235, %v234
  %v277 = vpack.c.b16 %v237, %v236
  %v278 = vpack.c.b16 %v239, %v238
  %v279 = vpack.c.b16 %v241, %v240
  %v280 = vpack.c.b16 %v243, %v242
  %v281 = vpack.c.b16 %v245, %v244
  %v282 = vpack.c.b16 %v247, %v246
  %v283 = vpack.c.b16 %v249, %v248
  %v284 = vpack.c.b16 %v251, %v250
  %v285 = vpack.c.b16 %v253, %v252
  %318 = vmatprep.subr.bf16.mxu0 0
  %319 = vmatpush1.bf16.msra.mxu0 %v261
  %320 = vmatprep.subr.bf16.mxu0 0
  %321 = vmatpush1.bf16.msra.mxu0 %v260
  %322 = vmatprep.subr.bf16.mxu0 0
  %323 = vmatpush1.bf16.msra.mxu0 %v259
  %324 = vmatprep.subr.bf16.mxu0 0
  %325 = vmatpush1.bf16.msra.mxu0 %v258
  %326 = vmatprep.subr.bf16.mxu0 0
  %327 = vmatpush1.bf16.msra.mxu0 %v257
  %328 = vmatprep.subr.bf16.mxu0 0
  %329 = vmatpush1.bf16.msra.mxu0 %v256
  %330 = vmatprep.subr.bf16.mxu0 0
  %331 = vmatpush1.bf16.msra.mxu0 %v255
  %332 = vmatprep.subr.bf16.mxu0 0
  %333 = vmatpush1.bf16.msra.mxu0 %v254
  %334 = vmatprep.subr.bf16.mxu0 0
  %335 = vmatpush2.bf16.msra.mxu0 %v269
  %336 = vmatprep.subr.bf16.mxu0 0
  %337 = vmatpush2.bf16.msra.mxu0 %v268
  %338 = vmatprep.subr.bf16.mxu0 0
  %339 = vmatpush2.bf16.msra.mxu0 %v267
  %340 = vmatprep.subr.bf16.mxu0 0
  %341 = vmatpush2.bf16.msra.mxu0 %v266
  %342 = vmatprep.subr.bf16.mxu0 0
  %343 = vmatpush2.bf16.msra.mxu0 %v265
  %344 = vmatprep.subr.bf16.mxu0 0
  %345 = vmatpush2.bf16.msra.mxu0 %v264
  %346 = vmatprep.subr.bf16.mxu0 0
  %347 = vmatpush2.bf16.msra.mxu0 %v263
  %348 = vmatprep.subr.bf16.mxu0 0
  %349 = vmatpush2.bf16.msra.mxu0 %v262
  %350 = vmatprep.mubr.bf16.mxu0 %v111
  %351 = vmatmul.mubr.bf16.gmra.mxu0 %v110
  %v352 = vpop.f32.mrf.mxu0
  %v353 = vadd.f32 %v90, %v352
  %v354 = vpop.f32.mrf.mxu0
  %v355 = vpop.f32.mrf.mxu0
  %v356 = vadd.f32 %v90, %v355
  %v357 = vpop.f32.mrf.mxu0
  %358 = vmatprep.mubr.bf16.mxu0 %v115
  %359 = vmatmul.mubr.bf16.gmra.mxu0 %v114
  %v360 = vpop.f32.mrf.mxu0
  %v361 = vadd.f32 %v90, %v360
  %v362 = vpop.f32.mrf.mxu0
  %v363 = vpop.f32.mrf.mxu0
  %v364 = vpop.f32.mrf.mxu0
  %365 = vdwg.mxu0
  %366 = vmatprep.subr.bf16.mxu0 0
  %367 = vmatpush1.bf16.msra.mxu0 %v277
  %368 = vmatprep.subr.bf16.mxu0 0
  %369 = vmatpush1.bf16.msra.mxu0 %v276
  %370 = vmatprep.subr.bf16.mxu0 0
  %371 = vmatpush1.bf16.msra.mxu0 %v275
  %372 = vmatprep.subr.bf16.mxu0 0
  %373 = vmatpush1.bf16.msra.mxu0 %v274
  %374 = vmatprep.subr.bf16.mxu0 0
  %375 = vmatpush1.bf16.msra.mxu0 %v273
  %376 = vmatprep.subr.bf16.mxu0 0
  %377 = vmatpush1.bf16.msra.mxu0 %v272
  %378 = vmatprep.subr.bf16.mxu0 0
  %379 = vmatpush1.bf16.msra.mxu0 %v271
  %380 = vmatprep.subr.bf16.mxu0 0
  %381 = vmatpush1.bf16.msra.mxu0 %v270
  %382 = vmatprep.subr.bf16.mxu0 0
  %383 = vmatpush2.bf16.msra.mxu0 %v285
  %384 = vmatprep.subr.bf16.mxu0 0
  %385 = vmatpush2.bf16.msra.mxu0 %v284
  %386 = vmatprep.subr.bf16.mxu0 0
  %387 = vmatpush2.bf16.msra.mxu0 %v283
  %388 = vmatprep.subr.bf16.mxu0 0
  %389 = vmatpush2.bf16.msra.mxu0 %v282
  %390 = vmatprep.subr.bf16.mxu0 0
  %391 = vmatpush2.bf16.msra.mxu0 %v281
  %392 = vmatprep.subr.bf16.mxu0 0
  %393 = vmatpush2.bf16.msra.mxu0 %v280
  %394 = vmatprep.subr.bf16.mxu0 0
  %395 = vmatpush2.bf16.msra.mxu0 %v279
  %396 = vmatprep.subr.bf16.mxu0 0
  %397 = vmatpush2.bf16.msra.mxu0 %v278
  %398 = vmatprep.mubr.bf16.mxu0 %v113
  %399 = vmatmul.mubr.bf16.gmra.mxu0 %v112
  %v400 = vpop.f32.mrf.mxu0
  %v401 = vadd.f32 %v353, %v400
  %v402 = vpop.f32.mrf.mxu0
  %v403 = vpop.f32.mrf.mxu0
  %v404 = vadd.f32 %v356, %v403
  %v405 = vpop.f32.mrf.mxu0
  %406 = vmatprep.mubr.bf16.mxu0 %v117
  %407 = vmatmul.mubr.bf16.gmra.mxu0 %v116
  %v408 = vpop.f32.mrf.mxu0
  %v409 = vadd.f32 %v361, %v408
  %v410 = vpop.f32.mrf.mxu0
  %v411 = vpop.f32.mrf.mxu0
  %v412 = vpop.f32.mrf.mxu0
  %413 = vdwg.mxu0
  %vm414 = vcmp.gt.f32.partialorder %v401, 0.0
  %vm415 = vcmp.gt.f32.partialorder %v404, 0.0
  %vm416 = vcmp.gt.f32.partialorder %v409, 0.0
  %v417 = vmul.f32 %v401, 0.2
  %v418 = vmul.f32 %v404, 0.2
  %v419 = vmul.f32 %v409, 0.2
  %v420 = vsel %vm414, %v401, %v417
  %v421 = vsel %vm415, %v404, %v418
  %v422 = vsel %vm416, %v409, %v419
  %423 = vst [vmem:[%s3] sm:$0xff] %v420
  %424 = vst [vmem:[%s3 + $0x8] sm:$0xff] %v421
  %425 = vst [vmem:[%s3 + $0x10] sm:$0xff] %v422
  // Predicated region
  $region14: #{network_forward.12} parent=0 // pred_check
    _
  $region15: #{network_forward.12} parent=0 // pred_check_branch
    %427 = sbr.rel (0) target = $region17
  $region16: #{network_forward.12} parent=0 // pred_region
    _
  $region17: #{network_forward.12} parent=0 // pred_fallthru
    _
  // Predicated region
  $region18: #{network_forward.12} parent=0 // pred_check
    _
  $region19: #{network_forward.12} parent=0 // pred_check_branch
    %429 = sbr.rel (0) target = $region21
  $region20: #{network_forward.12} parent=0 // pred_region
    _
  $region21: #{network_forward.12} parent=0 // pred_fallthru
    _

// kernel: network_forward.15
$region0: #{network_forward.15}
  #allocation0 [shape = 'u32[]', space=smem, size = 0x4, offset = 0x4, fixed_abs, tag = 'smem constant byte address 0x4 - core index']
  #allocation1 [shape = 'u32[144,128]{1,0:T(1,128)}', space=vmem, size = 0x12000, scoped, tag = 'internal scratch']
  %s0 = inlined_call_operand.vmem [shape: bf16[8,32], index: 0, kind: input, shape index: {}]
  %s1 = inlined_call_operand.vmem [shape: bf16[32,512], index: 1, kind: input, shape index: {}]
  %s2 = inlined_call_operand.vmem [shape: f32[1,512], index: 2, kind: input, shape index: {}]
  %s3 = inlined_call_operand.vmem [shape: f32[8,512], index: 3, kind: output, shape index: {}]
  %s4 = sld [smem:[#allocation0]]
  $region22: #{network_forward.15} parent=0
    _
  %s6 = ssub.s32 1, %s4
  %s7 = scalar_select 0, %s6, %s4
  // Predicated region
  $region2: #{network_forward.15} parent=0 // pred_check
    _
  $region3: #{network_forward.15} parent=0 // pred_check_branch
    %9 = sbr.rel (0) target = $region5
  $region4: #{network_forward.15} parent=0 // pred_region
    _
  $region5: #{network_forward.15} parent=0 // pred_fallthru
    _
  // Predicated region
  $region6: #{network_forward.15} parent=0 // pred_check
    _
  $region7: #{network_forward.15} parent=0 // pred_check_branch
    %11 = sbr.rel (0) target = $region9
  $region8: #{network_forward.15} parent=0 // pred_region
    _
  $region9: #{network_forward.15} parent=0 // pred_fallthru
    _
  // Predicated region
  $region10: #{network_forward.15} parent=0 // pred_check
    _
  $region11: #{network_forward.15} parent=0 // pred_check_branch
    %13 = sbr.rel (0) target = $region13
  $region12: #{network_forward.15} parent=0 // pred_region
    _
  $region13: #{network_forward.15} parent=0 // pred_fallthru
    _
  %v15 = vld [vmem:[%s0] sm:$0xf]
  %v16 = vld [vmem:[%s1] sm:$0xff]
  %v17 = vld [vmem:[%s1 + $0x8] sm:$0xff]
  %v18 = vld [vmem:[%s1 + $0x10] sm:$0xff]
  %v19 = vld [vmem:[%s1 + $0x18] sm:$0xff]
  %v20 = vld [vmem:[%s1 + $0x20] sm:$0xff]
  %v21 = vld [vmem:[%s1 + $0x28] sm:$0xff]
  %v22 = vld [vmem:[%s1 + $0x30] sm:$0xff]
  %v23 = vld [vmem:[%s1 + $0x38] sm:$0xff]
  %v24 = vld [vmem:[%s2] sm:$0xf]
  %v26 = vlaneseq
  %v27 = vshrl.u32 %v26, 7
  %v28 = vsub.s32 0, %v27
  %v29 = vrot.slane %v24, %v28
  %v30 = vlaneseq
  %v31 = vshrl.u32 %v30, 7
  %v32 = vsub.s32 1, %v31
  %v33 = vrot.slane %v24, %v32
  %v34 = vlaneseq
  %v35 = vshrl.u32 %v34, 7
  %v36 = vsub.s32 2, %v35
  %v37 = vrot.slane %v24, %v36
  %v38 = vlaneseq
  %v39 = vshrl.u32 %v38, 7
  %v40 = vsub.s32 3, %v39
  %v41 = vrot.slane %v24, %v40
  %v54 = vunpack.c.l.b16 %v16
  %v55 = vunpack.c.h.b16 %v16
  %v56 = vunpack.c.l.b16 %v17
  %v57 = vunpack.c.h.b16 %v17
  %v58 = vunpack.c.l.b16 %v18
  %v59 = vunpack.c.h.b16 %v18
  %v60 = vunpack.c.l.b16 %v19
  %v61 = vunpack.c.h.b16 %v19
  %v62 = vunpack.c.l.b16 %v20
  %v63 = vunpack.c.h.b16 %v20
  %v64 = vunpack.c.l.b16 %v21
  %v65 = vunpack.c.h.b16 %v21
  %v66 = vunpack.c.l.b16 %v22
  %v67 = vunpack.c.h.b16 %v22
  %v68 = vunpack.c.l.b16 %v23
  %v69 = vunpack.c.h.b16 %v23
  %v70 = vpack.c.b16 %v58, %v54
  %v71 = vpack.c.b16 %v59, %v55
  %v72 = vpack.c.b16 %v60, %v56
  %v73 = vpack.c.b16 %v61, %v57
  %v74 = vpack.c.b16 %v66, %v62
  %v75 = vpack.c.b16 %v67, %v63
  %v76 = vpack.c.b16 %v68, %v64
  %v77 = vpack.c.b16 %v69, %v65
  %vm86 = vcmask 261120
  %v88 = vsel %vm86, %v15, 0
  %90 = vmatprep.subr.bf16.mxu0 0
  %91 = vmatpush1.bf16.msra.mxu0 0
  %92 = vmatprep.subr.bf16.mxu0 0
  %93 = vmatpush1.bf16.msra.mxu0 0
  %94 = vmatprep.subr.bf16.mxu0 0
  %95 = vmatpush1.bf16.msra.mxu0 0
  %96 = vmatprep.subr.bf16.mxu0 0
  %97 = vmatpush1.bf16.msra.mxu0 0
  %98 = vmatprep.subr.bf16.mxu0 0
  %99 = vmatpush1.bf16.msra.mxu0 0
  %100 = vmatprep.subr.bf16.mxu0 0
  %101 = vmatpush1.bf16.msra.mxu0 0
  %102 = vmatprep.subr.bf16.mxu0 %v75
  %103 = vmatpush1.bf16.msra.mxu0 %v74
  %104 = vmatprep.subr.bf16.mxu0 %v71
  %105 = vmatpush1.bf16.msra.mxu0 %v70
  %106 = vmatprep.subr.bf16.mxu0 0
  %107 = vmatpush2.bf16.msra.mxu0 0
  %108 = vmatprep.subr.bf16.mxu0 0
  %109 = vmatpush2.bf16.msra.mxu0 0
  %110 = vmatprep.subr.bf16.mxu0 0
  %111 = vmatpush2.bf16.msra.mxu0 0
  %112 = vmatprep.subr.bf16.mxu0 0
  %113 = vmatpush2.bf16.msra.mxu0 0
  %114 = vmatprep.subr.bf16.mxu0 0
  %115 = vmatpush2.bf16.msra.mxu0 0
  %116 = vmatprep.subr.bf16.mxu0 0
  %117 = vmatpush2.bf16.msra.mxu0 0
  %118 = vmatprep.subr.bf16.mxu0 0
  %119 = vmatpush2.bf16.msra.mxu0 0
  %120 = vmatprep.subr.bf16.mxu0 0
  %121 = vmatpush2.bf16.msra.mxu0 0
  %122 = vmatprep.mubr.bf16.mxu0 0
  %123 = vmatmul.mubr.bf16.gmra.mxu0 %v88
  %v124 = vpop.f32.mrf.mxu0
  %v125 = vadd.f32 %v29, %v124
  %v126 = vpop.f32.mrf.mxu0
  %v127 = vadd.f32 %v33, %v126
  %v128 = vpop.f32.mrf.mxu0
  %v129 = vpop.f32.mrf.mxu0
  %130 = vdwg.mxu0
  %131 = vmatprep.subr.bf16.mxu0 0
  %132 = vmatpush1.bf16.msra.mxu0 0
  %133 = vmatprep.subr.bf16.mxu0 0
  %134 = vmatpush1.bf16.msra.mxu0 0
  %135 = vmatprep.subr.bf16.mxu0 0
  %136 = vmatpush1.bf16.msra.mxu0 0
  %137 = vmatprep.subr.bf16.mxu0 0
  %138 = vmatpush1.bf16.msra.mxu0 0
  %139 = vmatprep.subr.bf16.mxu0 0
  %140 = vmatpush1.bf16.msra.mxu0 0
  %141 = vmatprep.subr.bf16.mxu0 0
  %142 = vmatpush1.bf16.msra.mxu0 0
  %143 = vmatprep.subr.bf16.mxu0 %v77
  %144 = vmatpush1.bf16.msra.mxu0 %v76
  %145 = vmatprep.subr.bf16.mxu0 %v73
  %146 = vmatpush1.bf16.msra.mxu0 %v72
  %147 = vmatprep.subr.bf16.mxu0 0
  %148 = vmatpush2.bf16.msra.mxu0 0
  %149 = vmatprep.subr.bf16.mxu0 0
  %150 = vmatpush2.bf16.msra.mxu0 0
  %151 = vmatprep.subr.bf16.mxu0 0
  %152 = vmatpush2.bf16.msra.mxu0 0
  %153 = vmatprep.subr.bf16.mxu0 0
  %154 = vmatpush2.bf16.msra.mxu0 0
  %155 = vmatprep.subr.bf16.mxu0 0
  %156 = vmatpush2.bf16.msra.mxu0 0
  %157 = vmatprep.subr.bf16.mxu0 0
  %158 = vmatpush2.bf16.msra.mxu0 0
  %159 = vmatprep.subr.bf16.mxu0 0
  %160 = vmatpush2.bf16.msra.mxu0 0
  %161 = vmatprep.subr.bf16.mxu0 0
  %162 = vmatpush2.bf16.msra.mxu0 0
  %163 = vmatprep.mubr.bf16.mxu0 0
  %164 = vmatmul.mubr.bf16.gmra.mxu0 %v88
  %v165 = vpop.f32.mrf.mxu0
  %v166 = vadd.f32 %v37, %v165
  %v167 = vpop.f32.mrf.mxu0
  %v168 = vadd.f32 %v41, %v167
  %v169 = vpop.f32.mrf.mxu0
  %v170 = vpop.f32.mrf.mxu0
  %171 = vdwg.mxu0
  %v172 = vmax.f32 %v125, 0.0
  %v173 = vmax.f32 %v127, 0.0
  %v174 = vmax.f32 %v166, 0.0
  %v175 = vmax.f32 %v168, 0.0
  %176 = vst [vmem:[%s3] sm:$0xff] %v172
  %177 = vst [vmem:[%s3 + $0x8] sm:$0xff] %v173
  %178 = vst [vmem:[%s3 + $0x10] sm:$0xff] %v174
  %179 = vst [vmem:[%s3 + $0x18] sm:$0xff] %v175
  // Predicated region
  $region14: #{network_forward.15} parent=0 // pred_check
    _
  $region15: #{network_forward.15} parent=0 // pred_check_branch
    %181 = sbr.rel (0) target = $region17
  $region16: #{network_forward.15} parent=0 // pred_region
    _
  $region17: #{network_forward.15} parent=0 // pred_fallthru
    _
  // Predicated region
  $region18: #{network_forward.15} parent=0 // pred_check
    _
  $region19: #{network_forward.15} parent=0 // pred_check_branch
    %183 = sbr.rel (0) target = $region21
  $region20: #{network_forward.15} parent=0 // pred_region
    _
  $region21: #{network_forward.15} parent=0 // pred_fallthru
    _

// kernel: network_forward.13
$region0: #{network_forward.13}
  #allocation0 [shape = 'u32[]', space=smem, size = 0x4, offset = 0x4, fixed_abs, tag = 'smem constant byte address 0x4 - core index']
  #allocation1 [shape = 'u32[144,128]{1,0:T(1,128)}', space=vmem, size = 0x12000, scoped, tag = 'internal scratch']
  %s0 = inlined_call_operand.vmem [shape: bf16[8,576], index: 0, kind: input, shape index: {}]
  %s1 = inlined_call_operand.vmem [shape: bf16[576,128], index: 1, kind: input, shape index: {}]
  %s2 = inlined_call_operand.vmem [shape: f32[1,128], index: 2, kind: input, shape index: {}]
  %s3 = inlined_call_operand.vmem [shape: f32[8,128], index: 3, kind: output, shape index: {}]
  %s4 = sld [smem:[#allocation0]]
  $region22: #{network_forward.13} parent=0
    _
  %s6 = ssub.s32 1, %s4
  %s7 = scalar_select 0, %s6, %s4
  // Predicated region
  $region2: #{network_forward.13} parent=0 // pred_check
    _
  $region3: #{network_forward.13} parent=0 // pred_check_branch
    %9 = sbr.rel (0) target = $region5
  $region4: #{network_forward.13} parent=0 // pred_region
    _
  $region5: #{network_forward.13} parent=0 // pred_fallthru
    _
  // Predicated region
  $region6: #{network_forward.13} parent=0 // pred_check
    _
  $region7: #{network_forward.13} parent=0 // pred_check_branch
    %11 = sbr.rel (0) target = $region9
  $region8: #{network_forward.13} parent=0 // pred_region
    _
  $region9: #{network_forward.13} parent=0 // pred_fallthru
    _
  // Predicated region
  $region10: #{network_forward.13} parent=0 // pred_check
    _
  $region11: #{network_forward.13} parent=0 // pred_check_branch
    %13 = sbr.rel (0) target = $region13
  $region12: #{network_forward.13} parent=0 // pred_region
    _
  $region13: #{network_forward.13} parent=0 // pred_fallthru
    _
  %v15 = vld [vmem:[%s0] sm:$0xff]
  %v16 = vld [vmem:[%s0 + $0x8] sm:$0xff]
  %v17 = vld [vmem:[%s0 + $0x10] sm:$0xf]
  %v18 = vld [vmem:[%s1] sm:$0xf]
  %v19 = vld [vmem:[%s1 + $0x4] sm:$0xf]
  %v20 = vld [vmem:[%s1 + $0x8] sm:$0xf]
  %v21 = vld [vmem:[%s1 + $0xc] sm:$0xf]
  %v22 = vld [vmem:[%s1 + $0x10] sm:$0xf]
  %v23 = vld [vmem:[%s1 + $0x14] sm:$0xf]
  %v24 = vld [vmem:[%s1 + $0x18] sm:$0xf]
  %v25 = vld [vmem:[%s1 + $0x1c] sm:$0xf]
  %v26 = vld [vmem:[%s1 + $0x20] sm:$0xf]
  %v27 = vld [vmem:[%s1 + $0x24] sm:$0xf]
  %v28 = vld [vmem:[%s1 + $0x28] sm:$0xf]
  %v29 = vld [vmem:[%s1 + $0x2c] sm:$0xf]
  %v30 = vld [vmem:[%s1 + $0x30] sm:$0xf]
  %v31 = vld [vmem:[%s1 + $0x34] sm:$0xf]
  %v32 = vld [vmem:[%s1 + $0x38] sm:$0xf]
  %v33 = vld [vmem:[%s1 + $0x3c] sm:$0xf]
  %v34 = vld [vmem:[%s1 + $0x40] sm:$0xf]
  %v35 = vld [vmem:[%s1 + $0x44] sm:$0xf]
  %v36 = vld [vmem:[%s1 + $0x48] sm:$0xf]
  %v37 = vld [vmem:[%s1 + $0x4c] sm:$0xf]
  %v38 = vld [vmem:[%s1 + $0x50] sm:$0xf]
  %v39 = vld [vmem:[%s1 + $0x54] sm:$0xf]
  %v40 = vld [vmem:[%s1 + $0x58] sm:$0xf]
  %v41 = vld [vmem:[%s1 + $0x5c] sm:$0xf]
  %v42 = vld [vmem:[%s1 + $0x60] sm:$0xf]
  %v43 = vld [vmem:[%s1 + $0x64] sm:$0xf]
  %v44 = vld [vmem:[%s1 + $0x68] sm:$0xf]
  %v45 = vld [vmem:[%s1 + $0x6c] sm:$0xf]
  %v46 = vld [vmem:[%s1 + $0x70] sm:$0xf]
  %v47 = vld [vmem:[%s1 + $0x74] sm:$0xf]
  %v48 = vld [vmem:[%s1 + $0x78] sm:$0xf]
  %v49 = vld [vmem:[%s1 + $0x7c] sm:$0xf]
  %v50 = vld [vmem:[%s1 + $0x80] sm:$0xf]
  %v51 = vld [vmem:[%s1 + $0x84] sm:$0xf]
  %v52 = vld [vmem:[%s1 + $0x88] sm:$0xf]
  %v53 = vld [vmem:[%s1 + $0x8c] sm:$0xf]
  %v54 = vld [vmem:[%s1 + $0x90] sm:$0xf]
  %v55 = vld [vmem:[%s1 + $0x94] sm:$0xf]
  %v56 = vld [vmem:[%s1 + $0x98] sm:$0xf]
  %v57 = vld [vmem:[%s1 + $0x9c] sm:$0xf]
  %v58 = vld [vmem:[%s1 + $0xa0] sm:$0xf]
  %v59 = vld [vmem:[%s1 + $0xa4] sm:$0xf]
  %v60 = vld [vmem:[%s1 + $0xa8] sm:$0xf]
  %v61 = vld [vmem:[%s1 + $0xac] sm:$0xf]
  %v62 = vld [vmem:[%s1 + $0xb0] sm:$0xf]
  %v63 = vld [vmem:[%s1 + $0xb4] sm:$0xf]
  %v64 = vld [vmem:[%s1 + $0xb8] sm:$0xf]
  %v65 = vld [vmem:[%s1 + $0xbc] sm:$0xf]
  %v66 = vld [vmem:[%s1 + $0xc0] sm:$0xf]
  %v67 = vld [vmem:[%s1 + $0xc4] sm:$0xf]
  %v68 = vld [vmem:[%s1 + $0xc8] sm:$0xf]
  %v69 = vld [vmem:[%s1 + $0xcc] sm:$0xf]
  %v70 = vld [vmem:[%s1 + $0xd0] sm:$0xf]
  %v71 = vld [vmem:[%s1 + $0xd4] sm:$0xf]
  %v72 = vld [vmem:[%s1 + $0xd8] sm:$0xf]
  %v73 = vld [vmem:[%s1 + $0xdc] sm:$0xf]
  %v74 = vld [vmem:[%s1 + $0xe0] sm:$0xf]
  %v75 = vld [vmem:[%s1 + $0xe4] sm:$0xf]
  %v76 = vld [vmem:[%s1 + $0xe8] sm:$0xf]
  %v77 = vld [vmem:[%s1 + $0xec] sm:$0xf]
  %v78 = vld [vmem:[%s1 + $0xf0] sm:$0xf]
  %v79 = vld [vmem:[%s1 + $0xf4] sm:$0xf]
  %v80 = vld [vmem:[%s1 + $0xf8] sm:$0xf]
  %v81 = vld [vmem:[%s1 + $0xfc] sm:$0xf]
  %v82 = vld [vmem:[%s1 + $0x100] sm:$0xf]
  %v83 = vld [vmem:[%s1 + $0x104] sm:$0xf]
  %v84 = vld [vmem:[%s1 + $0x108] sm:$0xf]
  %v85 = vld [vmem:[%s1 + $0x10c] sm:$0xf]
  %v86 = vld [vmem:[%s1 + $0x110] sm:$0xf]
  %v87 = vld [vmem:[%s1 + $0x114] sm:$0xf]
  %v88 = vld [vmem:[%s1 + $0x118] sm:$0xf]
  %v89 = vld [vmem:[%s1 + $0x11c] sm:$0xf]
  %v90 = vld [vmem:[%s2] sm:$0x1]
  %v92 = vlaneseq
  %v93 = vshrl.u32 %v92, 7
  %v94 = vsub.s32 0, %v93
  %v95 = vrot.slane %v90, %v94
  %v100 = vunpack.c.l.b16 %v15
  %v101 = vunpack.c.h.b16 %v15
  %v102 = vunpack.c.l.b16 %v16
  %v103 = vunpack.c.h.b16 %v16
  %v104 = vunpack.c.l.b16 %v17
  %v105 = vpack.c.b16 %v100, %v100
  %v106 = vpack.c.b16 %v101, %v101
  %v107 = vpack.c.b16 %v102, %v102
  %v108 = vpack.c.b16 %v103, %v103
  %v109 = vpack.c.b16 %v104, %v104
  %v186 = vunpack.c.l.b16 %v18
  %v187 = vunpack.c.l.b16 %v19
  %v188 = vunpack.c.l.b16 %v20
  %v189 = vunpack.c.l.b16 %v21
  %v190 = vunpack.c.l.b16 %v22
  %v191 = vunpack.c.l.b16 %v23
  %v192 = vunpack.c.l.b16 %v24
  %v193 = vunpack.c.l.b16 %v25
  %v194 = vunpack.c.l.b16 %v26
  %v195 = vunpack.c.l.b16 %v27
  %v196 = vunpack.c.l.b16 %v28
  %v197 = vunpack.c.l.b16 %v29
  %v198 = vunpack.c.l.b16 %v30
  %v199 = vunpack.c.l.b16 %v31
  %v200 = vunpack.c.l.b16 %v32
  %v201 = vunpack.c.l.b16 %v33
  %v202 = vunpack.c.l.b16 %v34
  %v203 = vunpack.c.l.b16 %v35
  %v204 = vunpack.c.l.b16 %v36
  %v205 = vunpack.c.l.b16 %v37
  %v206 = vunpack.c.l.b16 %v38
  %v207 = vunpack.c.l.b16 %v39
  %v208 = vunpack.c.l.b16 %v40
  %v209 = vunpack.c.l.b16 %v41
  %v210 = vunpack.c.l.b16 %v42
  %v211 = vunpack.c.l.b16 %v43
  %v212 = vunpack.c.l.b16 %v44
  %v213 = vunpack.c.l.b16 %v45
  %v214 = vunpack.c.l.b16 %v46
  %v215 = vunpack.c.l.b16 %v47
  %v216 = vunpack.c.l.b16 %v48
  %v217 = vunpack.c.l.b16 %v49
  %v218 = vunpack.c.l.b16 %v50
  %v219 = vunpack.c.l.b16 %v51
  %v220 = vunpack.c.l.b16 %v52
  %v221 = vunpack.c.l.b16 %v53
  %v222 = vunpack.c.l.b16 %v54
  %v223 = vunpack.c.l.b16 %v55
  %v224 = vunpack.c.l.b16 %v56
  %v225 = vunpack.c.l.b16 %v57
  %v226 = vunpack.c.l.b16 %v58
  %v227 = vunpack.c.l.b16 %v59
  %v228 = vunpack.c.l.b16 %v60
  %v229 = vunpack.c.l.b16 %v61
  %v230 = vunpack.c.l.b16 %v62
  %v231 = vunpack.c.l.b16 %v63
  %v232 = vunpack.c.l.b16 %v64
  %v233 = vunpack.c.l.b16 %v65
  %v234 = vunpack.c.l.b16 %v66
  %v235 = vunpack.c.l.b16 %v67
  %v236 = vunpack.c.l.b16 %v68
  %v237 = vunpack.c.l.b16 %v69
  %v238 = vunpack.c.l.b16 %v70
  %v239 = vunpack.c.l.b16 %v71
  %v240 = vunpack.c.l.b16 %v72
  %v241 = vunpack.c.l.b16 %v73
  %v242 = vunpack.c.l.b16 %v74
  %v243 = vunpack.c.l.b16 %v75
  %v244 = vunpack.c.l.b16 %v76
  %v245 = vunpack.c.l.b16 %v77
  %v246 = vunpack.c.l.b16 %v78
  %v247 = vunpack.c.l.b16 %v79
  %v248 = vunpack.c.l.b16 %v80
  %v249 = vunpack.c.l.b16 %v81
  %v250 = vunpack.c.l.b16 %v82
  %v251 = vunpack.c.l.b16 %v83
  %v252 = vunpack.c.l.b16 %v84
  %v253 = vunpack.c.l.b16 %v85
  %v254 = vunpack.c.l.b16 %v86
  %v255 = vunpack.c.l.b16 %v87
  %v256 = vunpack.c.l.b16 %v88
  %v257 = vunpack.c.l.b16 %v89
  %v258 = vpack.c.b16 %v187, %v186
  %v259 = vpack.c.b16 %v189, %v188
  %v260 = vpack.c.b16 %v191, %v190
  %v261 = vpack.c.b16 %v193, %v192
  %v262 = vpack.c.b16 %v195, %v194
  %v263 = vpack.c.b16 %v197, %v196
  %v264 = vpack.c.b16 %v199, %v198
  %v265 = vpack.c.b16 %v201, %v200
  %v266 = vpack.c.b16 %v203, %v202
  %v267 = vpack.c.b16 %v205, %v204
  %v268 = vpack.c.b16 %v207, %v206
  %v269 = vpack.c.b16 %v209, %v208
  %v270 = vpack.c.b16 %v211, %v210
  %v271 = vpack.c.b16 %v213, %v212
  %v272 = vpack.c.b16 %v215, %v214
  %v273 = vpack.c.b16 %v217, %v216
  %v274 = vpack.c.b16 %v219, %v218
  %v275 = vpack.c.b16 %v221, %v220
  %v276 = vpack.c.b16 %v223, %v222
  %v277 = vpack.c.b16 %v225, %v224
  %v278 = vpack.c.b16 %v227, %v226
  %v279 = vpack.c.b16 %v229, %v228
  %v280 = vpack.c.b16 %v231, %v230
  %v281 = vpack.c.b16 %v233, %v232
  %v282 = vpack.c.b16 %v235, %v234
  %v283 = vpack.c.b16 %v237, %v236
  %v284 = vpack.c.b16 %v239, %v238
  %v285 = vpack.c.b16 %v241, %v240
  %v286 = vpack.c.b16 %v243, %v242
  %v287 = vpack.c.b16 %v245, %v244
  %v288 = vpack.c.b16 %v247, %v246
  %v289 = vpack.c.b16 %v249, %v248
  %v290 = vpack.c.b16 %v251, %v250
  %v291 = vpack.c.b16 %v253, %v252
  %v292 = vpack.c.b16 %v255, %v254
  %v293 = vpack.c.b16 %v257, %v256
  %vm330 = vcmask 523264
  %v332 = vsel %vm330, %v109, 0
  %334 = vmatprep.subr.bf16.mxu0 0
  %335 = vmatpush1.bf16.msra.mxu0 %v265
  %336 = vmatprep.subr.bf16.mxu0 0
  %337 = vmatpush1.bf16.msra.mxu0 %v264
  %338 = vmatprep.subr.bf16.mxu0 0
  %339 = vmatpush1.bf16.msra.mxu0 %v263
  %340 = vmatprep.subr.bf16.mxu0 0
  %341 = vmatpush1.bf16.msra.mxu0 %v262
  %342 = vmatprep.subr.bf16.mxu0 0
  %343 = vmatpush1.bf16.msra.mxu0 %v261
  %344 = vmatprep.subr.bf16.mxu0 0
  %345 = vmatpush1.bf16.msra.mxu0 %v260
  %346 = vmatprep.subr.bf16.mxu0 0
  %347 = vmatpush1.bf16.msra.mxu0 %v259
  %348 = vmatprep.subr.bf16.mxu0 0
  %349 = vmatpush1.bf16.msra.mxu0 %v258
  %350 = vmatprep.subr.bf16.mxu0 0
  %351 = vmatpush2.bf16.msra.mxu0 %v273
  %352 = vmatprep.subr.bf16.mxu0 0
  %353 = vmatpush2.bf16.msra.mxu0 %v272
  %354 = vmatprep.subr.bf16.mxu0 0
  %355 = vmatpush2.bf16.msra.mxu0 %v271
  %356 = vmatprep.subr.bf16.mxu0 0
  %357 = vmatpush2.bf16.msra.mxu0 %v270
  %358 = vmatprep.subr.bf16.mxu0 0
  %359 = vmatpush2.bf16.msra.mxu0 %v269
  %360 = vmatprep.subr.bf16.mxu0 0
  %361 = vmatpush2.bf16.msra.mxu0 %v268
  %362 = vmatprep.subr.bf16.mxu0 0
  %363 = vmatpush2.bf16.msra.mxu0 %v267
  %364 = vmatprep.subr.bf16.mxu0 0
  %365 = vmatpush2.bf16.msra.mxu0 %v266
  %366 = vmatprep.mubr.bf16.mxu0 %v106
  %367 = vmatmul.mubr.bf16.gmra.mxu0 %v105
  %v368 = vpop.f32.mrf.mxu0
  %v369 = vadd.f32 %v95, %v368
  %v370 = vpop.f32.mrf.mxu0
  %v371 = vpop.f32.mrf.mxu0
  %v372 = vpop.f32.mrf.mxu0
  %373 = vdwg.mxu0
  %374 = vmatprep.subr.bf16.mxu0 0
  %375 = vmatpush1.bf16.msra.mxu0 %v281
  %376 = vmatprep.subr.bf16.mxu0 0
  %377 = vmatpush1.bf16.msra.mxu0 %v280
  %378 = vmatprep.subr.bf16.mxu0 0
  %379 = vmatpush1.bf16.msra.mxu0 %v279
  %380 = vmatprep.subr.bf16.mxu0 0
  %381 = vmatpush1.bf16.msra.mxu0 %v278
  %382 = vmatprep.subr.bf16.mxu0 0
  %383 = vmatpush1.bf16.msra.mxu0 %v277
  %384 = vmatprep.subr.bf16.mxu0 0
  %385 = vmatpush1.bf16.msra.mxu0 %v276
  %386 = vmatprep.subr.bf16.mxu0 0
  %387 = vmatpush1.bf16.msra.mxu0 %v275
  %388 = vmatprep.subr.bf16.mxu0 0
  %389 = vmatpush1.bf16.msra.mxu0 %v274
  %390 = vmatprep.subr.bf16.mxu0 0
  %391 = vmatpush2.bf16.msra.mxu0 %v289
  %392 = vmatprep.subr.bf16.mxu0 0
  %393 = vmatpush2.bf16.msra.mxu0 %v288
  %394 = vmatprep.subr.bf16.mxu0 0
  %395 = vmatpush2.bf16.msra.mxu0 %v287
  %396 = vmatprep.subr.bf16.mxu0 0
  %397 = vmatpush2.bf16.msra.mxu0 %v286
  %398 = vmatprep.subr.bf16.mxu0 0
  %399 = vmatpush2.bf16.msra.mxu0 %v285
  %400 = vmatprep.subr.bf16.mxu0 0
  %401 = vmatpush2.bf16.msra.mxu0 %v284
  %402 = vmatprep.subr.bf16.mxu0 0
  %403 = vmatpush2.bf16.msra.mxu0 %v283
  %404 = vmatprep.subr.bf16.mxu0 0
  %405 = vmatpush2.bf16.msra.mxu0 %v282
  %406 = vmatprep.mubr.bf16.mxu0 %v108
  %407 = vmatmul.mubr.bf16.gmra.mxu0 %v107
  %v408 = vpop.f32.mrf.mxu0
  %v409 = vadd.f32 %v369, %v408
  %v410 = vpop.f32.mrf.mxu0
  %v411 = vpop.f32.mrf.mxu0
  %v412 = vpop.f32.mrf.mxu0
  %413 = vdwg.mxu0
  %414 = vmatprep.subr.bf16.mxu0 0
  %415 = vmatpush1.bf16.msra.mxu0 0
  %416 = vmatprep.subr.bf16.mxu0 0
  %417 = vmatpush1.bf16.msra.mxu0 0
  %418 = vmatprep.subr.bf16.mxu0 0
  %419 = vmatpush1.bf16.msra.mxu0 0
  %420 = vmatprep.subr.bf16.mxu0 0
  %421 = vmatpush1.bf16.msra.mxu0 0
  %422 = vmatprep.subr.bf16.mxu0 0
  %423 = vmatpush1.bf16.msra.mxu0 %v293
  %424 = vmatprep.subr.bf16.mxu0 0
  %425 = vmatpush1.bf16.msra.mxu0 %v292
  %426 = vmatprep.subr.bf16.mxu0 0
  %427 = vmatpush1.bf16.msra.mxu0 %v291
  %428 = vmatprep.subr.bf16.mxu0 0
  %429 = vmatpush1.bf16.msra.mxu0 %v290
  %430 = vmatprep.subr.bf16.mxu0 0
  %431 = vmatpush2.bf16.msra.mxu0 0
  %432 = vmatprep.subr.bf16.mxu0 0
  %433 = vmatpush2.bf16.msra.mxu0 0
  %434 = vmatprep.subr.bf16.mxu0 0
  %435 = vmatpush2.bf16.msra.mxu0 0
  %436 = vmatprep.subr.bf16.mxu0 0
  %437 = vmatpush2.bf16.msra.mxu0 0
  %438 = vmatprep.subr.bf16.mxu0 0
  %439 = vmatpush2.bf16.msra.mxu0 0
  %440 = vmatprep.subr.bf16.mxu0 0
  %441 = vmatpush2.bf16.msra.mxu0 0
  %442 = vmatprep.subr.bf16.mxu0 0
  %443 = vmatpush2.bf16.msra.mxu0 0
  %444 = vmatprep.subr.bf16.mxu0 0
  %445 = vmatpush2.bf16.msra.mxu0 0
  %446 = vmatprep.mubr.bf16.mxu0 0
  %447 = vmatmul.mubr.bf16.gmra.mxu0 %v332
  %v448 = vpop.f32.mrf.mxu0
  %v449 = vadd.f32 %v409, %v448
  %v450 = vpop.f32.mrf.mxu0
  %v451 = vpop.f32.mrf.mxu0
  %v452 = vpop.f32.mrf.mxu0
  %453 = vdwg.mxu0
  %vm454 = vcmp.gt.f32.partialorder %v449, 0.0
  %v455 = vmul.f32 %v449, 0.2
  %v456 = vsel %vm454, %v449, %v455
  %457 = vst [vmem:[%s3] sm:$0xff] %v456
  // Predicated region
  $region14: #{network_forward.13} parent=0 // pred_check
    _
  $region15: #{network_forward.13} parent=0 // pred_check_branch
    %459 = sbr.rel (0) target = $region17
  $region16: #{network_forward.13} parent=0 // pred_region
    _
  $region17: #{network_forward.13} parent=0 // pred_fallthru
    _
  // Predicated region
  $region18: #{network_forward.13} parent=0 // pred_check
    _
  $region19: #{network_forward.13} parent=0 // pred_check_branch
    %461 = sbr.rel (0) target = $region21
  $region20: #{network_forward.13} parent=0 // pred_region
    _
  $region21: #{network_forward.13} parent=0 // pred_fallthru
    _

// kernel: network_forward.14
$region0: #{network_forward.14}
  #allocation0 [shape = 'u32[]', space=smem, size = 0x4, offset = 0x4, fixed_abs, tag = 'smem constant byte address 0x4 - core index']
  #allocation1 [shape = 'u32[144,128]{1,0:T(1,128)}', space=vmem, size = 0x12000, scoped, tag = 'internal scratch']
  %s0 = inlined_call_operand.vmem [shape: bf16[8,512], index: 0, kind: input, shape index: {}]
  %s1 = inlined_call_operand.vmem [shape: bf16[512,128], index: 1, kind: input, shape index: {}]
  %s2 = inlined_call_operand.vmem [shape: f32[1,128], index: 2, kind: input, shape index: {}]
  %s3 = inlined_call_operand.vmem [shape: f32[8,128], index: 3, kind: output, shape index: {}]
  %s4 = sld [smem:[#allocation0]]
  $region22: #{network_forward.14} parent=0
    _
  %s6 = ssub.s32 1, %s4
  %s7 = scalar_select 0, %s6, %s4
  // Predicated region
  $region2: #{network_forward.14} parent=0 // pred_check
    _
  $region3: #{network_forward.14} parent=0 // pred_check_branch
    %9 = sbr.rel (0) target = $region5
  $region4: #{network_forward.14} parent=0 // pred_region
    _
  $region5: #{network_forward.14} parent=0 // pred_fallthru
    _
  // Predicated region
  $region6: #{network_forward.14} parent=0 // pred_check
    _
  $region7: #{network_forward.14} parent=0 // pred_check_branch
    %11 = sbr.rel (0) target = $region9
  $region8: #{network_forward.14} parent=0 // pred_region
    _
  $region9: #{network_forward.14} parent=0 // pred_fallthru
    _
  // Predicated region
  $region10: #{network_forward.14} parent=0 // pred_check
    _
  $region11: #{network_forward.14} parent=0 // pred_check_branch
    %13 = sbr.rel (0) target = $region13
  $region12: #{network_forward.14} parent=0 // pred_region
    _
  $region13: #{network_forward.14} parent=0 // pred_fallthru
    _
  %v15 = vld [vmem:[%s0] sm:$0xff]
  %v16 = vld [vmem:[%s0 + $0x8] sm:$0xff]
  %v17 = vld [vmem:[%s1] sm:$0xf]
  %v18 = vld [vmem:[%s1 + $0x4] sm:$0xf]
  %v19 = vld [vmem:[%s1 + $0x8] sm:$0xf]
  %v20 = vld [vmem:[%s1 + $0xc] sm:$0xf]
  %v21 = vld [vmem:[%s1 + $0x10] sm:$0xf]
  %v22 = vld [vmem:[%s1 + $0x14] sm:$0xf]
  %v23 = vld [vmem:[%s1 + $0x18] sm:$0xf]
  %v24 = vld [vmem:[%s1 + $0x1c] sm:$0xf]
  %v25 = vld [vmem:[%s1 + $0x20] sm:$0xf]
  %v26 = vld [vmem:[%s1 + $0x24] sm:$0xf]
  %v27 = vld [vmem:[%s1 + $0x28] sm:$0xf]
  %v28 = vld [vmem:[%s1 + $0x2c] sm:$0xf]
  %v29 = vld [vmem:[%s1 + $0x30] sm:$0xf]
  %v30 = vld [vmem:[%s1 + $0x34] sm:$0xf]
  %v31 = vld [vmem:[%s1 + $0x38] sm:$0xf]
  %v32 = vld [vmem:[%s1 + $0x3c] sm:$0xf]
  %v33 = vld [vmem:[%s1 + $0x40] sm:$0xf]
  %v34 = vld [vmem:[%s1 + $0x44] sm:$0xf]
  %v35 = vld [vmem:[%s1 + $0x48] sm:$0xf]
  %v36 = vld [vmem:[%s1 + $0x4c] sm:$0xf]
  %v37 = vld [vmem:[%s1 + $0x50] sm:$0xf]
  %v38 = vld [vmem:[%s1 + $0x54] sm:$0xf]
  %v39 = vld [vmem:[%s1 + $0x58] sm:$0xf]
  %v40 = vld [vmem:[%s1 + $0x5c] sm:$0xf]
  %v41 = vld [vmem:[%s1 + $0x60] sm:$0xf]
  %v42 = vld [vmem:[%s1 + $0x64] sm:$0xf]
  %v43 = vld [vmem:[%s1 + $0x68] sm:$0xf]
  %v44 = vld [vmem:[%s1 + $0x6c] sm:$0xf]
  %v45 = vld [vmem:[%s1 + $0x70] sm:$0xf]
  %v46 = vld [vmem:[%s1 + $0x74] sm:$0xf]
  %v47 = vld [vmem:[%s1 + $0x78] sm:$0xf]
  %v48 = vld [vmem:[%s1 + $0x7c] sm:$0xf]
  %v49 = vld [vmem:[%s1 + $0x80] sm:$0xf]
  %v50 = vld [vmem:[%s1 + $0x84] sm:$0xf]
  %v51 = vld [vmem:[%s1 + $0x88] sm:$0xf]
  %v52 = vld [vmem:[%s1 + $0x8c] sm:$0xf]
  %v53 = vld [vmem:[%s1 + $0x90] sm:$0xf]
  %v54 = vld [vmem:[%s1 + $0x94] sm:$0xf]
  %v55 = vld [vmem:[%s1 + $0x98] sm:$0xf]
  %v56 = vld [vmem:[%s1 + $0x9c] sm:$0xf]
  %v57 = vld [vmem:[%s1 + $0xa0] sm:$0xf]
  %v58 = vld [vmem:[%s1 + $0xa4] sm:$0xf]
  %v59 = vld [vmem:[%s1 + $0xa8] sm:$0xf]
  %v60 = vld [vmem:[%s1 + $0xac] sm:$0xf]
  %v61 = vld [vmem:[%s1 + $0xb0] sm:$0xf]
  %v62 = vld [vmem:[%s1 + $0xb4] sm:$0xf]
  %v63 = vld [vmem:[%s1 + $0xb8] sm:$0xf]
  %v64 = vld [vmem:[%s1 + $0xbc] sm:$0xf]
  %v65 = vld [vmem:[%s1 + $0xc0] sm:$0xf]
  %v66 = vld [vmem:[%s1 + $0xc4] sm:$0xf]
  %v67 = vld [vmem:[%s1 + $0xc8] sm:$0xf]
  %v68 = vld [vmem:[%s1 + $0xcc] sm:$0xf]
  %v69 = vld [vmem:[%s1 + $0xd0] sm:$0xf]
  %v70 = vld [vmem:[%s1 + $0xd4] sm:$0xf]
  %v71 = vld [vmem:[%s1 + $0xd8] sm:$0xf]
  %v72 = vld [vmem:[%s1 + $0xdc] sm:$0xf]
  %v73 = vld [vmem:[%s1 + $0xe0] sm:$0xf]
  %v74 = vld [vmem:[%s1 + $0xe4] sm:$0xf]
  %v75 = vld [vmem:[%s1 + $0xe8] sm:$0xf]
  %v76 = vld [vmem:[%s1 + $0xec] sm:$0xf]
  %v77 = vld [vmem:[%s1 + $0xf0] sm:$0xf]
  %v78 = vld [vmem:[%s1 + $0xf4] sm:$0xf]
  %v79 = vld [vmem:[%s1 + $0xf8] sm:$0xf]
  %v80 = vld [vmem:[%s1 + $0xfc] sm:$0xf]
  %v81 = vld [vmem:[%s2] sm:$0x1]
  %v83 = vlaneseq
  %v84 = vshrl.u32 %v83, 7
  %v85 = vsub.s32 0, %v84
  %v86 = vrot.slane %v81, %v85
  %v90 = vunpack.c.l.b16 %v15
  %v91 = vunpack.c.h.b16 %v15
  %v92 = vunpack.c.l.b16 %v16
  %v93 = vunpack.c.h.b16 %v16
  %v94 = vpack.c.b16 %v90, %v90
  %v95 = vpack.c.b16 %v91, %v91
  %v96 = vpack.c.b16 %v92, %v92
  %v97 = vpack.c.b16 %v93, %v93
  %v166 = vunpack.c.l.b16 %v17
  %v167 = vunpack.c.l.b16 %v18
  %v168 = vunpack.c.l.b16 %v19
  %v169 = vunpack.c.l.b16 %v20
  %v170 = vunpack.c.l.b16 %v21
  %v171 = vunpack.c.l.b16 %v22
  %v172 = vunpack.c.l.b16 %v23
  %v173 = vunpack.c.l.b16 %v24
  %v174 = vunpack.c.l.b16 %v25
  %v175 = vunpack.c.l.b16 %v26
  %v176 = vunpack.c.l.b16 %v27
  %v177 = vunpack.c.l.b16 %v28
  %v178 = vunpack.c.l.b16 %v29
  %v179 = vunpack.c.l.b16 %v30
  %v180 = vunpack.c.l.b16 %v31
  %v181 = vunpack.c.l.b16 %v32
  %v182 = vunpack.c.l.b16 %v33
  %v183 = vunpack.c.l.b16 %v34
  %v184 = vunpack.c.l.b16 %v35
  %v185 = vunpack.c.l.b16 %v36
  %v186 = vunpack.c.l.b16 %v37
  %v187 = vunpack.c.l.b16 %v38
  %v188 = vunpack.c.l.b16 %v39
  %v189 = vunpack.c.l.b16 %v40
  %v190 = vunpack.c.l.b16 %v41
  %v191 = vunpack.c.l.b16 %v42
  %v192 = vunpack.c.l.b16 %v43
  %v193 = vunpack.c.l.b16 %v44
  %v194 = vunpack.c.l.b16 %v45
  %v195 = vunpack.c.l.b16 %v46
  %v196 = vunpack.c.l.b16 %v47
  %v197 = vunpack.c.l.b16 %v48
  %v198 = vunpack.c.l.b16 %v49
  %v199 = vunpack.c.l.b16 %v50
  %v200 = vunpack.c.l.b16 %v51
  %v201 = vunpack.c.l.b16 %v52
  %v202 = vunpack.c.l.b16 %v53
  %v203 = vunpack.c.l.b16 %v54
  %v204 = vunpack.c.l.b16 %v55
  %v205 = vunpack.c.l.b16 %v56
  %v206 = vunpack.c.l.b16 %v57
  %v207 = vunpack.c.l.b16 %v58
  %v208 = vunpack.c.l.b16 %v59
  %v209 = vunpack.c.l.b16 %v60
  %v210 = vunpack.c.l.b16 %v61
  %v211 = vunpack.c.l.b16 %v62
  %v212 = vunpack.c.l.b16 %v63
  %v213 = vunpack.c.l.b16 %v64
  %v214 = vunpack.c.l.b16 %v65
  %v215 = vunpack.c.l.b16 %v66
  %v216 = vunpack.c.l.b16 %v67
  %v217 = vunpack.c.l.b16 %v68
  %v218 = vunpack.c.l.b16 %v69
  %v219 = vunpack.c.l.b16 %v70
  %v220 = vunpack.c.l.b16 %v71
  %v221 = vunpack.c.l.b16 %v72
  %v222 = vunpack.c.l.b16 %v73
  %v223 = vunpack.c.l.b16 %v74
  %v224 = vunpack.c.l.b16 %v75
  %v225 = vunpack.c.l.b16 %v76
  %v226 = vunpack.c.l.b16 %v77
  %v227 = vunpack.c.l.b16 %v78
  %v228 = vunpack.c.l.b16 %v79
  %v229 = vunpack.c.l.b16 %v80
  %v230 = vpack.c.b16 %v167, %v166
  %v231 = vpack.c.b16 %v169, %v168
  %v232 = vpack.c.b16 %v171, %v170
  %v233 = vpack.c.b16 %v173, %v172
  %v234 = vpack.c.b16 %v175, %v174
  %v235 = vpack.c.b16 %v177, %v176
  %v236 = vpack.c.b16 %v179, %v178
  %v237 = vpack.c.b16 %v181, %v180
  %v238 = vpack.c.b16 %v183, %v182
  %v239 = vpack.c.b16 %v185, %v184
  %v240 = vpack.c.b16 %v187, %v186
  %v241 = vpack.c.b16 %v189, %v188
  %v242 = vpack.c.b16 %v191, %v190
  %v243 = vpack.c.b16 %v193, %v192
  %v244 = vpack.c.b16 %v195, %v194
  %v245 = vpack.c.b16 %v197, %v196
  %v246 = vpack.c.b16 %v199, %v198
  %v247 = vpack.c.b16 %v201, %v200
  %v248 = vpack.c.b16 %v203, %v202
  %v249 = vpack.c.b16 %v205, %v204
  %v250 = vpack.c.b16 %v207, %v206
  %v251 = vpack.c.b16 %v209, %v208
  %v252 = vpack.c.b16 %v211, %v210
  %v253 = vpack.c.b16 %v213, %v212
  %v254 = vpack.c.b16 %v215, %v214
  %v255 = vpack.c.b16 %v217, %v216
  %v256 = vpack.c.b16 %v219, %v218
  %v257 = vpack.c.b16 %v221, %v220
  %v258 = vpack.c.b16 %v223, %v222
  %v259 = vpack.c.b16 %v225, %v224
  %v260 = vpack.c.b16 %v227, %v226
  %v261 = vpack.c.b16 %v229, %v228
  %294 = vmatprep.subr.bf16.mxu0 0
  %295 = vmatpush1.bf16.msra.mxu0 %v237
  %296 = vmatprep.subr.bf16.mxu0 0
  %297 = vmatpush1.bf16.msra.mxu0 %v236
  %298 = vmatprep.subr.bf16.mxu0 0
  %299 = vmatpush1.bf16.msra.mxu0 %v235
  %300 = vmatprep.subr.bf16.mxu0 0
  %301 = vmatpush1.bf16.msra.mxu0 %v234
  %302 = vmatprep.subr.bf16.mxu0 0
  %303 = vmatpush1.bf16.msra.mxu0 %v233
  %304 = vmatprep.subr.bf16.mxu0 0
  %305 = vmatpush1.bf16.msra.mxu0 %v232
  %306 = vmatprep.subr.bf16.mxu0 0
  %307 = vmatpush1.bf16.msra.mxu0 %v231
  %308 = vmatprep.subr.bf16.mxu0 0
  %309 = vmatpush1.bf16.msra.mxu0 %v230
  %310 = vmatprep.subr.bf16.mxu0 0
  %311 = vmatpush2.bf16.msra.mxu0 %v245
  %312 = vmatprep.subr.bf16.mxu0 0
  %313 = vmatpush2.bf16.msra.mxu0 %v244
  %314 = vmatprep.subr.bf16.mxu0 0
  %315 = vmatpush2.bf16.msra.mxu0 %v243
  %316 = vmatprep.subr.bf16.mxu0 0
  %317 = vmatpush2.bf16.msra.mxu0 %v242
  %318 = vmatprep.subr.bf16.mxu0 0
  %319 = vmatpush2.bf16.msra.mxu0 %v241
  %320 = vmatprep.subr.bf16.mxu0 0
  %321 = vmatpush2.bf16.msra.mxu0 %v240
  %322 = vmatprep.subr.bf16.mxu0 0
  %323 = vmatpush2.bf16.msra.mxu0 %v239
  %324 = vmatprep.subr.bf16.mxu0 0
  %325 = vmatpush2.bf16.msra.mxu0 %v238
  %326 = vmatprep.mubr.bf16.mxu0 %v95
  %327 = vmatmul.mubr.bf16.gmra.mxu0 %v94
  %v328 = vpop.f32.mrf.mxu0
  %v329 = vadd.f32 %v86, %v328
  %v330 = vpop.f32.mrf.mxu0
  %v331 = vpop.f32.mrf.mxu0
  %v332 = vpop.f32.mrf.mxu0
  %333 = vdwg.mxu0
  %334 = vmatprep.subr.bf16.mxu0 0
  %335 = vmatpush1.bf16.msra.mxu0 %v253
  %336 = vmatprep.subr.bf16.mxu0 0
  %337 = vmatpush1.bf16.msra.mxu0 %v252
  %338 = vmatprep.subr.bf16.mxu0 0
  %339 = vmatpush1.bf16.msra.mxu0 %v251
  %340 = vmatprep.subr.bf16.mxu0 0
  %341 = vmatpush1.bf16.msra.mxu0 %v250
  %342 = vmatprep.subr.bf16.mxu0 0
  %343 = vmatpush1.bf16.msra.mxu0 %v249
  %344 = vmatprep.subr.bf16.mxu0 0
  %345 = vmatpush1.bf16.msra.mxu0 %v248
  %346 = vmatprep.subr.bf16.mxu0 0
  %347 = vmatpush1.bf16.msra.mxu0 %v247
  %348 = vmatprep.subr.bf16.mxu0 0
  %349 = vmatpush1.bf16.msra.mxu0 %v246
  %350 = vmatprep.subr.bf16.mxu0 0
  %351 = vmatpush2.bf16.msra.mxu0 %v261
  %352 = vmatprep.subr.bf16.mxu0 0
  %353 = vmatpush2.bf16.msra.mxu0 %v260
  %354 = vmatprep.subr.bf16.mxu0 0
  %355 = vmatpush2.bf16.msra.mxu0 %v259
  %356 = vmatprep.subr.bf16.mxu0 0
  %357 = vmatpush2.bf16.msra.mxu0 %v258
  %358 = vmatprep.subr.bf16.mxu0 0
  %359 = vmatpush2.bf16.msra.mxu0 %v257
  %360 = vmatprep.subr.bf16.mxu0 0
  %361 = vmatpush2.bf16.msra.mxu0 %v256
  %362 = vmatprep.subr.bf16.mxu0 0
  %363 = vmatpush2.bf16.msra.mxu0 %v255
  %364 = vmatprep.subr.bf16.mxu0 0
  %365 = vmatpush2.bf16.msra.mxu0 %v254
  %366 = vmatprep.mubr.bf16.mxu0 %v97
  %367 = vmatmul.mubr.bf16.gmra.mxu0 %v96
  %v368 = vpop.f32.mrf.mxu0
  %v369 = vadd.f32 %v329, %v368
  %v370 = vpop.f32.mrf.mxu0
  %v371 = vpop.f32.mrf.mxu0
  %v372 = vpop.f32.mrf.mxu0
  %373 = vdwg.mxu0
  %vm374 = vcmp.gt.f32.partialorder %v369, 0.0
  %v375 = vmul.f32 %v369, 0.2
  %v376 = vsel %vm374, %v369, %v375
  %377 = vst [vmem:[%s3] sm:$0xff] %v376
  // Predicated region
  $region14: #{network_forward.14} parent=0 // pred_check
    _
  $region15: #{network_forward.14} parent=0 // pred_check_branch
    %379 = sbr.rel (0) target = $region17
  $region16: #{network_forward.14} parent=0 // pred_region
    _
  $region17: #{network_forward.14} parent=0 // pred_fallthru
    _
  // Predicated region
  $region18: #{network_forward.14} parent=0 // pred_check
    _
  $region19: #{network_forward.14} parent=0 // pred_check_branch
    %381 = sbr.rel (0) target = $region21
  $region20: #{network_forward.14} parent=0 // pred_region
    _
  $region21: #{network_forward.14} parent=0 // pred_fallthru
    _

// kernel: network_forward.17
$region0: #{network_forward.17}
  #allocation0 [shape = 'u32[]', space=smem, size = 0x4, offset = 0x4, fixed_abs, tag = 'smem constant byte address 0x4 - core index']
  #allocation1 [shape = 'u32[144,128]{1,0:T(1,128)}', space=vmem, size = 0x12000, scoped, tag = 'internal scratch']
  %s0 = inlined_call_operand.vmem [shape: bf16[32,256], index: 0, kind: input, shape index: {}]
  %s1 = inlined_call_operand.vmem [shape: bf16[256,128], index: 1, kind: input, shape index: {}]
  %s2 = inlined_call_operand.vmem [shape: f32[1,128], index: 2, kind: input, shape index: {}]
  %s3 = inlined_call_operand.vmem [shape: f32[32,128], index: 3, kind: output, shape index: {}]
  %s4 = sld [smem:[#allocation0]]
  $region22: #{network_forward.17} parent=0
    _
  %s6 = ssub.s32 1, %s4
  %s7 = scalar_select 0, %s6, %s4
  // Predicated region
  $region2: #{network_forward.17} parent=0 // pred_check
    _
  $region3: #{network_forward.17} parent=0 // pred_check_branch
    %9 = sbr.rel (0) target = $region5
  $region4: #{network_forward.17} parent=0 // pred_region
    _
  $region5: #{network_forward.17} parent=0 // pred_fallthru
    _
  // Predicated region
  $region6: #{network_forward.17} parent=0 // pred_check
    _
  $region7: #{network_forward.17} parent=0 // pred_check_branch
    %11 = sbr.rel (0) target = $region9
  $region8: #{network_forward.17} parent=0 // pred_region
    _
  $region9: #{network_forward.17} parent=0 // pred_fallthru
    _
  // Predicated region
  $region10: #{network_forward.17} parent=0 // pred_check
    _
  $region11: #{network_forward.17} parent=0 // pred_check_branch
    %13 = sbr.rel (0) target = $region13
  $region12: #{network_forward.17} parent=0 // pred_region
    _
  $region13: #{network_forward.17} parent=0 // pred_fallthru
    _
  %v15 = vld [vmem:[%s0] sm:$0xff]
  %v16 = vld [vmem:[%s0 + $0x8] sm:$0xff]
  %v17 = vld [vmem:[%s0 + $0x10] sm:$0xff]
  %v18 = vld [vmem:[%s0 + $0x18] sm:$0xff]
  %v19 = vld [vmem:[%s1] sm:$0xf]
  %v20 = vld [vmem:[%s1 + $0x4] sm:$0xf]
  %v21 = vld [vmem:[%s1 + $0x8] sm:$0xf]
  %v22 = vld [vmem:[%s1 + $0xc] sm:$0xf]
  %v23 = vld [vmem:[%s1 + $0x10] sm:$0xf]
  %v24 = vld [vmem:[%s1 + $0x14] sm:$0xf]
  %v25 = vld [vmem:[%s1 + $0x18] sm:$0xf]
  %v26 = vld [vmem:[%s1 + $0x1c] sm:$0xf]
  %v27 = vld [vmem:[%s1 + $0x20] sm:$0xf]
  %v28 = vld [vmem:[%s1 + $0x24] sm:$0xf]
  %v29 = vld [vmem:[%s1 + $0x28] sm:$0xf]
  %v30 = vld [vmem:[%s1 + $0x2c] sm:$0xf]
  %v31 = vld [vmem:[%s1 + $0x30] sm:$0xf]
  %v32 = vld [vmem:[%s1 + $0x34] sm:$0xf]
  %v33 = vld [vmem:[%s1 + $0x38] sm:$0xf]
  %v34 = vld [vmem:[%s1 + $0x3c] sm:$0xf]
  %v35 = vld [vmem:[%s1 + $0x40] sm:$0xf]
  %v36 = vld [vmem:[%s1 + $0x44] sm:$0xf]
  %v37 = vld [vmem:[%s1 + $0x48] sm:$0xf]
  %v38 = vld [vmem:[%s1 + $0x4c] sm:$0xf]
  %v39 = vld [vmem:[%s1 + $0x50] sm:$0xf]
  %v40 = vld [vmem:[%s1 + $0x54] sm:$0xf]
  %v41 = vld [vmem:[%s1 + $0x58] sm:$0xf]
  %v42 = vld [vmem:[%s1 + $0x5c] sm:$0xf]
  %v43 = vld [vmem:[%s1 + $0x60] sm:$0xf]
  %v44 = vld [vmem:[%s1 + $0x64] sm:$0xf]
  %v45 = vld [vmem:[%s1 + $0x68] sm:$0xf]
  %v46 = vld [vmem:[%s1 + $0x6c] sm:$0xf]
  %v47 = vld [vmem:[%s1 + $0x70] sm:$0xf]
  %v48 = vld [vmem:[%s1 + $0x74] sm:$0xf]
  %v49 = vld [vmem:[%s1 + $0x78] sm:$0xf]
  %v50 = vld [vmem:[%s1 + $0x7c] sm:$0xf]
  %v51 = vld [vmem:[%s2] sm:$0x1]
  %v53 = vlaneseq
  %v54 = vshrl.u32 %v53, 7
  %v55 = vsub.s32 0, %v54
  %v56 = vrot.slane %v51, %v55
  %v62 = vunpack.c.l.b16 %v15
  %v63 = vunpack.c.h.b16 %v15
  %v64 = vunpack.c.l.b16 %v16
  %v65 = vunpack.c.h.b16 %v16
  %v66 = vunpack.c.l.b16 %v17
  %v67 = vunpack.c.h.b16 %v17
  %v68 = vunpack.c.l.b16 %v18
  %v69 = vunpack.c.h.b16 %v18
  %v70 = vpack.c.b16 %v64, %v62
  %v71 = vpack.c.b16 %v65, %v63
  %v72 = vpack.c.b16 %v68, %v66
  %v73 = vpack.c.b16 %v69, %v67
  %v110 = vunpack.c.l.b16 %v19
  %v111 = vunpack.c.l.b16 %v20
  %v112 = vunpack.c.l.b16 %v21
  %v113 = vunpack.c.l.b16 %v22
  %v114 = vunpack.c.l.b16 %v23
  %v115 = vunpack.c.l.b16 %v24
  %v116 = vunpack.c.l.b16 %v25
  %v117 = vunpack.c.l.b16 %v26
  %v118 = vunpack.c.l.b16 %v27
  %v119 = vunpack.c.l.b16 %v28
  %v120 = vunpack.c.l.b16 %v29
  %v121 = vunpack.c.l.b16 %v30
  %v122 = vunpack.c.l.b16 %v31
  %v123 = vunpack.c.l.b16 %v32
  %v124 = vunpack.c.l.b16 %v33
  %v125 = vunpack.c.l.b16 %v34
  %v126 = vunpack.c.l.b16 %v35
  %v127 = vunpack.c.l.b16 %v36
  %v128 = vunpack.c.l.b16 %v37
  %v129 = vunpack.c.l.b16 %v38
  %v130 = vunpack.c.l.b16 %v39
  %v131 = vunpack.c.l.b16 %v40
  %v132 = vunpack.c.l.b16 %v41
  %v133 = vunpack.c.l.b16 %v42
  %v134 = vunpack.c.l.b16 %v43
  %v135 = vunpack.c.l.b16 %v44
  %v136 = vunpack.c.l.b16 %v45
  %v137 = vunpack.c.l.b16 %v46
  %v138 = vunpack.c.l.b16 %v47
  %v139 = vunpack.c.l.b16 %v48
  %v140 = vunpack.c.l.b16 %v49
  %v141 = vunpack.c.l.b16 %v50
  %v142 = vpack.c.b16 %v111, %v110
  %v143 = vpack.c.b16 %v113, %v112
  %v144 = vpack.c.b16 %v115, %v114
  %v145 = vpack.c.b16 %v117, %v116
  %v146 = vpack.c.b16 %v119, %v118
  %v147 = vpack.c.b16 %v121, %v120
  %v148 = vpack.c.b16 %v123, %v122
  %v149 = vpack.c.b16 %v125, %v124
  %v150 = vpack.c.b16 %v127, %v126
  %v151 = vpack.c.b16 %v129, %v128
  %v152 = vpack.c.b16 %v131, %v130
  %v153 = vpack.c.b16 %v133, %v132
  %v154 = vpack.c.b16 %v135, %v134
  %v155 = vpack.c.b16 %v137, %v136
  %v156 = vpack.c.b16 %v139, %v138
  %v157 = vpack.c.b16 %v141, %v140
  %174 = vmatprep.subr.bf16.mxu0 0
  %175 = vmatpush1.bf16.msra.mxu0 %v149
  %176 = vmatprep.subr.bf16.mxu0 0
  %177 = vmatpush1.bf16.msra.mxu0 %v148
  %178 = vmatprep.subr.bf16.mxu0 0
  %179 = vmatpush1.bf16.msra.mxu0 %v147
  %180 = vmatprep.subr.bf16.mxu0 0
  %181 = vmatpush1.bf16.msra.mxu0 %v146
  %182 = vmatprep.subr.bf16.mxu0 0
  %183 = vmatpush1.bf16.msra.mxu0 %v145
  %184 = vmatprep.subr.bf16.mxu0 0
  %185 = vmatpush1.bf16.msra.mxu0 %v144
  %186 = vmatprep.subr.bf16.mxu0 0
  %187 = vmatpush1.bf16.msra.mxu0 %v143
  %188 = vmatprep.subr.bf16.mxu0 0
  %189 = vmatpush1.bf16.msra.mxu0 %v142
  %190 = vmatprep.subr.bf16.mxu0 0
  %191 = vmatpush2.bf16.msra.mxu0 %v157
  %192 = vmatprep.subr.bf16.mxu0 0
  %193 = vmatpush2.bf16.msra.mxu0 %v156
  %194 = vmatprep.subr.bf16.mxu0 0
  %195 = vmatpush2.bf16.msra.mxu0 %v155
  %196 = vmatprep.subr.bf16.mxu0 0
  %197 = vmatpush2.bf16.msra.mxu0 %v154
  %198 = vmatprep.subr.bf16.mxu0 0
  %199 = vmatpush2.bf16.msra.mxu0 %v153
  %200 = vmatprep.subr.bf16.mxu0 0
  %201 = vmatpush2.bf16.msra.mxu0 %v152
  %202 = vmatprep.subr.bf16.mxu0 0
  %203 = vmatpush2.bf16.msra.mxu0 %v151
  %204 = vmatprep.subr.bf16.mxu0 0
  %205 = vmatpush2.bf16.msra.mxu0 %v150
  %206 = vmatprep.mubr.bf16.mxu0 %v71
  %207 = vmatmul.mubr.bf16.gmra.mxu0 %v70
  %v208 = vpop.f32.mrf.mxu0
  %v209 = vadd.f32 %v56, %v208
  %v210 = vpop.f32.mrf.mxu0
  %v211 = vpop.f32.mrf.mxu0
  %v212 = vadd.f32 %v56, %v211
  %v213 = vpop.f32.mrf.mxu0
  %214 = vmatprep.mubr.bf16.mxu0 %v73
  %215 = vmatmul.mubr.bf16.gmra.mxu0 %v72
  %v216 = vpop.f32.mrf.mxu0
  %v217 = vadd.f32 %v56, %v216
  %v218 = vpop.f32.mrf.mxu0
  %v219 = vpop.f32.mrf.mxu0
  %v220 = vadd.f32 %v56, %v219
  %v221 = vpop.f32.mrf.mxu0
  %222 = vdwg.mxu0
  %v223 = vmax.f32 %v209, 0.0
  %v224 = vmax.f32 %v212, 0.0
  %v225 = vmax.f32 %v217, 0.0
  %v226 = vmax.f32 %v220, 0.0
  %227 = vst [vmem:[%s3] sm:$0xff] %v223
  %228 = vst [vmem:[%s3 + $0x8] sm:$0xff] %v224
  %229 = vst [vmem:[%s3 + $0x10] sm:$0xff] %v225
  %230 = vst [vmem:[%s3 + $0x18] sm:$0xff] %v226
  // Predicated region
  $region14: #{network_forward.17} parent=0 // pred_check
    _
  $region15: #{network_forward.17} parent=0 // pred_check_branch
    %232 = sbr.rel (0) target = $region17
  $region16: #{network_forward.17} parent=0 // pred_region
    _
  $region17: #{network_forward.17} parent=0 // pred_fallthru
    _
  // Predicated region
  $region18: #{network_forward.17} parent=0 // pred_check
    _
  $region19: #{network_forward.17} parent=0 // pred_check_branch
    %234 = sbr.rel (0) target = $region21
  $region20: #{network_forward.17} parent=0 // pred_region
    _
  $region21: #{network_forward.17} parent=0 // pred_fallthru
    _

// kernel: network_forward.16
$region0: #{network_forward.16}
  #allocation0 [shape = 'u32[]', space=smem, size = 0x4, offset = 0x4, fixed_abs, tag = 'smem constant byte address 0x4 - core index']
  #allocation1 [shape = 'u32[144,128]{1,0:T(1,128)}', space=vmem, size = 0x12000, scoped, tag = 'internal scratch']
  %s0 = inlined_call_operand.vmem [shape: bf16[8,512], index: 0, kind: input, shape index: {}]
  %s1 = inlined_call_operand.vmem [shape: bf16[512,1024], index: 1, kind: input, shape index: {}]
  %s2 = inlined_call_operand.vmem [shape: f32[1,1024], index: 2, kind: input, shape index: {}]
  %s3 = inlined_call_operand.vmem [shape: f32[8,1024], index: 3, kind: output, shape index: {}]
  %s4 = sld [smem:[#allocation0]]
  $region22: #{network_forward.16} parent=0
    _
  %s6 = ssub.s32 1, %s4
  %s7 = scalar_select 0, %s6, %s4
  // Predicated region
  $region2: #{network_forward.16} parent=0 // pred_check
    _
  $region3: #{network_forward.16} parent=0 // pred_check_branch
    %9 = sbr.rel (0) target = $region5
  $region4: #{network_forward.16} parent=0 // pred_region
    _
  $region5: #{network_forward.16} parent=0 // pred_fallthru
    _
  // Predicated region
  $region6: #{network_forward.16} parent=0 // pred_check
    _
  $region7: #{network_forward.16} parent=0 // pred_check_branch
    %11 = sbr.rel (0) target = $region9
  $region8: #{network_forward.16} parent=0 // pred_region
    _
  $region9: #{network_forward.16} parent=0 // pred_fallthru
    _
  // Predicated region
  $region10: #{network_forward.16} parent=0 // pred_check
    _
  $region11: #{network_forward.16} parent=0 // pred_check_branch
    %13 = sbr.rel (0) target = $region13
  $region12: #{network_forward.16} parent=0 // pred_region
    _
  $region13: #{network_forward.16} parent=0 // pred_fallthru
    _
  %v14 = vld [vmem:[%s0] sm:$0xff]
  %v15 = vld [vmem:[%s0 + $0x8] sm:$0xff]
  %v16 = vld [vmem:[%s1] sm:$0xff]
  %v17 = vld [vmem:[%s1 + $0x8] sm:$0xff]
  %v18 = vld [vmem:[%s1 + $0x10] sm:$0xff]
  %v19 = vld [vmem:[%s1 + $0x18] sm:$0xff]
  %v20 = vld [vmem:[%s1 + $0x20] sm:$0xff]
  %v21 = vld [vmem:[%s1 + $0x28] sm:$0xff]
  %v22 = vld [vmem:[%s1 + $0x30] sm:$0xff]
  %v23 = vld [vmem:[%s1 + $0x38] sm:$0xff]
  %v24 = vld [vmem:[%s1 + $0x40] sm:$0xff]
  %v25 = vld [vmem:[%s1 + $0x48] sm:$0xff]
  %v26 = vld [vmem:[%s1 + $0x50] sm:$0xff]
  %v27 = vld [vmem:[%s1 + $0x58] sm:$0xff]
  %v28 = vld [vmem:[%s1 + $0x60] sm:$0xff]
  %v29 = vld [vmem:[%s1 + $0x68] sm:$0xff]
  %v30 = vld [vmem:[%s1 + $0x70] sm:$0xff]
  %v31 = vld [vmem:[%s1 + $0x78] sm:$0xff]
  %v32 = vld [vmem:[%s1 + $0x80] sm:$0xff]
  %v33 = vld [vmem:[%s1 + $0x88] sm:$0xff]
  %v34 = vld [vmem:[%s1 + $0x90] sm:$0xff]
  %v35 = vld [vmem:[%s1 + $0x98] sm:$0xff]
  %v36 = vld [vmem:[%s1 + $0xa0] sm:$0xff]
  %v37 = vld [vmem:[%s1 + $0xa8] sm:$0xff]
  %v38 = vld [vmem:[%s1 + $0xb0] sm:$0xff]
  %v39 = vld [vmem:[%s1 + $0xb8] sm:$0xff]
  %v40 = vld [vmem:[%s1 + $0xc0] sm:$0xff]
  %v41 = vld [vmem:[%s1 + $0xc8] sm:$0xff]
  %v42 = vld [vmem:[%s1 + $0xd0] sm:$0xff]
  %v43 = vld [vmem:[%s1 + $0xd8] sm:$0xff]
  %v44 = vld [vmem:[%s1 + $0xe0] sm:$0xff]
  %v45 = vld [vmem:[%s1 + $0xe8] sm:$0xff]
  %v46 = vld [vmem:[%s1 + $0xf0] sm:$0xff]
  %v47 = vld [vmem:[%s1 + $0xf8] sm:$0xff]
  %v48 = vld [vmem:[%s1 + $0x100] sm:$0xff]
  %v49 = vld [vmem:[%s1 + $0x108] sm:$0xff]
  %v50 = vld [vmem:[%s1 + $0x110] sm:$0xff]
  %v51 = vld [vmem:[%s1 + $0x118] sm:$0xff]
  %v52 = vld [vmem:[%s1 + $0x120] sm:$0xff]
  %v53 = vld [vmem:[%s1 + $0x128] sm:$0xff]
  %v54 = vld [vmem:[%s1 + $0x130] sm:$0xff]
  %v55 = vld [vmem:[%s1 + $0x138] sm:$0xff]
  %v56 = vld [vmem:[%s1 + $0x140] sm:$0xff]
  %v57 = vld [vmem:[%s1 + $0x148] sm:$0xff]
  %v58 = vld [vmem:[%s1 + $0x150] sm:$0xff]
  %v59 = vld [vmem:[%s1 + $0x158] sm:$0xff]
  %v60 = vld [vmem:[%s1 + $0x160] sm:$0xff]
  %v61 = vld [vmem:[%s1 + $0x168] sm:$0xff]
  %v62 = vld [vmem:[%s1 + $0x170] sm:$0xff]
  %v63 = vld [vmem:[%s1 + $0x178] sm:$0xff]
  %v64 = vld [vmem:[%s1 + $0x180] sm:$0xff]
  %v65 = vld [vmem:[%s1 + $0x188] sm:$0xff]
  %v66 = vld [vmem:[%s1 + $0x190] sm:$0xff]
  %v67 = vld [vmem:[%s1 + $0x198] sm:$0xff]
  %v68 = vld [vmem:[%s1 + $0x1a0] sm:$0xff]
  %v69 = vld [vmem:[%s1 + $0x1a8] sm:$0xff]
  %v70 = vld [vmem:[%s1 + $0x1b0] sm:$0xff]
  %v71 = vld [vmem:[%s1 + $0x1b8] sm:$0xff]
  %v72 = vld [vmem:[%s1 + $0x1c0] sm:$0xff]
  %v73 = vld [vmem:[%s1 + $0x1c8] sm:$0xff]
  %v74 = vld [vmem:[%s1 + $0x1d0] sm:$0xff]
  %v75 = vld [vmem:[%s1 + $0x1d8] sm:$0xff]
  %v76 = vld [vmem:[%s1 + $0x1e0] sm:$0xff]
  %v77 = vld [vmem:[%s1 + $0x1e8] sm:$0xff]
  %v78 = vld [vmem:[%s1 + $0x1f0] sm:$0xff]
  %v79 = vld [vmem:[%s1 + $0x1f8] sm:$0xff]
  %v80 = vld [vmem:[%s1 + $0x200] sm:$0xff]
  %v81 = vld [vmem:[%s1 + $0x208] sm:$0xff]
  %v82 = vld [vmem:[%s1 + $0x210] sm:$0xff]
  %v83 = vld [vmem:[%s1 + $0x218] sm:$0xff]
  %v84 = vld [vmem:[%s1 + $0x220] sm:$0xff]
  %v85 = vld [vmem:[%s1 + $0x228] sm:$0xff]
  %v86 = vld [vmem:[%s1 + $0x230] sm:$0xff]
  %v87 = vld [vmem:[%s1 + $0x238] sm:$0xff]
  %v88 = vld [vmem:[%s1 + $0x240] sm:$0xff]
  %v89 = vld [vmem:[%s1 + $0x248] sm:$0xff]
  %v90 = vld [vmem:[%s1 + $0x250] sm:$0xff]
  %v91 = vld [vmem:[%s1 + $0x258] sm:$0xff]
  %v92 = vld [vmem:[%s1 + $0x260] sm:$0xff]
  %v93 = vld [vmem:[%s1 + $0x268] sm:$0xff]
  %v94 = vld [vmem:[%s1 + $0x270] sm:$0xff]
  %v95 = vld [vmem:[%s1 + $0x278] sm:$0xff]
  %v96 = vld [vmem:[%s1 + $0x280] sm:$0xff]
  %v97 = vld [vmem:[%s1 + $0x288] sm:$0xff]
  %v98 = vld [vmem:[%s1 + $0x290] sm:$0xff]
  %v99 = vld [vmem:[%s1 + $0x298] sm:$0xff]
  %v100 = vld [vmem:[%s1 + $0x2a0] sm:$0xff]
  %v101 = vld [vmem:[%s1 + $0x2a8] sm:$0xff]
  %v102 = vld [vmem:[%s1 + $0x2b0] sm:$0xff]
  %v103 = vld [vmem:[%s1 + $0x2b8] sm:$0xff]
  %v104 = vld [vmem:[%s1 + $0x2c0] sm:$0xff]
  %v105 = vld [vmem:[%s1 + $0x2c8] sm:$0xff]
  %v106 = vld [vmem:[%s1 + $0x2d0] sm:$0xff]
  %v107 = vld [vmem:[%s1 + $0x2d8] sm:$0xff]
  %v108 = vld [vmem:[%s1 + $0x2e0] sm:$0xff]
  %v109 = vld [vmem:[%s1 + $0x2e8] sm:$0xff]
  %v110 = vld [vmem:[%s1 + $0x2f0] sm:$0xff]
  %v111 = vld [vmem:[%s1 + $0x2f8] sm:$0xff]
  %v112 = vld [vmem:[%s1 + $0x300] sm:$0xff]
  %v113 = vld [vmem:[%s1 + $0x308] sm:$0xff]
  %v114 = vld [vmem:[%s1 + $0x310] sm:$0xff]
  %v115 = vld [vmem:[%s1 + $0x318] sm:$0xff]
  %v116 = vld [vmem:[%s1 + $0x320] sm:$0xff]
  %v117 = vld [vmem:[%s1 + $0x328] sm:$0xff]
  %v118 = vld [vmem:[%s1 + $0x330] sm:$0xff]
  %v119 = vld [vmem:[%s1 + $0x338] sm:$0xff]
  %v120 = vld [vmem:[%s1 + $0x340] sm:$0xff]
  %v121 = vld [vmem:[%s1 + $0x348] sm:$0xff]
  %v122 = vld [vmem:[%s1 + $0x350] sm:$0xff]
  %v123 = vld [vmem:[%s1 + $0x358] sm:$0xff]
  %v124 = vld [vmem:[%s1 + $0x360] sm:$0xff]
  %v125 = vld [vmem:[%s1 + $0x368] sm:$0xff]
  %v126 = vld [vmem:[%s1 + $0x370] sm:$0xff]
  %v127 = vld [vmem:[%s1 + $0x378] sm:$0xff]
  %v128 = vld [vmem:[%s1 + $0x380] sm:$0xff]
  %v129 = vld [vmem:[%s1 + $0x388] sm:$0xff]
  %v130 = vld [vmem:[%s1 + $0x390] sm:$0xff]
  %v131 = vld [vmem:[%s1 + $0x398] sm:$0xff]
  %v132 = vld [vmem:[%s1 + $0x3a0] sm:$0xff]
  %v133 = vld [vmem:[%s1 + $0x3a8] sm:$0xff]
  %v134 = vld [vmem:[%s1 + $0x3b0] sm:$0xff]
  %v135 = vld [vmem:[%s1 + $0x3b8] sm:$0xff]
  %v136 = vld [vmem:[%s1 + $0x3c0] sm:$0xff]
  %v137 = vld [vmem:[%s1 + $0x3c8] sm:$0xff]
  %v138 = vld [vmem:[%s1 + $0x3d0] sm:$0xff]
  %v139 = vld [vmem:[%s1 + $0x3d8] sm:$0xff]
  %v140 = vld [vmem:[%s1 + $0x3e0] sm:$0xff]
  %v141 = vld [vmem:[%s1 + $0x3e8] sm:$0xff]
  %v142 = vld [vmem:[%s1 + $0x3f0] sm:$0xff]
  %v143 = vld [vmem:[%s1 + $0x3f8] sm:$0xff]
  %v144 = vld [vmem:[%s1 + $0x400] sm:$0xff]
  %v145 = vld [vmem:[%s1 + $0x408] sm:$0xff]
  %v146 = vld [vmem:[%s1 + $0x410] sm:$0xff]
  %v147 = vld [vmem:[%s1 + $0x418] sm:$0xff]
  %v148 = vld [vmem:[%s1 + $0x420] sm:$0xff]
  %v149 = vld [vmem:[%s1 + $0x428] sm:$0xff]
  %v150 = vld [vmem:[%s1 + $0x430] sm:$0xff]
  %v151 = vld [vmem:[%s1 + $0x438] sm:$0xff]
  %v152 = vld [vmem:[%s1 + $0x440] sm:$0xff]
  %v153 = vld [vmem:[%s1 + $0x448] sm:$0xff]
  %v154 = vld [vmem:[%s1 + $0x450] sm:$0xff]
  %v155 = vld [vmem:[%s1 + $0x458] sm:$0xff]
  %v156 = vld [vmem:[%s1 + $0x460] sm:$0xff]
  %v157 = vld [vmem:[%s1 + $0x468] sm:$0xff]
  %v158 = vld [vmem:[%s1 + $0x470] sm:$0xff]
  %v159 = vld [vmem:[%s1 + $0x478] sm:$0xff]
  %v160 = vld [vmem:[%s1 + $0x480] sm:$0xff]
  %v161 = vld [vmem:[%s1 + $0x488] sm:$0xff]
  %v162 = vld [vmem:[%s1 + $0x490] sm:$0xff]
  %v163 = vld [vmem:[%s1 + $0x498] sm:$0xff]
  %v164 = vld [vmem:[%s1 + $0x4a0] sm:$0xff]
  %v165 = vld [vmem:[%s1 + $0x4a8] sm:$0xff]
  %v166 = vld [vmem:[%s1 + $0x4b0] sm:$0xff]
  %v167 = vld [vmem:[%s1 + $0x4b8] sm:$0xff]
  %v168 = vld [vmem:[%s1 + $0x4c0] sm:$0xff]
  %v169 = vld [vmem:[%s1 + $0x4c8] sm:$0xff]
  %v170 = vld [vmem:[%s1 + $0x4d0] sm:$0xff]
  %v171 = vld [vmem:[%s1 + $0x4d8] sm:$0xff]
  %v172 = vld [vmem:[%s1 + $0x4e0] sm:$0xff]
  %v173 = vld [vmem:[%s1 + $0x4e8] sm:$0xff]
  %v174 = vld [vmem:[%s1 + $0x4f0] sm:$0xff]
  %v175 = vld [vmem:[%s1 + $0x4f8] sm:$0xff]
  %v176 = vld [vmem:[%s1 + $0x500] sm:$0xff]
  %v177 = vld [vmem:[%s1 + $0x508] sm:$0xff]
  %v178 = vld [vmem:[%s1 + $0x510] sm:$0xff]
  %v179 = vld [vmem:[%s1 + $0x518] sm:$0xff]
  %v180 = vld [vmem:[%s1 + $0x520] sm:$0xff]
  %v181 = vld [vmem:[%s1 + $0x528] sm:$0xff]
  %v182 = vld [vmem:[%s1 + $0x530] sm:$0xff]
  %v183 = vld [vmem:[%s1 + $0x538] sm:$0xff]
  %v184 = vld [vmem:[%s1 + $0x540] sm:$0xff]
  %v185 = vld [vmem:[%s1 + $0x548] sm:$0xff]
  %v186 = vld [vmem:[%s1 + $0x550] sm:$0xff]
  %v187 = vld [vmem:[%s1 + $0x558] sm:$0xff]
  %v188 = vld [vmem:[%s1 + $0x560] sm:$0xff]
  %v189 = vld [vmem:[%s1 + $0x568] sm:$0xff]
  %v190 = vld [vmem:[%s1 + $0x570] sm:$0xff]
  %v191 = vld [vmem:[%s1 + $0x578] sm:$0xff]
  %v192 = vld [vmem:[%s1 + $0x580] sm:$0xff]
  %v193 = vld [vmem:[%s1 + $0x588] sm:$0xff]
  %v194 = vld [vmem:[%s1 + $0x590] sm:$0xff]
  %v195 = vld [vmem:[%s1 + $0x598] sm:$0xff]
  %v196 = vld [vmem:[%s1 + $0x5a0] sm:$0xff]
  %v197 = vld [vmem:[%s1 + $0x5a8] sm:$0xff]
  %v198 = vld [vmem:[%s1 + $0x5b0] sm:$0xff]
  %v199 = vld [vmem:[%s1 + $0x5b8] sm:$0xff]
  %v200 = vld [vmem:[%s1 + $0x5c0] sm:$0xff]
  %v201 = vld [vmem:[%s1 + $0x5c8] sm:$0xff]
  %v202 = vld [vmem:[%s1 + $0x5d0] sm:$0xff]
  %v203 = vld [vmem:[%s1 + $0x5d8] sm:$0xff]
  %v204 = vld [vmem:[%s1 + $0x5e0] sm:$0xff]
  %v205 = vld [vmem:[%s1 + $0x5e8] sm:$0xff]
  %v206 = vld [vmem:[%s1 + $0x5f0] sm:$0xff]
  %v207 = vld [vmem:[%s1 + $0x5f8] sm:$0xff]
  %v208 = vld [vmem:[%s1 + $0x600] sm:$0xff]
  %v209 = vld [vmem:[%s1 + $0x608] sm:$0xff]
  %v210 = vld [vmem:[%s1 + $0x610] sm:$0xff]
  %v211 = vld [vmem:[%s1 + $0x618] sm:$0xff]
  %v212 = vld [vmem:[%s1 + $0x620] sm:$0xff]
  %v213 = vld [vmem:[%s1 + $0x628] sm:$0xff]
  %v214 = vld [vmem:[%s1 + $0x630] sm:$0xff]
  %v215 = vld [vmem:[%s1 + $0x638] sm:$0xff]
  %v216 = vld [vmem:[%s1 + $0x640] sm:$0xff]
  %v217 = vld [vmem:[%s1 + $0x648] sm:$0xff]
  %v218 = vld [vmem:[%s1 + $0x650] sm:$0xff]
  %v219 = vld [vmem:[%s1 + $0x658] sm:$0xff]
  %v220 = vld [vmem:[%s1 + $0x660] sm:$0xff]
  %v221 = vld [vmem:[%s1 + $0x668] sm:$0xff]
  %v222 = vld [vmem:[%s1 + $0x670] sm:$0xff]
  %v223 = vld [vmem:[%s1 + $0x678] sm:$0xff]
  %v224 = vld [vmem:[%s1 + $0x680] sm:$0xff]
  %v225 = vld [vmem:[%s1 + $0x688] sm:$0xff]
  %v226 = vld [vmem:[%s1 + $0x690] sm:$0xff]
  %v227 = vld [vmem:[%s1 + $0x698] sm:$0xff]
  %v228 = vld [vmem:[%s1 + $0x6a0] sm:$0xff]
  %v229 = vld [vmem:[%s1 + $0x6a8] sm:$0xff]
  %v230 = vld [vmem:[%s1 + $0x6b0] sm:$0xff]
  %v231 = vld [vmem:[%s1 + $0x6b8] sm:$0xff]
  %v232 = vld [vmem:[%s1 + $0x6c0] sm:$0xff]
  %v233 = vld [vmem:[%s1 + $0x6c8] sm:$0xff]
  %v234 = vld [vmem:[%s1 + $0x6d0] sm:$0xff]
  %v235 = vld [vmem:[%s1 + $0x6d8] sm:$0xff]
  %v236 = vld [vmem:[%s1 + $0x6e0] sm:$0xff]
  %v237 = vld [vmem:[%s1 + $0x6e8] sm:$0xff]
  %v238 = vld [vmem:[%s1 + $0x6f0] sm:$0xff]
  %v239 = vld [vmem:[%s1 + $0x6f8] sm:$0xff]
  %v240 = vld [vmem:[%s1 + $0x700] sm:$0xff]
  %v241 = vld [vmem:[%s1 + $0x708] sm:$0xff]
  %v242 = vld [vmem:[%s1 + $0x710] sm:$0xff]
  %v243 = vld [vmem:[%s1 + $0x718] sm:$0xff]
  %v244 = vld [vmem:[%s1 + $0x720] sm:$0xff]
  %v245 = vld [vmem:[%s1 + $0x728] sm:$0xff]
  %v246 = vld [vmem:[%s1 + $0x730] sm:$0xff]
  %v247 = vld [vmem:[%s1 + $0x738] sm:$0xff]
  %v248 = vld [vmem:[%s1 + $0x740] sm:$0xff]
  %v249 = vld [vmem:[%s1 + $0x748] sm:$0xff]
  %v250 = vld [vmem:[%s1 + $0x750] sm:$0xff]
  %v251 = vld [vmem:[%s1 + $0x758] sm:$0xff]
  %v252 = vld [vmem:[%s1 + $0x760] sm:$0xff]
  %v253 = vld [vmem:[%s1 + $0x768] sm:$0xff]
  %v254 = vld [vmem:[%s1 + $0x770] sm:$0xff]
  %v255 = vld [vmem:[%s1 + $0x778] sm:$0xff]
  %v256 = vld [vmem:[%s1 + $0x780] sm:$0xff]
  %v257 = vld [vmem:[%s1 + $0x788] sm:$0xff]
  %v258 = vld [vmem:[%s1 + $0x790] sm:$0xff]
  %v259 = vld [vmem:[%s1 + $0x798] sm:$0xff]
  %v260 = vld [vmem:[%s1 + $0x7a0] sm:$0xff]
  %v261 = vld [vmem:[%s1 + $0x7a8] sm:$0xff]
  %v262 = vld [vmem:[%s1 + $0x7b0] sm:$0xff]
  %v263 = vld [vmem:[%s1 + $0x7b8] sm:$0xff]
  %v264 = vld [vmem:[%s1 + $0x7c0] sm:$0xff]
  %v265 = vld [vmem:[%s1 + $0x7c8] sm:$0xff]
  %v266 = vld [vmem:[%s1 + $0x7d0] sm:$0xff]
  %v267 = vld [vmem:[%s1 + $0x7d8] sm:$0xff]
  %v268 = vld [vmem:[%s1 + $0x7e0] sm:$0xff]
  %v269 = vld [vmem:[%s1 + $0x7e8] sm:$0xff]
  %v270 = vld [vmem:[%s1 + $0x7f0] sm:$0xff]
  %v271 = vld [vmem:[%s1 + $0x7f8] sm:$0xff]
  %v272 = vld [vmem:[%s2] sm:$0xff]
  %v274 = vlaneseq
  %v275 = vshrl.u32 %v274, 7
  %v276 = vsub.s32 0, %v275
  %v277 = vrot.slane %v272, %v276
  %v278 = vlaneseq
  %v279 = vshrl.u32 %v278, 7
  %v280 = vsub.s32 1, %v279
  %v281 = vrot.slane %v272, %v280
  %v282 = vlaneseq
  %v283 = vshrl.u32 %v282, 7
  %v284 = vsub.s32 2, %v283
  %v285 = vrot.slane %v272, %v284
  %v286 = vlaneseq
  %v287 = vshrl.u32 %v286, 7
  %v288 = vsub.s32 3, %v287
  %v289 = vrot.slane %v272, %v288
  %v290 = vlaneseq
  %v291 = vshrl.u32 %v290, 7
  %v292 = vsub.s32 4, %v291
  %v293 = vrot.slane %v272, %v292
  %v294 = vlaneseq
  %v295 = vshrl.u32 %v294, 7
  %v296 = vsub.s32 5, %v295
  %v297 = vrot.slane %v272, %v296
  %v298 = vlaneseq
  %v299 = vshrl.u32 %v298, 7
  %v300 = vsub.s32 6, %v299
  %v301 = vrot.slane %v272, %v300
  %v302 = vlaneseq
  %v303 = vshrl.u32 %v302, 7
  %v304 = vsub.s32 7, %v303
  %v305 = vrot.slane %v272, %v304
  %v316 = vunpack.c.l.b16 %v14
  %v317 = vunpack.c.h.b16 %v14
  %v318 = vunpack.c.l.b16 %v15
  %v319 = vunpack.c.h.b16 %v15
  %v320 = vpack.c.b16 %v316, %v316
  %v321 = vpack.c.b16 %v317, %v317
  %v322 = vpack.c.b16 %v318, %v318
  %v323 = vpack.c.b16 %v319, %v319
  %v584 = vunpack.c.l.b16 %v16
  %v585 = vunpack.c.h.b16 %v16
  %v586 = vunpack.c.l.b16 %v17
  %v587 = vunpack.c.h.b16 %v17
  %v588 = vunpack.c.l.b16 %v18
  %v589 = vunpack.c.h.b16 %v18
  %v590 = vunpack.c.l.b16 %v19
  %v591 = vunpack.c.h.b16 %v19
  %v592 = vunpack.c.l.b16 %v20
  %v593 = vunpack.c.h.b16 %v20
  %v594 = vunpack.c.l.b16 %v21
  %v595 = vunpack.c.h.b16 %v21
  %v596 = vunpack.c.l.b16 %v22
  %v597 = vunpack.c.h.b16 %v22
  %v598 = vunpack.c.l.b16 %v23
  %v599 = vunpack.c.h.b16 %v23
  %v600 = vunpack.c.l.b16 %v24
  %v601 = vunpack.c.h.b16 %v24
  %v602 = vunpack.c.l.b16 %v25
  %v603 = vunpack.c.h.b16 %v25
  %v604 = vunpack.c.l.b16 %v26
  %v605 = vunpack.c.h.b16 %v26
  %v606 = vunpack.c.l.b16 %v27
  %v607 = vunpack.c.h.b16 %v27
  %v608 = vunpack.c.l.b16 %v28
  %v609 = vunpack.c.h.b16 %v28
  %v610 = vunpack.c.l.b16 %v29
  %v611 = vunpack.c.h.b16 %v29
  %v612 = vunpack.c.l.b16 %v30
  %v613 = vunpack.c.h.b16 %v30
  %v614 = vunpack.c.l.b16 %v31
  %v615 = vunpack.c.h.b16 %v31
  %v616 = vunpack.c.l.b16 %v32
  %v617 = vunpack.c.h.b16 %v32
  %v618 = vunpack.c.l.b16 %v33
  %v619 = vunpack.c.h.b16 %v33
  %v620 = vunpack.c.l.b16 %v34
  %v621 = vunpack.c.h.b16 %v34
  %v622 = vunpack.c.l.b16 %v35
  %v623 = vunpack.c.h.b16 %v35
  %v624 = vunpack.c.l.b16 %v36
  %v625 = vunpack.c.h.b16 %v36
  %v626 = vunpack.c.l.b16 %v37
  %v627 = vunpack.c.h.b16 %v37
  %v628 = vunpack.c.l.b16 %v38
  %v629 = vunpack.c.h.b16 %v38
  %v630 = vunpack.c.l.b16 %v39
  %v631 = vunpack.c.h.b16 %v39
  %v632 = vunpack.c.l.b16 %v40
  %v633 = vunpack.c.h.b16 %v40
  %v634 = vunpack.c.l.b16 %v41
  %v635 = vunpack.c.h.b16 %v41
  %v636 = vunpack.c.l.b16 %v42
  %v637 = vunpack.c.h.b16 %v42
  %v638 = vunpack.c.l.b16 %v43
  %v639 = vunpack.c.h.b16 %v43
  %v640 = vunpack.c.l.b16 %v44
  %v641 = vunpack.c.h.b16 %v44
  %v642 = vunpack.c.l.b16 %v45
  %v643 = vunpack.c.h.b16 %v45
  %v644 = vunpack.c.l.b16 %v46
  %v645 = vunpack.c.h.b16 %v46
  %v646 = vunpack.c.l.b16 %v47
  %v647 = vunpack.c.h.b16 %v47
  %v648 = vunpack.c.l.b16 %v48
  %v649 = vunpack.c.h.b16 %v48
  %v650 = vunpack.c.l.b16 %v49
  %v651 = vunpack.c.h.b16 %v49
  %v652 = vunpack.c.l.b16 %v50
  %v653 = vunpack.c.h.b16 %v50
  %v654 = vunpack.c.l.b16 %v51
  %v655 = vunpack.c.h.b16 %v51
  %v656 = vunpack.c.l.b16 %v52
  %v657 = vunpack.c.h.b16 %v52
  %v658 = vunpack.c.l.b16 %v53
  %v659 = vunpack.c.h.b16 %v53
  %v660 = vunpack.c.l.b16 %v54
  %v661 = vunpack.c.h.b16 %v54
  %v662 = vunpack.c.l.b16 %v55
  %v663 = vunpack.c.h.b16 %v55
  %v664 = vunpack.c.l.b16 %v56
  %v665 = vunpack.c.h.b16 %v56
  %v666 = vunpack.c.l.b16 %v57
  %v667 = vunpack.c.h.b16 %v57
  %v668 = vunpack.c.l.b16 %v58
  %v669 = vunpack.c.h.b16 %v58
  %v670 = vunpack.c.l.b16 %v59
  %v671 = vunpack.c.h.b16 %v59
  %v672 = vunpack.c.l.b16 %v60
  %v673 = vunpack.c.h.b16 %v60
  %v674 = vunpack.c.l.b16 %v61
  %v675 = vunpack.c.h.b16 %v61
  %v676 = vunpack.c.l.b16 %v62
  %v677 = vunpack.c.h.b16 %v62
  %v678 = vunpack.c.l.b16 %v63
  %v679 = vunpack.c.h.b16 %v63
  %v680 = vunpack.c.l.b16 %v64
  %v681 = vunpack.c.h.b16 %v64
  %v682 = vunpack.c.l.b16 %v65
  %v683 = vunpack.c.h.b16 %v65
  %v684 = vunpack.c.l.b16 %v66
  %v685 = vunpack.c.h.b16 %v66
  %v686 = vunpack.c.l.b16 %v67
  %v687 = vunpack.c.h.b16 %v67
  %v688 = vunpack.c.l.b16 %v68
  %v689 = vunpack.c.h.b16 %v68
  %v690 = vunpack.c.l.b16 %v69
  %v691 = vunpack.c.h.b16 %v69
  %v692 = vunpack.c.l.b16 %v70
  %v693 = vunpack.c.h.b16 %v70
  %v694 = vunpack.c.l.b16 %v71
  %v695 = vunpack.c.h.b16 %v71
  %v696 = vunpack.c.l.b16 %v72
  %v697 = vunpack.c.h.b16 %v72
  %v698 = vunpack.c.l.b16 %v73
  %v699 = vunpack.c.h.b16 %v73
  %v700 = vunpack.c.l.b16 %v74
  %v701 = vunpack.c.h.b16 %v74
  %v702 = vunpack.c.l.b16 %v75
  %v703 = vunpack.c.h.b16 %v75
  %v704 = vunpack.c.l.b16 %v76
  %v705 = vunpack.c.h.b16 %v76
  %v706 = vunpack.c.l.b16 %v77
  %v707 = vunpack.c.h.b16 %v77
  %v708 = vunpack.c.l.b16 %v78
  %v709 = vunpack.c.h.b16 %v78
  %v710 = vunpack.c.l.b16 %v79
  %v711 = vunpack.c.h.b16 %v79
  %v712 = vunpack.c.l.b16 %v80
  %v713 = vunpack.c.h.b16 %v80
  %v714 = vunpack.c.l.b16 %v81
  %v715 = vunpack.c.h.b16 %v81
  %v716 = vunpack.c.l.b16 %v82
  %v717 = vunpack.c.h.b16 %v82
  %v718 = vunpack.c.l.b16 %v83
  %v719 = vunpack.c.h.b16 %v83
  %v720 = vunpack.c.l.b16 %v84
  %v721 = vunpack.c.h.b16 %v84
  %v722 = vunpack.c.l.b16 %v85
  %v723 = vunpack.c.h.b16 %v85
  %v724 = vunpack.c.l.b16 %v86
  %v725 = vunpack.c.h.b16 %v86
  %v726 = vunpack.c.l.b16 %v87
  %v727 = vunpack.c.h.b16 %v87
  %v728 = vunpack.c.l.b16 %v88
  %v729 = vunpack.c.h.b16 %v88
  %v730 = vunpack.c.l.b16 %v89
  %v731 = vunpack.c.h.b16 %v89
  %v732 = vunpack.c.l.b16 %v90
  %v733 = vunpack.c.h.b16 %v90
  %v734 = vunpack.c.l.b16 %v91
  %v735 = vunpack.c.h.b16 %v91
  %v736 = vunpack.c.l.b16 %v92
  %v737 = vunpack.c.h.b16 %v92
  %v738 = vunpack.c.l.b16 %v93
  %v739 = vunpack.c.h.b16 %v93
  %v740 = vunpack.c.l.b16 %v94
  %v741 = vunpack.c.h.b16 %v94
  %v742 = vunpack.c.l.b16 %v95
  %v743 = vunpack.c.h.b16 %v95
  %v744 = vunpack.c.l.b16 %v96
  %v745 = vunpack.c.h.b16 %v96
  %v746 = vunpack.c.l.b16 %v97
  %v747 = vunpack.c.h.b16 %v97
  %v748 = vunpack.c.l.b16 %v98
  %v749 = vunpack.c.h.b16 %v98
  %v750 = vunpack.c.l.b16 %v99
  %v751 = vunpack.c.h.b16 %v99
  %v752 = vunpack.c.l.b16 %v100
  %v753 = vunpack.c.h.b16 %v100
  %v754 = vunpack.c.l.b16 %v101
  %v755 = vunpack.c.h.b16 %v101
  %v756 = vunpack.c.l.b16 %v102
  %v757 = vunpack.c.h.b16 %v102
  %v758 = vunpack.c.l.b16 %v103
  %v759 = vunpack.c.h.b16 %v103
  %v760 = vunpack.c.l.b16 %v104
  %v761 = vunpack.c.h.b16 %v104
  %v762 = vunpack.c.l.b16 %v105
  %v763 = vunpack.c.h.b16 %v105
  %v764 = vunpack.c.l.b16 %v106
  %v765 = vunpack.c.h.b16 %v106
  %v766 = vunpack.c.l.b16 %v107
  %v767 = vunpack.c.h.b16 %v107
  %v768 = vunpack.c.l.b16 %v108
  %v769 = vunpack.c.h.b16 %v108
  %v770 = vunpack.c.l.b16 %v109
  %v771 = vunpack.c.h.b16 %v109
  %v772 = vunpack.c.l.b16 %v110
  %v773 = vunpack.c.h.b16 %v110
  %v774 = vunpack.c.l.b16 %v111
  %v775 = vunpack.c.h.b16 %v111
  %v776 = vunpack.c.l.b16 %v112
  %v777 = vunpack.c.h.b16 %v112
  %v778 = vunpack.c.l.b16 %v113
  %v779 = vunpack.c.h.b16 %v113
  %v780 = vunpack.c.l.b16 %v114
  %v781 = vunpack.c.h.b16 %v114
  %v782 = vunpack.c.l.b16 %v115
  %v783 = vunpack.c.h.b16 %v115
  %v784 = vunpack.c.l.b16 %v116
  %v785 = vunpack.c.h.b16 %v116
  %v786 = vunpack.c.l.b16 %v117
  %v787 = vunpack.c.h.b16 %v117
  %v788 = vunpack.c.l.b16 %v118
  %v789 = vunpack.c.h.b16 %v118
  %v790 = vunpack.c.l.b16 %v119
  %v791 = vunpack.c.h.b16 %v119
  %v792 = vunpack.c.l.b16 %v120
  %v793 = vunpack.c.h.b16 %v120
  %v794 = vunpack.c.l.b16 %v121
  %v795 = vunpack.c.h.b16 %v121
  %v796 = vunpack.c.l.b16 %v122
  %v797 = vunpack.c.h.b16 %v122
  %v798 = vunpack.c.l.b16 %v123
  %v799 = vunpack.c.h.b16 %v123
  %v800 = vunpack.c.l.b16 %v124
  %v801 = vunpack.c.h.b16 %v124
  %v802 = vunpack.c.l.b16 %v125
  %v803 = vunpack.c.h.b16 %v125
  %v804 = vunpack.c.l.b16 %v126
  %v805 = vunpack.c.h.b16 %v126
  %v806 = vunpack.c.l.b16 %v127
  %v807 = vunpack.c.h.b16 %v127
  %v808 = vunpack.c.l.b16 %v128
  %v809 = vunpack.c.h.b16 %v128
  %v810 = vunpack.c.l.b16 %v129
  %v811 = vunpack.c.h.b16 %v129
  %v812 = vunpack.c.l.b16 %v130
  %v813 = vunpack.c.h.b16 %v130
  %v814 = vunpack.c.l.b16 %v131
  %v815 = vunpack.c.h.b16 %v131
  %v816 = vunpack.c.l.b16 %v132
  %v817 = vunpack.c.h.b16 %v132
  %v818 = vunpack.c.l.b16 %v133
  %v819 = vunpack.c.h.b16 %v133
  %v820 = vunpack.c.l.b16 %v134
  %v821 = vunpack.c.h.b16 %v134
  %v822 = vunpack.c.l.b16 %v135
  %v823 = vunpack.c.h.b16 %v135
  %v824 = vunpack.c.l.b16 %v136
  %v825 = vunpack.c.h.b16 %v136
  %v826 = vunpack.c.l.b16 %v137
  %v827 = vunpack.c.h.b16 %v137
  %v828 = vunpack.c.l.b16 %v138
  %v829 = vunpack.c.h.b16 %v138
  %v830 = vunpack.c.l.b16 %v139
  %v831 = vunpack.c.h.b16 %v139
  %v832 = vunpack.c.l.b16 %v140
  %v833 = vunpack.c.h.b16 %v140
  %v834 = vunpack.c.l.b16 %v141
  %v835 = vunpack.c.h.b16 %v141
  %v836 = vunpack.c.l.b16 %v142
  %v837 = vunpack.c.h.b16 %v142
  %v838 = vunpack.c.l.b16 %v143
  %v839 = vunpack.c.h.b16 %v143
  %v840 = vunpack.c.l.b16 %v144
  %v841 = vunpack.c.h.b16 %v144
  %v842 = vunpack.c.l.b16 %v145
  %v843 = vunpack.c.h.b16 %v145
  %v844 = vunpack.c.l.b16 %v146
  %v845 = vunpack.c.h.b16 %v146
  %v846 = vunpack.c.l.b16 %v147
  %v847 = vunpack.c.h.b16 %v147
  %v848 = vunpack.c.l.b16 %v148
  %v849 = vunpack.c.h.b16 %v148
  %v850 = vunpack.c.l.b16 %v149
  %v851 = vunpack.c.h.b16 %v149
  %v852 = vunpack.c.l.b16 %v150
  %v853 = vunpack.c.h.b16 %v150
  %v854 = vunpack.c.l.b16 %v151
  %v855 = vunpack.c.h.b16 %v151
  %v856 = vunpack.c.l.b16 %v152
  %v857 = vunpack.c.h.b16 %v152
  %v858 = vunpack.c.l.b16 %v153
  %v859 = vunpack.c.h.b16 %v153
  %v860 = vunpack.c.l.b16 %v154
  %v861 = vunpack.c.h.b16 %v154
  %v862 = vunpack.c.l.b16 %v155
  %v863 = vunpack.c.h.b16 %v155
  %v864 = vunpack.c.l.b16 %v156
  %v865 = vunpack.c.h.b16 %v156
  %v866 = vunpack.c.l.b16 %v157
  %v867 = vunpack.c.h.b16 %v157
  %v868 = vunpack.c.l.b16 %v158
  %v869 = vunpack.c.h.b16 %v158
  %v870 = vunpack.c.l.b16 %v159
  %v871 = vunpack.c.h.b16 %v159
  %v872 = vunpack.c.l.b16 %v160
  %v873 = vunpack.c.h.b16 %v160
  %v874 = vunpack.c.l.b16 %v161
  %v875 = vunpack.c.h.b16 %v161
  %v876 = vunpack.c.l.b16 %v162
  %v877 = vunpack.c.h.b16 %v162
  %v878 = vunpack.c.l.b16 %v163
  %v879 = vunpack.c.h.b16 %v163
  %v880 = vunpack.c.l.b16 %v164
  %v881 = vunpack.c.h.b16 %v164
  %v882 = vunpack.c.l.b16 %v165
  %v883 = vunpack.c.h.b16 %v165
  %v884 = vunpack.c.l.b16 %v166
  %v885 = vunpack.c.h.b16 %v166
  %v886 = vunpack.c.l.b16 %v167
  %v887 = vunpack.c.h.b16 %v167
  %v888 = vunpack.c.l.b16 %v168
  %v889 = vunpack.c.h.b16 %v168
  %v890 = vunpack.c.l.b16 %v169
  %v891 = vunpack.c.h.b16 %v169
  %v892 = vunpack.c.l.b16 %v170
  %v893 = vunpack.c.h.b16 %v170
  %v894 = vunpack.c.l.b16 %v171
  %v895 = vunpack.c.h.b16 %v171
  %v896 = vunpack.c.l.b16 %v172
  %v897 = vunpack.c.h.b16 %v172
  %v898 = vunpack.c.l.b16 %v173
  %v899 = vunpack.c.h.b16 %v173
  %v900 = vunpack.c.l.b16 %v174
  %v901 = vunpack.c.h.b16 %v174
  %v902 = vunpack.c.l.b16 %v175
  %v903 = vunpack.c.h.b16 %v175
  %v904 = vunpack.c.l.b16 %v176
  %v905 = vunpack.c.h.b16 %v176
  %v906 = vunpack.c.l.b16 %v177
  %v907 = vunpack.c.h.b16 %v177
  %v908 = vunpack.c.l.b16 %v178
  %v909 = vunpack.c.h.b16 %v178
  %v910 = vunpack.c.l.b16 %v179
  %v911 = vunpack.c.h.b16 %v179
  %v912 = vunpack.c.l.b16 %v180
  %v913 = vunpack.c.h.b16 %v180
  %v914 = vunpack.c.l.b16 %v181
  %v915 = vunpack.c.h.b16 %v181
  %v916 = vunpack.c.l.b16 %v182
  %v917 = vunpack.c.h.b16 %v182
  %v918 = vunpack.c.l.b16 %v183
  %v919 = vunpack.c.h.b16 %v183
  %v920 = vunpack.c.l.b16 %v184
  %v921 = vunpack.c.h.b16 %v184
  %v922 = vunpack.c.l.b16 %v185
  %v923 = vunpack.c.h.b16 %v185
  %v924 = vunpack.c.l.b16 %v186
  %v925 = vunpack.c.h.b16 %v186
  %v926 = vunpack.c.l.b16 %v187
  %v927 = vunpack.c.h.b16 %v187
  %v928 = vunpack.c.l.b16 %v188
  %v929 = vunpack.c.h.b16 %v188
  %v930 = vunpack.c.l.b16 %v189
  %v931 = vunpack.c.h.b16 %v189
  %v932 = vunpack.c.l.b16 %v190
  %v933 = vunpack.c.h.b16 %v190
  %v934 = vunpack.c.l.b16 %v191
  %v935 = vunpack.c.h.b16 %v191
  %v936 = vunpack.c.l.b16 %v192
  %v937 = vunpack.c.h.b16 %v192
  %v938 = vunpack.c.l.b16 %v193
  %v939 = vunpack.c.h.b16 %v193
  %v940 = vunpack.c.l.b16 %v194
  %v941 = vunpack.c.h.b16 %v194
  %v942 = vunpack.c.l.b16 %v195
  %v943 = vunpack.c.h.b16 %v195
  %v944 = vunpack.c.l.b16 %v196
  %v945 = vunpack.c.h.b16 %v196
  %v946 = vunpack.c.l.b16 %v197
  %v947 = vunpack.c.h.b16 %v197
  %v948 = vunpack.c.l.b16 %v198
  %v949 = vunpack.c.h.b16 %v198
  %v950 = vunpack.c.l.b16 %v199
  %v951 = vunpack.c.h.b16 %v199
  %v952 = vunpack.c.l.b16 %v200
  %v953 = vunpack.c.h.b16 %v200
  %v954 = vunpack.c.l.b16 %v201
  %v955 = vunpack.c.h.b16 %v201
  %v956 = vunpack.c.l.b16 %v202
  %v957 = vunpack.c.h.b16 %v202
  %v958 = vunpack.c.l.b16 %v203
  %v959 = vunpack.c.h.b16 %v203
  %v960 = vunpack.c.l.b16 %v204
  %v961 = vunpack.c.h.b16 %v204
  %v962 = vunpack.c.l.b16 %v205
  %v963 = vunpack.c.h.b16 %v205
  %v964 = vunpack.c.l.b16 %v206
  %v965 = vunpack.c.h.b16 %v206
  %v966 = vunpack.c.l.b16 %v207
  %v967 = vunpack.c.h.b16 %v207
  %v968 = vunpack.c.l.b16 %v208
  %v969 = vunpack.c.h.b16 %v208
  %v970 = vunpack.c.l.b16 %v209
  %v971 = vunpack.c.h.b16 %v209
  %v972 = vunpack.c.l.b16 %v210
  %v973 = vunpack.c.h.b16 %v210
  %v974 = vunpack.c.l.b16 %v211
  %v975 = vunpack.c.h.b16 %v211
  %v976 = vunpack.c.l.b16 %v212
  %v977 = vunpack.c.h.b16 %v212
  %v978 = vunpack.c.l.b16 %v213
  %v979 = vunpack.c.h.b16 %v213
  %v980 = vunpack.c.l.b16 %v214
  %v981 = vunpack.c.h.b16 %v214
  %v982 = vunpack.c.l.b16 %v215
  %v983 = vunpack.c.h.b16 %v215
  %v984 = vunpack.c.l.b16 %v216
  %v985 = vunpack.c.h.b16 %v216
  %v986 = vunpack.c.l.b16 %v217
  %v987 = vunpack.c.h.b16 %v217
  %v988 = vunpack.c.l.b16 %v218
  %v989 = vunpack.c.h.b16 %v218
  %v990 = vunpack.c.l.b16 %v219
  %v991 = vunpack.c.h.b16 %v219
  %v992 = vunpack.c.l.b16 %v220
  %v993 = vunpack.c.h.b16 %v220
  %v994 = vunpack.c.l.b16 %v221
  %v995 = vunpack.c.h.b16 %v221
  %v996 = vunpack.c.l.b16 %v222
  %v997 = vunpack.c.h.b16 %v222
  %v998 = vunpack.c.l.b16 %v223
  %v999 = vunpack.c.h.b16 %v223
  %v1000 = vunpack.c.l.b16 %v224
  %v1001 = vunpack.c.h.b16 %v224
  %v1002 = vunpack.c.l.b16 %v225
  %v1003 = vunpack.c.h.b16 %v225
  %v1004 = vunpack.c.l.b16 %v226
  %v1005 = vunpack.c.h.b16 %v226
  %v1006 = vunpack.c.l.b16 %v227
  %v1007 = vunpack.c.h.b16 %v227
  %v1008 = vunpack.c.l.b16 %v228
  %v1009 = vunpack.c.h.b16 %v228
  %v1010 = vunpack.c.l.b16 %v229
  %v1011 = vunpack.c.h.b16 %v229
  %v1012 = vunpack.c.l.b16 %v230
  %v1013 = vunpack.c.h.b16 %v230
  %v1014 = vunpack.c.l.b16 %v231
  %v1015 = vunpack.c.h.b16 %v231
  %v1016 = vunpack.c.l.b16 %v232
  %v1017 = vunpack.c.h.b16 %v232
  %v1018 = vunpack.c.l.b16 %v233
  %v1019 = vunpack.c.h.b16 %v233
  %v1020 = vunpack.c.l.b16 %v234
  %v1021 = vunpack.c.h.b16 %v234
  %v1022 = vunpack.c.l.b16 %v235
  %v1023 = vunpack.c.h.b16 %v235
  %v1024 = vunpack.c.l.b16 %v236
  %v1025 = vunpack.c.h.b16 %v236
  %v1026 = vunpack.c.l.b16 %v237
  %v1027 = vunpack.c.h.b16 %v237
  %v1028 = vunpack.c.l.b16 %v238
  %v1029 = vunpack.c.h.b16 %v238
  %v1030 = vunpack.c.l.b16 %v239
  %v1031 = vunpack.c.h.b16 %v239
  %v1032 = vunpack.c.l.b16 %v240
  %v1033 = vunpack.c.h.b16 %v240
  %v1034 = vunpack.c.l.b16 %v241
  %v1035 = vunpack.c.h.b16 %v241
  %v1036 = vunpack.c.l.b16 %v242
  %v1037 = vunpack.c.h.b16 %v242
  %v1038 = vunpack.c.l.b16 %v243
  %v1039 = vunpack.c.h.b16 %v243
  %v1040 = vunpack.c.l.b16 %v244
  %v1041 = vunpack.c.h.b16 %v244
  %v1042 = vunpack.c.l.b16 %v245
  %v1043 = vunpack.c.h.b16 %v245
  %v1044 = vunpack.c.l.b16 %v246
  %v1045 = vunpack.c.h.b16 %v246
  %v1046 = vunpack.c.l.b16 %v247
  %v1047 = vunpack.c.h.b16 %v247
  %v1048 = vunpack.c.l.b16 %v248
  %v1049 = vunpack.c.h.b16 %v248
  %v1050 = vunpack.c.l.b16 %v249
  %v1051 = vunpack.c.h.b16 %v249
  %v1052 = vunpack.c.l.b16 %v250
  %v1053 = vunpack.c.h.b16 %v250
  %v1054 = vunpack.c.l.b16 %v251
  %v1055 = vunpack.c.h.b16 %v251
  %v1056 = vunpack.c.l.b16 %v252
  %v1057 = vunpack.c.h.b16 %v252
  %v1058 = vunpack.c.l.b16 %v253
  %v1059 = vunpack.c.h.b16 %v253
  %v1060 = vunpack.c.l.b16 %v254
  %v1061 = vunpack.c.h.b16 %v254
  %v1062 = vunpack.c.l.b16 %v255
  %v1063 = vunpack.c.h.b16 %v255
  %v1064 = vunpack.c.l.b16 %v256
  %v1065 = vunpack.c.h.b16 %v256
  %v1066 = vunpack.c.l.b16 %v257
  %v1067 = vunpack.c.h.b16 %v257
  %v1068 = vunpack.c.l.b16 %v258
  %v1069 = vunpack.c.h.b16 %v258
  %v1070 = vunpack.c.l.b16 %v259
  %v1071 = vunpack.c.h.b16 %v259
  %v1072 = vunpack.c.l.b16 %v260
  %v1073 = vunpack.c.h.b16 %v260
  %v1074 = vunpack.c.l.b16 %v261
  %v1075 = vunpack.c.h.b16 %v261
  %v1076 = vunpack.c.l.b16 %v262
  %v1077 = vunpack.c.h.b16 %v262
  %v1078 = vunpack.c.l.b16 %v263
  %v1079 = vunpack.c.h.b16 %v263
  %v1080 = vunpack.c.l.b16 %v264
  %v1081 = vunpack.c.h.b16 %v264
  %v1082 = vunpack.c.l.b16 %v265
  %v1083 = vunpack.c.h.b16 %v265
  %v1084 = vunpack.c.l.b16 %v266
  %v1085 = vunpack.c.h.b16 %v266
  %v1086 = vunpack.c.l.b16 %v267
  %v1087 = vunpack.c.h.b16 %v267
  %v1088 = vunpack.c.l.b16 %v268
  %v1089 = vunpack.c.h.b16 %v268
  %v1090 = vunpack.c.l.b16 %v269
  %v1091 = vunpack.c.h.b16 %v269
  %v1092 = vunpack.c.l.b16 %v270
  %v1093 = vunpack.c.h.b16 %v270
  %v1094 = vunpack.c.l.b16 %v271
  %v1095 = vunpack.c.h.b16 %v271
  %v1096 = vpack.c.b16 %v592, %v584
  %v1097 = vpack.c.b16 %v593, %v585
  %v1098 = vpack.c.b16 %v594, %v586
  %v1099 = vpack.c.b16 %v595, %v587
  %v1100 = vpack.c.b16 %v596, %v588
  %v1101 = vpack.c.b16 %v597, %v589
  %v1102 = vpack.c.b16 %v598, %v590
  %v1103 = vpack.c.b16 %v599, %v591
  %v1104 = vpack.c.b16 %v608, %v600
  %v1105 = vpack.c.b16 %v609, %v601
  %v1106 = vpack.c.b16 %v610, %v602
  %v1107 = vpack.c.b16 %v611, %v603
  %v1108 = vpack.c.b16 %v612, %v604
  %v1109 = vpack.c.b16 %v613, %v605
  %v1110 = vpack.c.b16 %v614, %v606
  %v1111 = vpack.c.b16 %v615, %v607
  %v1112 = vpack.c.b16 %v624, %v616
  %v1113 = vpack.c.b16 %v625, %v617
  %v1114 = vpack.c.b16 %v626, %v618
  %v1115 = vpack.c.b16 %v627, %v619
  %v1116 = vpack.c.b16 %v628, %v620
  %v1117 = vpack.c.b16 %v629, %v621
  %v1118 = vpack.c.b16 %v630, %v622
  %v1119 = vpack.c.b16 %v631, %v623
  %v1120 = vpack.c.b16 %v640, %v632
  %v1121 = vpack.c.b16 %v641, %v633
  %v1122 = vpack.c.b16 %v642, %v634
  %v1123 = vpack.c.b16 %v643, %v635
  %v1124 = vpack.c.b16 %v644, %v636
  %v1125 = vpack.c.b16 %v645, %v637
  %v1126 = vpack.c.b16 %v646, %v638
  %v1127 = vpack.c.b16 %v647, %v639
  %v1128 = vpack.c.b16 %v656, %v648
  %v1129 = vpack.c.b16 %v657, %v649
  %v1130 = vpack.c.b16 %v658, %v650
  %v1131 = vpack.c.b16 %v659, %v651
  %v1132 = vpack.c.b16 %v660, %v652
  %v1133 = vpack.c.b16 %v661, %v653
  %v1134 = vpack.c.b16 %v662, %v654
  %v1135 = vpack.c.b16 %v663, %v655
  %v1136 = vpack.c.b16 %v672, %v664
  %v1137 = vpack.c.b16 %v673, %v665
  %v1138 = vpack.c.b16 %v674, %v666
  %v1139 = vpack.c.b16 %v675, %v667
  %v1140 = vpack.c.b16 %v676, %v668
  %v1141 = vpack.c.b16 %v677, %v669
  %v1142 = vpack.c.b16 %v678, %v670
  %v1143 = vpack.c.b16 %v679, %v671
  %v1144 = vpack.c.b16 %v688, %v680
  %v1145 = vpack.c.b16 %v689, %v681
  %v1146 = vpack.c.b16 %v690, %v682
  %v1147 = vpack.c.b16 %v691, %v683
  %v1148 = vpack.c.b16 %v692, %v684
  %v1149 = vpack.c.b16 %v693, %v685
  %v1150 = vpack.c.b16 %v694, %v686
  %v1151 = vpack.c.b16 %v695, %v687
  %v1152 = vpack.c.b16 %v704, %v696
  %v1153 = vpack.c.b16 %v705, %v697
  %v1154 = vpack.c.b16 %v706, %v698
  %v1155 = vpack.c.b16 %v707, %v699
  %v1156 = vpack.c.b16 %v708, %v700
  %v1157 = vpack.c.b16 %v709, %v701
  %v1158 = vpack.c.b16 %v710, %v702
  %v1159 = vpack.c.b16 %v711, %v703
  %v1160 = vpack.c.b16 %v720, %v712
  %v1161 = vpack.c.b16 %v721, %v713
  %v1162 = vpack.c.b16 %v722, %v714
  %v1163 = vpack.c.b16 %v723, %v715
  %v1164 = vpack.c.b16 %v724, %v716
  %v1165 = vpack.c.b16 %v725, %v717
  %v1166 = vpack.c.b16 %v726, %v718
  %v1167 = vpack.c.b16 %v727, %v719
  %v1168 = vpack.c.b16 %v736, %v728
  %v1169 = vpack.c.b16 %v737, %v729
  %v1170 = vpack.c.b16 %v738, %v730
  %v1171 = vpack.c.b16 %v739, %v731
  %v1172 = vpack.c.b16 %v740, %v732
  %v1173 = vpack.c.b16 %v741, %v733
  %v1174 = vpack.c.b16 %v742, %v734
  %v1175 = vpack.c.b16 %v743, %v735
  %v1176 = vpack.c.b16 %v752, %v744
  %v1177 = vpack.c.b16 %v753, %v745
  %v1178 = vpack.c.b16 %v754, %v746
  %v1179 = vpack.c.b16 %v755, %v747
  %v1180 = vpack.c.b16 %v756, %v748
  %v1181 = vpack.c.b16 %v757, %v749
  %v1182 = vpack.c.b16 %v758, %v750
  %v1183 = vpack.c.b16 %v759, %v751
  %v1184 = vpack.c.b16 %v768, %v760
  %v1185 = vpack.c.b16 %v769, %v761
  %v1186 = vpack.c.b16 %v770, %v762
  %v1187 = vpack.c.b16 %v771, %v763
  %v1188 = vpack.c.b16 %v772, %v764
  %v1189 = vpack.c.b16 %v773, %v765
  %v1190 = vpack.c.b16 %v774, %v766
  %v1191 = vpack.c.b16 %v775, %v767
  %v1192 = vpack.c.b16 %v784, %v776
  %v1193 = vpack.c.b16 %v785, %v777
  %v1194 = vpack.c.b16 %v786, %v778
  %v1195 = vpack.c.b16 %v787, %v779
  %v1196 = vpack.c.b16 %v788, %v780
  %v1197 = vpack.c.b16 %v789, %v781
  %v1198 = vpack.c.b16 %v790, %v782
  %v1199 = vpack.c.b16 %v791, %v783
  %v1200 = vpack.c.b16 %v800, %v792
  %v1201 = vpack.c.b16 %v801, %v793
  %v1202 = vpack.c.b16 %v802, %v794
  %v1203 = vpack.c.b16 %v803, %v795
  %v1204 = vpack.c.b16 %v804, %v796
  %v1205 = vpack.c.b16 %v805, %v797
  %v1206 = vpack.c.b16 %v806, %v798
  %v1207 = vpack.c.b16 %v807, %v799
  %v1208 = vpack.c.b16 %v816, %v808
  %v1209 = vpack.c.b16 %v817, %v809
  %v1210 = vpack.c.b16 %v818, %v810
  %v1211 = vpack.c.b16 %v819, %v811
  %v1212 = vpack.c.b16 %v820, %v812
  %v1213 = vpack.c.b16 %v821, %v813
  %v1214 = vpack.c.b16 %v822, %v814
  %v1215 = vpack.c.b16 %v823, %v815
  %v1216 = vpack.c.b16 %v832, %v824
  %v1217 = vpack.c.b16 %v833, %v825
  %v1218 = vpack.c.b16 %v834, %v826
  %v1219 = vpack.c.b16 %v835, %v827
  %v1220 = vpack.c.b16 %v836, %v828
  %v1221 = vpack.c.b16 %v837, %v829
  %v1222 = vpack.c.b16 %v838, %v830
  %v1223 = vpack.c.b16 %v839, %v831
  %v1224 = vpack.c.b16 %v848, %v840
  %v1225 = vpack.c.b16 %v849, %v841
  %v1226 = vpack.c.b16 %v850, %v842
  %v1227 = vpack.c.b16 %v851, %v843
  %v1228 = vpack.c.b16 %v852, %v844
  %v1229 = vpack.c.b16 %v853, %v845
  %v1230 = vpack.c.b16 %v854, %v846
  %v1231 = vpack.c.b16 %v855, %v847
  %v1232 = vpack.c.b16 %v864, %v856
  %v1233 = vpack.c.b16 %v865, %v857
  %v1234 = vpack.c.b16 %v866, %v858
  %v1235 = vpack.c.b16 %v867, %v859
  %v1236 = vpack.c.b16 %v868, %v860
  %v1237 = vpack.c.b16 %v869, %v861
  %v1238 = vpack.c.b16 %v870, %v862
  %v1239 = vpack.c.b16 %v871, %v863
  %v1240 = vpack.c.b16 %v880, %v872
  %v1241 = vpack.c.b16 %v881, %v873
  %v1242 = vpack.c.b16 %v882, %v874
  %v1243 = vpack.c.b16 %v883, %v875
  %v1244 = vpack.c.b16 %v884, %v876
  %v1245 = vpack.c.b16 %v885, %v877
  %v1246 = vpack.c.b16 %v886, %v878
  %v1247 = vpack.c.b16 %v887, %v879
  %v1248 = vpack.c.b16 %v896, %v888
  %v1249 = vpack.c.b16 %v897, %v889
  %v1250 = vpack.c.b16 %v898, %v890
  %v1251 = vpack.c.b16 %v899, %v891
  %v1252 = vpack.c.b16 %v900, %v892
  %v1253 = vpack.c.b16 %v901, %v893
  %v1254 = vpack.c.b16 %v902, %v894
  %v1255 = vpack.c.b16 %v903, %v895
  %v1256 = vpack.c.b16 %v912, %v904
  %v1257 = vpack.c.b16 %v913, %v905
  %v1258 = vpack.c.b16 %v914, %v906
  %v1259 = vpack.c.b16 %v915, %v907
  %v1260 = vpack.c.b16 %v916, %v908
  %v1261 = vpack.c.b16 %v917, %v909
  %v1262 = vpack.c.b16 %v918, %v910
  %v1263 = vpack.c.b16 %v919, %v911
  %v1264 = vpack.c.b16 %v928, %v920
  %v1265 = vpack.c.b16 %v929, %v921
  %v1266 = vpack.c.b16 %v930, %v922
  %v1267 = vpack.c.b16 %v931, %v923
  %v1268 = vpack.c.b16 %v932, %v924
  %v1269 = vpack.c.b16 %v933, %v925
  %v1270 = vpack.c.b16 %v934, %v926
  %v1271 = vpack.c.b16 %v935, %v927
  %v1272 = vpack.c.b16 %v944, %v936
  %v1273 = vpack.c.b16 %v945, %v937
  %v1274 = vpack.c.b16 %v946, %v938
  %v1275 = vpack.c.b16 %v947, %v939
  %v1276 = vpack.c.b16 %v948, %v940
  %v1277 = vpack.c.b16 %v949, %v941
  %v1278 = vpack.c.b16 %v950, %v942
  %v1279 = vpack.c.b16 %v951, %v943
  %v1280 = vpack.c.b16 %v960, %v952
  %v1281 = vpack.c.b16 %v961, %v953
  %v1282 = vpack.c.b16 %v962, %v954
  %v1283 = vpack.c.b16 %v963, %v955
  %v1284 = vpack.c.b16 %v964, %v956
  %v1285 = vpack.c.b16 %v965, %v957
  %v1286 = vpack.c.b16 %v966, %v958
  %v1287 = vpack.c.b16 %v967, %v959
  %v1288 = vpack.c.b16 %v976, %v968
  %v1289 = vpack.c.b16 %v977, %v969
  %v1290 = vpack.c.b16 %v978, %v970
  %v1291 = vpack.c.b16 %v979, %v971
  %v1292 = vpack.c.b16 %v980, %v972
  %v1293 = vpack.c.b16 %v981, %v973
  %v1294 = vpack.c.b16 %v982, %v974
  %v1295 = vpack.c.b16 %v983, %v975
  %v1296 = vpack.c.b16 %v992, %v984
  %v1297 = vpack.c.b16 %v993, %v985
  %v1298 = vpack.c.b16 %v994, %v986
  %v1299 = vpack.c.b16 %v995, %v987
  %v1300 = vpack.c.b16 %v996, %v988
  %v1301 = vpack.c.b16 %v997, %v989
  %v1302 = vpack.c.b16 %v998, %v990
  %v1303 = vpack.c.b16 %v999, %v991
  %v1304 = vpack.c.b16 %v1008, %v1000
  %v1305 = vpack.c.b16 %v1009, %v1001
  %v1306 = vpack.c.b16 %v1010, %v1002
  %v1307 = vpack.c.b16 %v1011, %v1003
  %v1308 = vpack.c.b16 %v1012, %v1004
  %v1309 = vpack.c.b16 %v1013, %v1005
  %v1310 = vpack.c.b16 %v1014, %v1006
  %v1311 = vpack.c.b16 %v1015, %v1007
  %v1312 = vpack.c.b16 %v1024, %v1016
  %v1313 = vpack.c.b16 %v1025, %v1017
  %v1314 = vpack.c.b16 %v1026, %v1018
  %v1315 = vpack.c.b16 %v1027, %v1019
  %v1316 = vpack.c.b16 %v1028, %v1020
  %v1317 = vpack.c.b16 %v1029, %v1021
  %v1318 = vpack.c.b16 %v1030, %v1022
  %v1319 = vpack.c.b16 %v1031, %v1023
  %v1320 = vpack.c.b16 %v1040, %v1032
  %v1321 = vpack.c.b16 %v1041, %v1033
  %v1322 = vpack.c.b16 %v1042, %v1034
  %v1323 = vpack.c.b16 %v1043, %v1035
  %v1324 = vpack.c.b16 %v1044, %v1036
  %v1325 = vpack.c.b16 %v1045, %v1037
  %v1326 = vpack.c.b16 %v1046, %v1038
  %v1327 = vpack.c.b16 %v1047, %v1039
  %v1328 = vpack.c.b16 %v1056, %v1048
  %v1329 = vpack.c.b16 %v1057, %v1049
  %v1330 = vpack.c.b16 %v1058, %v1050
  %v1331 = vpack.c.b16 %v1059, %v1051
  %v1332 = vpack.c.b16 %v1060, %v1052
  %v1333 = vpack.c.b16 %v1061, %v1053
  %v1334 = vpack.c.b16 %v1062, %v1054
  %v1335 = vpack.c.b16 %v1063, %v1055
  %v1336 = vpack.c.b16 %v1072, %v1064
  %v1337 = vpack.c.b16 %v1073, %v1065
  %v1338 = vpack.c.b16 %v1074, %v1066
  %v1339 = vpack.c.b16 %v1075, %v1067
  %v1340 = vpack.c.b16 %v1076, %v1068
  %v1341 = vpack.c.b16 %v1077, %v1069
  %v1342 = vpack.c.b16 %v1078, %v1070
  %v1343 = vpack.c.b16 %v1079, %v1071
  %v1344 = vpack.c.b16 %v1088, %v1080
  %v1345 = vpack.c.b16 %v1089, %v1081
  %v1346 = vpack.c.b16 %v1090, %v1082
  %v1347 = vpack.c.b16 %v1091, %v1083
  %v1348 = vpack.c.b16 %v1092, %v1084
  %v1349 = vpack.c.b16 %v1093, %v1085
  %v1350 = vpack.c.b16 %v1094, %v1086
  %v1351 = vpack.c.b16 %v1095, %v1087
  %1608 = vmatprep.subr.bf16.mxu0 %v1153
  %1609 = vmatpush1.bf16.msra.mxu0 %v1152
  %1610 = vmatprep.subr.bf16.mxu0 %v1145
  %1611 = vmatpush1.bf16.msra.mxu0 %v1144
  %1612 = vmatprep.subr.bf16.mxu0 %v1137
  %1613 = vmatpush1.bf16.msra.mxu0 %v1136
  %1614 = vmatprep.subr.bf16.mxu0 %v1129
  %1615 = vmatpush1.bf16.msra.mxu0 %v1128
  %1616 = vmatprep.subr.bf16.mxu0 %v1121
  %1617 = vmatpush1.bf16.msra.mxu0 %v1120
  %1618 = vmatprep.subr.bf16.mxu0 %v1113
  %1619 = vmatpush1.bf16.msra.mxu0 %v1112
  %1620 = vmatprep.subr.bf16.mxu0 %v1105
  %1621 = vmatpush1.bf16.msra.mxu0 %v1104
  %1622 = vmatprep.subr.bf16.mxu0 %v1097
  %1623 = vmatpush1.bf16.msra.mxu0 %v1096
  %1624 = vmatprep.subr.bf16.mxu0 %v1217
  %1625 = vmatpush2.bf16.msra.mxu0 %v1216
  %1626 = vmatprep.subr.bf16.mxu0 %v1209
  %1627 = vmatpush2.bf16.msra.mxu0 %v1208
  %1628 = vmatprep.subr.bf16.mxu0 %v1201
  %1629 = vmatpush2.bf16.msra.mxu0 %v1200
  %1630 = vmatprep.subr.bf16.mxu0 %v1193
  %1631 = vmatpush2.bf16.msra.mxu0 %v1192
  %1632 = vmatprep.subr.bf16.mxu0 %v1185
  %1633 = vmatpush2.bf16.msra.mxu0 %v1184
  %1634 = vmatprep.subr.bf16.mxu0 %v1177
  %1635 = vmatpush2.bf16.msra.mxu0 %v1176
  %1636 = vmatprep.subr.bf16.mxu0 %v1169
  %1637 = vmatpush2.bf16.msra.mxu0 %v1168
  %1638 = vmatprep.subr.bf16.mxu0 %v1161
  %1639 = vmatpush2.bf16.msra.mxu0 %v1160
  %1640 = vmatprep.mubr.bf16.mxu0 %v321
  %1641 = vmatmul.mubr.bf16.gmra.mxu0 %v320
  %v1642 = vpop.f32.mrf.mxu0
  %v1643 = vadd.f32 %v277, %v1642
  %v1644 = vpop.f32.mrf.mxu0
  %v1645 = vadd.f32 %v281, %v1644
  %v1646 = vpop.f32.mrf.mxu0
  %v1647 = vpop.f32.mrf.mxu0
  %1648 = vdwg.mxu0
  %1649 = vmatprep.subr.bf16.mxu0 %v1281
  %1650 = vmatpush1.bf16.msra.mxu0 %v1280
  %1651 = vmatprep.subr.bf16.mxu0 %v1273
  %1652 = vmatpush1.bf16.msra.mxu0 %v1272
  %1653 = vmatprep.subr.bf16.mxu0 %v1265
  %1654 = vmatpush1.bf16.msra.mxu0 %v1264
  %1655 = vmatprep.subr.bf16.mxu0 %v1257
  %1656 = vmatpush1.bf16.msra.mxu0 %v1256
  %1657 = vmatprep.subr.bf16.mxu0 %v1249
  %1658 = vmatpush1.bf16.msra.mxu0 %v1248
  %1659 = vmatprep.subr.bf16.mxu0 %v1241
  %1660 = vmatpush1.bf16.msra.mxu0 %v1240
  %1661 = vmatprep.subr.bf16.mxu0 %v1233
  %1662 = vmatpush1.bf16.msra.mxu0 %v1232
  %1663 = vmatprep.subr.bf16.mxu0 %v1225
  %1664 = vmatpush1.bf16.msra.mxu0 %v1224
  %1665 = vmatprep.subr.bf16.mxu0 %v1345
  %1666 = vmatpush2.bf16.msra.mxu0 %v1344
  %1667 = vmatprep.subr.bf16.mxu0 %v1337
  %1668 = vmatpush2.bf16.msra.mxu0 %v1336
  %1669 = vmatprep.subr.bf16.mxu0 %v1329
  %1670 = vmatpush2.bf16.msra.mxu0 %v1328
  %1671 = vmatprep.subr.bf16.mxu0 %v1321
  %1672 = vmatpush2.bf16.msra.mxu0 %v1320
  %1673 = vmatprep.subr.bf16.mxu0 %v1313
  %1674 = vmatpush2.bf16.msra.mxu0 %v1312
  %1675 = vmatprep.subr.bf16.mxu0 %v1305
  %1676 = vmatpush2.bf16.msra.mxu0 %v1304
  %1677 = vmatprep.subr.bf16.mxu0 %v1297
  %1678 = vmatpush2.bf16.msra.mxu0 %v1296
  %1679 = vmatprep.subr.bf16.mxu0 %v1289
  %1680 = vmatpush2.bf16.msra.mxu0 %v1288
  %1681 = vmatprep.mubr.bf16.mxu0 %v323
  %1682 = vmatmul.mubr.bf16.gmra.mxu0 %v322
  %v1683 = vpop.f32.mrf.mxu0
  %v1684 = vadd.f32 %v1643, %v1683
  %v1685 = vpop.f32.mrf.mxu0
  %v1686 = vadd.f32 %v1645, %v1685
  %v1687 = vpop.f32.mrf.mxu0
  %v1688 = vpop.f32.mrf.mxu0
  %1689 = vdwg.mxu0
  %1690 = vmatprep.subr.bf16.mxu0 %v1155
  %1691 = vmatpush1.bf16.msra.mxu0 %v1154
  %1692 = vmatprep.subr.bf16.mxu0 %v1147
  %1693 = vmatpush1.bf16.msra.mxu0 %v1146
  %1694 = vmatprep.subr.bf16.mxu0 %v1139
  %1695 = vmatpush1.bf16.msra.mxu0 %v1138
  %1696 = vmatprep.subr.bf16.mxu0 %v1131
  %1697 = vmatpush1.bf16.msra.mxu0 %v1130
  %1698 = vmatprep.subr.bf16.mxu0 %v1123
  %1699 = vmatpush1.bf16.msra.mxu0 %v1122
  %1700 = vmatprep.subr.bf16.mxu0 %v1115
  %1701 = vmatpush1.bf16.msra.mxu0 %v1114
  %1702 = vmatprep.subr.bf16.mxu0 %v1107
  %1703 = vmatpush1.bf16.msra.mxu0 %v1106
  %1704 = vmatprep.subr.bf16.mxu0 %v1099
  %1705 = vmatpush1.bf16.msra.mxu0 %v1098
  %1706 = vmatprep.subr.bf16.mxu0 %v1219
  %1707 = vmatpush2.bf16.msra.mxu0 %v1218
  %1708 = vmatprep.subr.bf16.mxu0 %v1211
  %1709 = vmatpush2.bf16.msra.mxu0 %v1210
  %1710 = vmatprep.subr.bf16.mxu0 %v1203
  %1711 = vmatpush2.bf16.msra.mxu0 %v1202
  %1712 = vmatprep.subr.bf16.mxu0 %v1195
  %1713 = vmatpush2.bf16.msra.mxu0 %v1194
  %1714 = vmatprep.subr.bf16.mxu0 %v1187
  %1715 = vmatpush2.bf16.msra.mxu0 %v1186
  %1716 = vmatprep.subr.bf16.mxu0 %v1179
  %1717 = vmatpush2.bf16.msra.mxu0 %v1178
  %1718 = vmatprep.subr.bf16.mxu0 %v1171
  %1719 = vmatpush2.bf16.msra.mxu0 %v1170
  %1720 = vmatprep.subr.bf16.mxu0 %v1163
  %1721 = vmatpush2.bf16.msra.mxu0 %v1162
  %1722 = vmatprep.mubr.bf16.mxu0 %v321
  %1723 = vmatmul.mubr.bf16.gmra.mxu0 %v320
  %v1724 = vpop.f32.mrf.mxu0
  %v1725 = vadd.f32 %v285, %v1724
  %v1726 = vpop.f32.mrf.mxu0
  %v1727 = vadd.f32 %v289, %v1726
  %v1728 = vpop.f32.mrf.mxu0
  %v1729 = vpop.f32.mrf.mxu0
  %1730 = vdwg.mxu0
  %1731 = vmatprep.subr.bf16.mxu0 %v1283
  %1732 = vmatpush1.bf16.msra.mxu0 %v1282
  %1733 = vmatprep.subr.bf16.mxu0 %v1275
  %1734 = vmatpush1.bf16.msra.mxu0 %v1274
  %1735 = vmatprep.subr.bf16.mxu0 %v1267
  %1736 = vmatpush1.bf16.msra.mxu0 %v1266
  %1737 = vmatprep.subr.bf16.mxu0 %v1259
  %1738 = vmatpush1.bf16.msra.mxu0 %v1258
  %1739 = vmatprep.subr.bf16.mxu0 %v1251
  %1740 = vmatpush1.bf16.msra.mxu0 %v1250
  %1741 = vmatprep.subr.bf16.mxu0 %v1243
  %1742 = vmatpush1.bf16.msra.mxu0 %v1242
  %1743 = vmatprep.subr.bf16.mxu0 %v1235
  %1744 = vmatpush1.bf16.msra.mxu0 %v1234
  %1745 = vmatprep.subr.bf16.mxu0 %v1227
  %1746 = vmatpush1.bf16.msra.mxu0 %v1226
  %1747 = vmatprep.subr.bf16.mxu0 %v1347
  %1748 = vmatpush2.bf16.msra.mxu0 %v1346
  %1749 = vmatprep.subr.bf16.mxu0 %v1339
  %1750 = vmatpush2.bf16.msra.mxu0 %v1338
  %1751 = vmatprep.subr.bf16.mxu0 %v1331
  %1752 = vmatpush2.bf16.msra.mxu0 %v1330
  %1753 = vmatprep.subr.bf16.mxu0 %v1323
  %1754 = vmatpush2.bf16.msra.mxu0 %v1322
  %1755 = vmatprep.subr.bf16.mxu0 %v1315
  %1756 = vmatpush2.bf16.msra.mxu0 %v1314
  %1757 = vmatprep.subr.bf16.mxu0 %v1307
  %1758 = vmatpush2.bf16.msra.mxu0 %v1306
  %1759 = vmatprep.subr.bf16.mxu0 %v1299
  %1760 = vmatpush2.bf16.msra.mxu0 %v1298
  %1761 = vmatprep.subr.bf16.mxu0 %v1291
  %1762 = vmatpush2.bf16.msra.mxu0 %v1290
  %1763 = vmatprep.mubr.bf16.mxu0 %v323
  %1764 = vmatmul.mubr.bf16.gmra.mxu0 %v322
  %v1765 = vpop.f32.mrf.mxu0
  %v1766 = vadd.f32 %v1725, %v1765
  %v1767 = vpop.f32.mrf.mxu0
  %v1768 = vadd.f32 %v1727, %v1767
  %v1769 = vpop.f32.mrf.mxu0
  %v1770 = vpop.f32.mrf.mxu0
  %1771 = vdwg.mxu0
  %1772 = vmatprep.subr.bf16.mxu0 %v1157
  %1773 = vmatpush1.bf16.msra.mxu0 %v1156
  %1774 = vmatprep.subr.bf16.mxu0 %v1149
  %1775 = vmatpush1.bf16.msra.mxu0 %v1148
  %1776 = vmatprep.subr.bf16.mxu0 %v1141
  %1777 = vmatpush1.bf16.msra.mxu0 %v1140
  %1778 = vmatprep.subr.bf16.mxu0 %v1133
  %1779 = vmatpush1.bf16.msra.mxu0 %v1132
  %1780 = vmatprep.subr.bf16.mxu0 %v1125
  %1781 = vmatpush1.bf16.msra.mxu0 %v1124
  %1782 = vmatprep.subr.bf16.mxu0 %v1117
  %1783 = vmatpush1.bf16.msra.mxu0 %v1116
  %1784 = vmatprep.subr.bf16.mxu0 %v1109
  %1785 = vmatpush1.bf16.msra.mxu0 %v1108
  %1786 = vmatprep.subr.bf16.mxu0 %v1101
  %1787 = vmatpush1.bf16.msra.mxu0 %v1100
  %1788 = vmatprep.subr.bf16.mxu0 %v1221
  %1789 = vmatpush2.bf16.msra.mxu0 %v1220
  %1790 = vmatprep.subr.bf16.mxu0 %v1213
  %1791 = vmatpush2.bf16.msra.mxu0 %v1212
  %1792 = vmatprep.subr.bf16.mxu0 %v1205
  %1793 = vmatpush2.bf16.msra.mxu0 %v1204
  %1794 = vmatprep.subr.bf16.mxu0 %v1197
  %1795 = vmatpush2.bf16.msra.mxu0 %v1196
  %1796 = vmatprep.subr.bf16.mxu0 %v1189
  %1797 = vmatpush2.bf16.msra.mxu0 %v1188
  %1798 = vmatprep.subr.bf16.mxu0 %v1181
  %1799 = vmatpush2.bf16.msra.mxu0 %v1180
  %1800 = vmatprep.subr.bf16.mxu0 %v1173
  %1801 = vmatpush2.bf16.msra.mxu0 %v1172
  %1802 = vmatprep.subr.bf16.mxu0 %v1165
  %1803 = vmatpush2.bf16.msra.mxu0 %v1164
  %1804 = vmatprep.mubr.bf16.mxu0 %v321
  %1805 = vmatmul.mubr.bf16.gmra.mxu0 %v320
  %v1806 = vpop.f32.mrf.mxu0
  %v1807 = vadd.f32 %v293, %v1806
  %v1808 = vpop.f32.mrf.mxu0
  %v1809 = vadd.f32 %v297, %v1808
  %v1810 = vpop.f32.mrf.mxu0
  %v1811 = vpop.f32.mrf.mxu0
  %1812 = vdwg.mxu0
  %1813 = vmatprep.subr.bf16.mxu0 %v1285
  %1814 = vmatpush1.bf16.msra.mxu0 %v1284
  %1815 = vmatprep.subr.bf16.mxu0 %v1277
  %1816 = vmatpush1.bf16.msra.mxu0 %v1276
  %1817 = vmatprep.subr.bf16.mxu0 %v1269
  %1818 = vmatpush1.bf16.msra.mxu0 %v1268
  %1819 = vmatprep.subr.bf16.mxu0 %v1261
  %1820 = vmatpush1.bf16.msra.mxu0 %v1260
  %1821 = vmatprep.subr.bf16.mxu0 %v1253
  %1822 = vmatpush1.bf16.msra.mxu0 %v1252
  %1823 = vmatprep.subr.bf16.mxu0 %v1245
  %1824 = vmatpush1.bf16.msra.mxu0 %v1244
  %1825 = vmatprep.subr.bf16.mxu0 %v1237
  %1826 = vmatpush1.bf16.msra.mxu0 %v1236
  %1827 = vmatprep.subr.bf16.mxu0 %v1229
  %1828 = vmatpush1.bf16.msra.mxu0 %v1228
  %1829 = vmatprep.subr.bf16.mxu0 %v1349
  %1830 = vmatpush2.bf16.msra.mxu0 %v1348
  %1831 = vmatprep.subr.bf16.mxu0 %v1341
  %1832 = vmatpush2.bf16.msra.mxu0 %v1340
  %1833 = vmatprep.subr.bf16.mxu0 %v1333
  %1834 = vmatpush2.bf16.msra.mxu0 %v1332
  %1835 = vmatprep.subr.bf16.mxu0 %v1325
  %1836 = vmatpush2.bf16.msra.mxu0 %v1324
  %1837 = vmatprep.subr.bf16.mxu0 %v1317
  %1838 = vmatpush2.bf16.msra.mxu0 %v1316
  %1839 = vmatprep.subr.bf16.mxu0 %v1309
  %1840 = vmatpush2.bf16.msra.mxu0 %v1308
  %1841 = vmatprep.subr.bf16.mxu0 %v1301
  %1842 = vmatpush2.bf16.msra.mxu0 %v1300
  %1843 = vmatprep.subr.bf16.mxu0 %v1293
  %1844 = vmatpush2.bf16.msra.mxu0 %v1292
  %1845 = vmatprep.mubr.bf16.mxu0 %v323
  %1846 = vmatmul.mubr.bf16.gmra.mxu0 %v322
  %v1847 = vpop.f32.mrf.mxu0
  %v1848 = vadd.f32 %v1807, %v1847
  %v1849 = vpop.f32.mrf.mxu0
  %v1850 = vadd.f32 %v1809, %v1849
  %v1851 = vpop.f32.mrf.mxu0
  %v1852 = vpop.f32.mrf.mxu0
  %1853 = vdwg.mxu0
  %1854 = vmatprep.subr.bf16.mxu0 %v1159
  %1855 = vmatpush1.bf16.msra.mxu0 %v1158
  %1856 = vmatprep.subr.bf16.mxu0 %v1151
  %1857 = vmatpush1.bf16.msra.mxu0 %v1150
  %1858 = vmatprep.subr.bf16.mxu0 %v1143
  %1859 = vmatpush1.bf16.msra.mxu0 %v1142
  %1860 = vmatprep.subr.bf16.mxu0 %v1135
  %1861 = vmatpush1.bf16.msra.mxu0 %v1134
  %1862 = vmatprep.subr.bf16.mxu0 %v1127
  %1863 = vmatpush1.bf16.msra.mxu0 %v1126
  %1864 = vmatprep.subr.bf16.mxu0 %v1119
  %1865 = vmatpush1.bf16.msra.mxu0 %v1118
  %1866 = vmatprep.subr.bf16.mxu0 %v1111
  %1867 = vmatpush1.bf16.msra.mxu0 %v1110
  %1868 = vmatprep.subr.bf16.mxu0 %v1103
  %1869 = vmatpush1.bf16.msra.mxu0 %v1102
  %1870 = vmatprep.subr.bf16.mxu0 %v1223
  %1871 = vmatpush2.bf16.msra.mxu0 %v1222
  %1872 = vmatprep.subr.bf16.mxu0 %v1215
  %1873 = vmatpush2.bf16.msra.mxu0 %v1214
  %1874 = vmatprep.subr.bf16.mxu0 %v1207
  %1875 = vmatpush2.bf16.msra.mxu0 %v1206
  %1876 = vmatprep.subr.bf16.mxu0 %v1199
  %1877 = vmatpush2.bf16.msra.mxu0 %v1198
  %1878 = vmatprep.subr.bf16.mxu0 %v1191
  %1879 = vmatpush2.bf16.msra.mxu0 %v1190
  %1880 = vmatprep.subr.bf16.mxu0 %v1183
  %1881 = vmatpush2.bf16.msra.mxu0 %v1182
  %1882 = vmatprep.subr.bf16.mxu0 %v1175
  %1883 = vmatpush2.bf16.msra.mxu0 %v1174
  %1884 = vmatprep.subr.bf16.mxu0 %v1167
  %1885 = vmatpush2.bf16.msra.mxu0 %v1166
  %1886 = vmatprep.mubr.bf16.mxu0 %v321
  %1887 = vmatmul.mubr.bf16.gmra.mxu0 %v320
  %v1888 = vpop.f32.mrf.mxu0
  %v1889 = vadd.f32 %v301, %v1888
  %v1890 = vpop.f32.mrf.mxu0
  %v1891 = vadd.f32 %v305, %v1890
  %v1892 = vpop.f32.mrf.mxu0
  %v1893 = vpop.f32.mrf.mxu0
  %1894 = vdwg.mxu0
  %1895 = vmatprep.subr.bf16.mxu0 %v1287
  %1896 = vmatpush1.bf16.msra.mxu0 %v1286
  %1897 = vmatprep.subr.bf16.mxu0 %v1279
  %1898 = vmatpush1.bf16.msra.mxu0 %v1278
  %1899 = vmatprep.subr.bf16.mxu0 %v1271
  %1900 = vmatpush1.bf16.msra.mxu0 %v1270
  %1901 = vmatprep.subr.bf16.mxu0 %v1263
  %1902 = vmatpush1.bf16.msra.mxu0 %v1262
  %1903 = vmatprep.subr.bf16.mxu0 %v1255
  %1904 = vmatpush1.bf16.msra.mxu0 %v1254
  %1905 = vmatprep.subr.bf16.mxu0 %v1247
  %1906 = vmatpush1.bf16.msra.mxu0 %v1246
  %1907 = vmatprep.subr.bf16.mxu0 %v1239
  %1908 = vmatpush1.bf16.msra.mxu0 %v1238
  %1909 = vmatprep.subr.bf16.mxu0 %v1231
  %1910 = vmatpush1.bf16.msra.mxu0 %v1230
  %1911 = vmatprep.subr.bf16.mxu0 %v1351
  %1912 = vmatpush2.bf16.msra.mxu0 %v1350
  %1913 = vmatprep.subr.bf16.mxu0 %v1343
  %1914 = vmatpush2.bf16.msra.mxu0 %v1342
  %1915 = vmatprep.subr.bf16.mxu0 %v1335
  %1916 = vmatpush2.bf16.msra.mxu0 %v1334
  %1917 = vmatprep.subr.bf16.mxu0 %v1327
  %1918 = vmatpush2.bf16.msra.mxu0 %v1326
  %1919 = vmatprep.subr.bf16.mxu0 %v1319
  %1920 = vmatpush2.bf16.msra.mxu0 %v1318
  %1921 = vmatprep.subr.bf16.mxu0 %v1311
  %1922 = vmatpush2.bf16.msra.mxu0 %v1310
  %1923 = vmatprep.subr.bf16.mxu0 %v1303
  %1924 = vmatpush2.bf16.msra.mxu0 %v1302
  %1925 = vmatprep.subr.bf16.mxu0 %v1295
  %1926 = vmatpush2.bf16.msra.mxu0 %v1294
  %1927 = vmatprep.mubr.bf16.mxu0 %v323
  %1928 = vmatmul.mubr.bf16.gmra.mxu0 %v322
  %v1929 = vpop.f32.mrf.mxu0
  %v1930 = vadd.f32 %v1889, %v1929
  %v1931 = vpop.f32.mrf.mxu0
  %v1932 = vadd.f32 %v1891, %v1931
  %v1933 = vpop.f32.mrf.mxu0
  %v1934 = vpop.f32.mrf.mxu0
  %1935 = vdwg.mxu0
  %v1936 = vmax.f32 %v1684, 0.0
  %v1937 = vmax.f32 %v1686, 0.0
  %v1938 = vmax.f32 %v1766, 0.0
  %v1939 = vmax.f32 %v1768, 0.0
  %v1940 = vmax.f32 %v1848, 0.0
  %v1941 = vmax.f32 %v1850, 0.0
  %v1942 = vmax.f32 %v1930, 0.0
  %v1943 = vmax.f32 %v1932, 0.0
  %1944 = vst [vmem:[%s3] sm:$0xff] %v1936
  %1945 = vst [vmem:[%s3 + $0x8] sm:$0xff] %v1937
  %1946 = vst [vmem:[%s3 + $0x10] sm:$0xff] %v1938
  %1947 = vst [vmem:[%s3 + $0x18] sm:$0xff] %v1939
  %1948 = vst [vmem:[%s3 + $0x20] sm:$0xff] %v1940
  %1949 = vst [vmem:[%s3 + $0x28] sm:$0xff] %v1941
  %1950 = vst [vmem:[%s3 + $0x30] sm:$0xff] %v1942
  %1951 = vst [vmem:[%s3 + $0x38] sm:$0xff] %v1943
  // Predicated region
  $region14: #{network_forward.16} parent=0 // pred_check
    _
  $region15: #{network_forward.16} parent=0 // pred_check_branch
    %1953 = sbr.rel (0) target = $region17
  $region16: #{network_forward.16} parent=0 // pred_region
    _
  $region17: #{network_forward.16} parent=0 // pred_fallthru
    _
  // Predicated region
  $region18: #{network_forward.16} parent=0 // pred_check
    _
  $region19: #{network_forward.16} parent=0 // pred_check_branch
    %1955 = sbr.rel (0) target = $region21
  $region20: #{network_forward.16} parent=0 // pred_region
    _
  $region21: #{network_forward.16} parent=0 // pred_fallthru
    _

// kernel: network_forward.18
$region0: #{network_forward.18}
  #allocation0 [shape = 'u32[]', space=smem, size = 0x4, offset = 0x4, fixed_abs, tag = 'smem constant byte address 0x4 - core index']
  #allocation1 [shape = 'u32[144,128]{1,0:T(1,128)}', space=vmem, size = 0x12000, scoped, tag = 'internal scratch']
  %s0 = inlined_call_operand.vmem [shape: bf16[104,288], index: 0, kind: input, shape index: {}]
  %s1 = inlined_call_operand.vmem [shape: bf16[288,128], index: 1, kind: input, shape index: {}]
  %s2 = inlined_call_operand.vmem [shape: f32[1,128], index: 2, kind: input, shape index: {}]
  %s3 = inlined_call_operand.vmem [shape: f32[104,128], index: 3, kind: output, shape index: {}]
  %s4 = sld [smem:[#allocation0]]
  $region22: #{network_forward.18} parent=0
    _
  %s6 = ssub.s32 1, %s4
  %s7 = scalar_select 0, %s6, %s4
  // Predicated region
  $region2: #{network_forward.18} parent=0 // pred_check
    _
  $region3: #{network_forward.18} parent=0 // pred_check_branch
    %9 = sbr.rel (0) target = $region5
  $region4: #{network_forward.18} parent=0 // pred_region
    _
  $region5: #{network_forward.18} parent=0 // pred_fallthru
    _
  // Predicated region
  $region6: #{network_forward.18} parent=0 // pred_check
    _
  $region7: #{network_forward.18} parent=0 // pred_check_branch
    %11 = sbr.rel (0) target = $region9
  $region8: #{network_forward.18} parent=0 // pred_region
    _
  $region9: #{network_forward.18} parent=0 // pred_fallthru
    _
  // Predicated region
  $region10: #{network_forward.18} parent=0 // pred_check
    _
  $region11: #{network_forward.18} parent=0 // pred_check_branch
    %13 = sbr.rel (0) target = $region13
  $region12: #{network_forward.18} parent=0 // pred_region
    _
  $region13: #{network_forward.18} parent=0 // pred_fallthru
    _
  %v15 = vld [vmem:[%s0] sm:$0xff]
  %v16 = vld [vmem:[%s0 + $0x8] sm:$0xf]
  %v17 = vld [vmem:[%s0 + $0xc] sm:$0xff]
  %v18 = vld [vmem:[%s0 + $0x14] sm:$0xf]
  %v19 = vld [vmem:[%s0 + $0x18] sm:$0xff]
  %v20 = vld [vmem:[%s0 + $0x20] sm:$0xf]
  %v21 = vld [vmem:[%s0 + $0x24] sm:$0xff]
  %v22 = vld [vmem:[%s0 + $0x2c] sm:$0xf]
  %v23 = vld [vmem:[%s0 + $0x30] sm:$0xff]
  %v24 = vld [vmem:[%s0 + $0x38] sm:$0xf]
  %v25 = vld [vmem:[%s0 + $0x3c] sm:$0xff]
  %v26 = vld [vmem:[%s0 + $0x44] sm:$0xf]
  %v27 = vld [vmem:[%s0 + $0x48] sm:$0xff]
  %v28 = vld [vmem:[%s0 + $0x50] sm:$0xf]
  %v29 = vld [vmem:[%s0 + $0x54] sm:$0xff]
  %v30 = vld [vmem:[%s0 + $0x5c] sm:$0xf]
  %v31 = vld [vmem:[%s0 + $0x60] sm:$0xff]
  %v32 = vld [vmem:[%s0 + $0x68] sm:$0xf]
  %v33 = vld [vmem:[%s0 + $0x6c] sm:$0xff]
  %v34 = vld [vmem:[%s0 + $0x74] sm:$0xf]
  %v35 = vld [vmem:[%s0 + $0x78] sm:$0xff]
  %v36 = vld [vmem:[%s0 + $0x80] sm:$0xf]
  %v37 = vld [vmem:[%s0 + $0x84] sm:$0xff]
  %v38 = vld [vmem:[%s0 + $0x8c] sm:$0xf]
  %v39 = vld [vmem:[%s0 + $0x90] sm:$0xff]
  %v40 = vld [vmem:[%s0 + $0x98] sm:$0xf]
  %v41 = vld [vmem:[%s1] sm:$0xf]
  %v42 = vld [vmem:[%s1 + $0x4] sm:$0xf]
  %v43 = vld [vmem:[%s1 + $0x8] sm:$0xf]
  %v44 = vld [vmem:[%s1 + $0xc] sm:$0xf]
  %v45 = vld [vmem:[%s1 + $0x10] sm:$0xf]
  %v46 = vld [vmem:[%s1 + $0x14] sm:$0xf]
  %v47 = vld [vmem:[%s1 + $0x18] sm:$0xf]
  %v48 = vld [vmem:[%s1 + $0x1c] sm:$0xf]
  %v49 = vld [vmem:[%s1 + $0x20] sm:$0xf]
  %v50 = vld [vmem:[%s1 + $0x24] sm:$0xf]
  %v51 = vld [vmem:[%s1 + $0x28] sm:$0xf]
  %v52 = vld [vmem:[%s1 + $0x2c] sm:$0xf]
  %v53 = vld [vmem:[%s1 + $0x30] sm:$0xf]
  %v54 = vld [vmem:[%s1 + $0x34] sm:$0xf]
  %v55 = vld [vmem:[%s1 + $0x38] sm:$0xf]
  %v56 = vld [vmem:[%s1 + $0x3c] sm:$0xf]
  %v57 = vld [vmem:[%s1 + $0x40] sm:$0xf]
  %v58 = vld [vmem:[%s1 + $0x44] sm:$0xf]
  %v59 = vld [vmem:[%s1 + $0x48] sm:$0xf]
  %v60 = vld [vmem:[%s1 + $0x4c] sm:$0xf]
  %v61 = vld [vmem:[%s1 + $0x50] sm:$0xf]
  %v62 = vld [vmem:[%s1 + $0x54] sm:$0xf]
  %v63 = vld [vmem:[%s1 + $0x58] sm:$0xf]
  %v64 = vld [vmem:[%s1 + $0x5c] sm:$0xf]
  %v65 = vld [vmem:[%s1 + $0x60] sm:$0xf]
  %v66 = vld [vmem:[%s1 + $0x64] sm:$0xf]
  %v67 = vld [vmem:[%s1 + $0x68] sm:$0xf]
  %v68 = vld [vmem:[%s1 + $0x6c] sm:$0xf]
  %v69 = vld [vmem:[%s1 + $0x70] sm:$0xf]
  %v70 = vld [vmem:[%s1 + $0x74] sm:$0xf]
  %v71 = vld [vmem:[%s1 + $0x78] sm:$0xf]
  %v72 = vld [vmem:[%s1 + $0x7c] sm:$0xf]
  %v73 = vld [vmem:[%s1 + $0x80] sm:$0xf]
  %v74 = vld [vmem:[%s1 + $0x84] sm:$0xf]
  %v75 = vld [vmem:[%s1 + $0x88] sm:$0xf]
  %v76 = vld [vmem:[%s1 + $0x8c] sm:$0xf]
  %v77 = vld [vmem:[%s2] sm:$0x1]
  %v79 = vlaneseq
  %v80 = vshrl.u32 %v79, 7
  %v81 = vsub.s32 0, %v80
  %v82 = vrot.slane %v77, %v81
  %v110 = vunpack.c.l.b16 %v15
  %v111 = vunpack.c.h.b16 %v15
  %v112 = vunpack.c.l.b16 %v16
  %v113 = vunpack.c.l.b16 %v17
  %v114 = vunpack.c.h.b16 %v17
  %v115 = vunpack.c.l.b16 %v18
  %v116 = vunpack.c.l.b16 %v19
  %v117 = vunpack.c.h.b16 %v19
  %v118 = vunpack.c.l.b16 %v20
  %v119 = vunpack.c.l.b16 %v21
  %v120 = vunpack.c.h.b16 %v21
  %v121 = vunpack.c.l.b16 %v22
  %v122 = vunpack.c.l.b16 %v23
  %v123 = vunpack.c.h.b16 %v23
  %v124 = vunpack.c.l.b16 %v24
  %v125 = vunpack.c.l.b16 %v25
  %v126 = vunpack.c.h.b16 %v25
  %v127 = vunpack.c.l.b16 %v26
  %v128 = vunpack.c.l.b16 %v27
  %v129 = vunpack.c.h.b16 %v27
  %v130 = vunpack.c.l.b16 %v28
  %v131 = vunpack.c.l.b16 %v29
  %v132 = vunpack.c.h.b16 %v29
  %v133 = vunpack.c.l.b16 %v30
  %v134 = vunpack.c.l.b16 %v31
  %v135 = vunpack.c.h.b16 %v31
  %v136 = vunpack.c.l.b16 %v32
  %v137 = vunpack.c.l.b16 %v33
  %v138 = vunpack.c.h.b16 %v33
  %v139 = vunpack.c.l.b16 %v34
  %v140 = vunpack.c.l.b16 %v35
  %v141 = vunpack.c.h.b16 %v35
  %v142 = vunpack.c.l.b16 %v36
  %v143 = vunpack.c.l.b16 %v37
  %v144 = vunpack.c.h.b16 %v37
  %v145 = vunpack.c.l.b16 %v38
  %v146 = vunpack.c.l.b16 %v39
  %v147 = vunpack.c.h.b16 %v39
  %v148 = vunpack.c.l.b16 %v40
  %v149 = vpack.c.b16 %v113, %v110
  %v150 = vpack.c.b16 %v114, %v111
  %v151 = vpack.c.b16 %v115, %v112
  %v152 = vpack.c.b16 %v119, %v116
  %v153 = vpack.c.b16 %v120, %v117
  %v154 = vpack.c.b16 %v121, %v118
  %v155 = vpack.c.b16 %v125, %v122
  %v156 = vpack.c.b16 %v126, %v123
  %v157 = vpack.c.b16 %v127, %v124
  %v158 = vpack.c.b16 %v131, %v128
  %v159 = vpack.c.b16 %v132, %v129
  %v160 = vpack.c.b16 %v133, %v130
  %v161 = vpack.c.b16 %v137, %v134
  %v162 = vpack.c.b16 %v138, %v135
  %v163 = vpack.c.b16 %v139, %v136
  %v164 = vpack.c.b16 %v143, %v140
  %v165 = vpack.c.b16 %v144, %v141
  %v166 = vpack.c.b16 %v145, %v142
  %v167 = vpack.c.b16 %v146, %v146
  %v168 = vpack.c.b16 %v147, %v147
  %v169 = vpack.c.b16 %v148, %v148
  %v220 = vunpack.c.l.b16 %v41
  %v221 = vunpack.c.l.b16 %v42
  %v222 = vunpack.c.l.b16 %v43
  %v223 = vunpack.c.l.b16 %v44
  %v224 = vunpack.c.l.b16 %v45
  %v225 = vunpack.c.l.b16 %v46
  %v226 = vunpack.c.l.b16 %v47
  %v227 = vunpack.c.l.b16 %v48
  %v228 = vunpack.c.l.b16 %v49
  %v229 = vunpack.c.l.b16 %v50
  %v230 = vunpack.c.l.b16 %v51
  %v231 = vunpack.c.l.b16 %v52
  %v232 = vunpack.c.l.b16 %v53
  %v233 = vunpack.c.l.b16 %v54
  %v234 = vunpack.c.l.b16 %v55
  %v235 = vunpack.c.l.b16 %v56
  %v236 = vunpack.c.l.b16 %v57
  %v237 = vunpack.c.l.b16 %v58
  %v238 = vunpack.c.l.b16 %v59
  %v239 = vunpack.c.l.b16 %v60
  %v240 = vunpack.c.l.b16 %v61
  %v241 = vunpack.c.l.b16 %v62
  %v242 = vunpack.c.l.b16 %v63
  %v243 = vunpack.c.l.b16 %v64
  %v244 = vunpack.c.l.b16 %v65
  %v245 = vunpack.c.l.b16 %v66
  %v246 = vunpack.c.l.b16 %v67
  %v247 = vunpack.c.l.b16 %v68
  %v248 = vunpack.c.l.b16 %v69
  %v249 = vunpack.c.l.b16 %v70
  %v250 = vunpack.c.l.b16 %v71
  %v251 = vunpack.c.l.b16 %v72
  %v252 = vunpack.c.l.b16 %v73
  %v253 = vunpack.c.l.b16 %v74
  %v254 = vunpack.c.l.b16 %v75
  %v255 = vunpack.c.l.b16 %v76
  %v256 = vpack.c.b16 %v221, %v220
  %v257 = vpack.c.b16 %v223, %v222
  %v258 = vpack.c.b16 %v225, %v224
  %v259 = vpack.c.b16 %v227, %v226
  %v260 = vpack.c.b16 %v229, %v228
  %v261 = vpack.c.b16 %v231, %v230
  %v262 = vpack.c.b16 %v233, %v232
  %v263 = vpack.c.b16 %v235, %v234
  %v264 = vpack.c.b16 %v237, %v236
  %v265 = vpack.c.b16 %v239, %v238
  %v266 = vpack.c.b16 %v241, %v240
  %v267 = vpack.c.b16 %v243, %v242
  %v268 = vpack.c.b16 %v245, %v244
  %v269 = vpack.c.b16 %v247, %v246
  %v270 = vpack.c.b16 %v249, %v248
  %v271 = vpack.c.b16 %v251, %v250
  %v272 = vpack.c.b16 %v253, %v252
  %v273 = vpack.c.b16 %v255, %v254
  %vm292 = vcmask 261120
  %v294 = vsel %vm292, %v151, 0
  %v297 = vsel %vm292, %v154, 0
  %v300 = vsel %vm292, %v157, 0
  %v303 = vsel %vm292, %v160, 0
  %v306 = vsel %vm292, %v163, 0
  %v309 = vsel %vm292, %v166, 0
  %v312 = vsel %vm292, %v169, 0
  %314 = vmatprep.subr.bf16.mxu0 0
  %315 = vmatpush1.bf16.msra.mxu0 %v263
  %316 = vmatprep.subr.bf16.mxu0 0
  %317 = vmatpush1.bf16.msra.mxu0 %v262
  %318 = vmatprep.subr.bf16.mxu0 0
  %319 = vmatpush1.bf16.msra.mxu0 %v261
  %320 = vmatprep.subr.bf16.mxu0 0
  %321 = vmatpush1.bf16.msra.mxu0 %v260
  %322 = vmatprep.subr.bf16.mxu0 0
  %323 = vmatpush1.bf16.msra.mxu0 %v259
  %324 = vmatprep.subr.bf16.mxu0 0
  %325 = vmatpush1.bf16.msra.mxu0 %v258
  %326 = vmatprep.subr.bf16.mxu0 0
  %327 = vmatpush1.bf16.msra.mxu0 %v257
  %328 = vmatprep.subr.bf16.mxu0 0
  %329 = vmatpush1.bf16.msra.mxu0 %v256
  %330 = vmatprep.subr.bf16.mxu0 0
  %331 = vmatpush2.bf16.msra.mxu0 %v271
  %332 = vmatprep.subr.bf16.mxu0 0
  %333 = vmatpush2.bf16.msra.mxu0 %v270
  %334 = vmatprep.subr.bf16.mxu0 0
  %335 = vmatpush2.bf16.msra.mxu0 %v269
  %336 = vmatprep.subr.bf16.mxu0 0
  %337 = vmatpush2.bf16.msra.mxu0 %v268
  %338 = vmatprep.subr.bf16.mxu0 0
  %339 = vmatpush2.bf16.msra.mxu0 %v267
  %340 = vmatprep.subr.bf16.mxu0 0
  %341 = vmatpush2.bf16.msra.mxu0 %v266
  %342 = vmatprep.subr.bf16.mxu0 0
  %343 = vmatpush2.bf16.msra.mxu0 %v265
  %344 = vmatprep.subr.bf16.mxu0 0
  %345 = vmatpush2.bf16.msra.mxu0 %v264
  %346 = vmatprep.mubr.bf16.mxu0 %v150
  %347 = vmatmul.mubr.bf16.gmra.mxu0 %v149
  %v348 = vpop.f32.mrf.mxu0
  %v349 = vadd.f32 %v82, %v348
  %v350 = vpop.f32.mrf.mxu0
  %v351 = vpop.f32.mrf.mxu0
  %v352 = vadd.f32 %v82, %v351
  %v353 = vpop.f32.mrf.mxu0
  %354 = vmatprep.mubr.bf16.mxu0 %v153
  %355 = vmatmul.mubr.bf16.gmra.mxu0 %v152
  %v356 = vpop.f32.mrf.mxu0
  %v357 = vadd.f32 %v82, %v356
  %v358 = vpop.f32.mrf.mxu0
  %v359 = vpop.f32.mrf.mxu0
  %v360 = vadd.f32 %v82, %v359
  %v361 = vpop.f32.mrf.mxu0
  %362 = vmatprep.mubr.bf16.mxu0 %v156
  %363 = vmatmul.mubr.bf16.gmra.mxu0 %v155
  %v364 = vpop.f32.mrf.mxu0
  %v365 = vadd.f32 %v82, %v364
  %v366 = vpop.f32.mrf.mxu0
  %v367 = vpop.f32.mrf.mxu0
  %v368 = vadd.f32 %v82, %v367
  %v369 = vpop.f32.mrf.mxu0
  %370 = vmatprep.mubr.bf16.mxu0 %v159
  %371 = vmatmul.mubr.bf16.gmra.mxu0 %v158
  %v372 = vpop.f32.mrf.mxu0
  %v373 = vadd.f32 %v82, %v372
  %v374 = vpop.f32.mrf.mxu0
  %v375 = vpop.f32.mrf.mxu0
  %v376 = vadd.f32 %v82, %v375
  %v377 = vpop.f32.mrf.mxu0
  %378 = vmatprep.mubr.bf16.mxu0 %v162
  %379 = vmatmul.mubr.bf16.gmra.mxu0 %v161
  %v380 = vpop.f32.mrf.mxu0
  %v381 = vadd.f32 %v82, %v380
  %v382 = vpop.f32.mrf.mxu0
  %v383 = vpop.f32.mrf.mxu0
  %v384 = vadd.f32 %v82, %v383
  %v385 = vpop.f32.mrf.mxu0
  %386 = vmatprep.mubr.bf16.mxu0 %v165
  %387 = vmatmul.mubr.bf16.gmra.mxu0 %v164
  %v388 = vpop.f32.mrf.mxu0
  %v389 = vadd.f32 %v82, %v388
  %v390 = vpop.f32.mrf.mxu0
  %v391 = vpop.f32.mrf.mxu0
  %v392 = vadd.f32 %v82, %v391
  %v393 = vpop.f32.mrf.mxu0
  %394 = vmatprep.mubr.bf16.mxu0 %v168
  %395 = vmatmul.mubr.bf16.gmra.mxu0 %v167
  %v396 = vpop.f32.mrf.mxu0
  %v397 = vadd.f32 %v82, %v396
  %v398 = vpop.f32.mrf.mxu0
  %v399 = vpop.f32.mrf.mxu0
  %v400 = vpop.f32.mrf.mxu0
  %401 = vdwg.mxu0
  %402 = vmatprep.subr.bf16.mxu0 0
  %403 = vmatpush1.bf16.msra.mxu0 0
  %404 = vmatprep.subr.bf16.mxu0 0
  %405 = vmatpush1.bf16.msra.mxu0 0
  %406 = vmatprep.subr.bf16.mxu0 0
  %407 = vmatpush1.bf16.msra.mxu0 0
  %408 = vmatprep.subr.bf16.mxu0 0
  %409 = vmatpush1.bf16.msra.mxu0 0
  %410 = vmatprep.subr.bf16.mxu0 0
  %411 = vmatpush1.bf16.msra.mxu0 0
  %412 = vmatprep.subr.bf16.mxu0 0
  %413 = vmatpush1.bf16.msra.mxu0 0
  %414 = vmatprep.subr.bf16.mxu0 0
  %415 = vmatpush1.bf16.msra.mxu0 %v273
  %416 = vmatprep.subr.bf16.mxu0 0
  %417 = vmatpush1.bf16.msra.mxu0 %v272
  %418 = vmatprep.subr.bf16.mxu0 0
  %419 = vmatpush2.bf16.msra.mxu0 0
  %420 = vmatprep.subr.bf16.mxu0 0
  %421 = vmatpush2.bf16.msra.mxu0 0
  %422 = vmatprep.subr.bf16.mxu0 0
  %423 = vmatpush2.bf16.msra.mxu0 0
  %424 = vmatprep.subr.bf16.mxu0 0
  %425 = vmatpush2.bf16.msra.mxu0 0
  %426 = vmatprep.subr.bf16.mxu0 0
  %427 = vmatpush2.bf16.msra.mxu0 0
  %428 = vmatprep.subr.bf16.mxu0 0
  %429 = vmatpush2.bf16.msra.mxu0 0
  %430 = vmatprep.subr.bf16.mxu0 0
  %431 = vmatpush2.bf16.msra.mxu0 0
  %432 = vmatprep.subr.bf16.mxu0 0
  %433 = vmatpush2.bf16.msra.mxu0 0
  %434 = vmatprep.mubr.bf16.mxu0 0
  %435 = vmatmul.mubr.bf16.gmra.mxu0 %v294
  %v436 = vpop.f32.mrf.mxu0
  %v437 = vadd.f32 %v349, %v436
  %v438 = vpop.f32.mrf.mxu0
  %v439 = vpop.f32.mrf.mxu0
  %v440 = vadd.f32 %v352, %v439
  %v441 = vpop.f32.mrf.mxu0
  %442 = vmatprep.mubr.bf16.mxu0 0
  %443 = vmatmul.mubr.bf16.gmra.mxu0 %v297
  %v444 = vpop.f32.mrf.mxu0
  %v445 = vadd.f32 %v357, %v444
  %v446 = vpop.f32.mrf.mxu0
  %v447 = vpop.f32.mrf.mxu0
  %v448 = vadd.f32 %v360, %v447
  %v449 = vpop.f32.mrf.mxu0
  %450 = vmatprep.mubr.bf16.mxu0 0
  %451 = vmatmul.mubr.bf16.gmra.mxu0 %v300
  %v452 = vpop.f32.mrf.mxu0
  %v453 = vadd.f32 %v365, %v452
  %v454 = vpop.f32.mrf.mxu0
  %v455 = vpop.f32.mrf.mxu0
  %v456 = vadd.f32 %v368, %v455
  %v457 = vpop.f32.mrf.mxu0
  %458 = vmatprep.mubr.bf16.mxu0 0
  %459 = vmatmul.mubr.bf16.gmra.mxu0 %v303
  %v460 = vpop.f32.mrf.mxu0
  %v461 = vadd.f32 %v373, %v460
  %v462 = vpop.f32.mrf.mxu0
  %v463 = vpop.f32.mrf.mxu0
  %v464 = vadd.f32 %v376, %v463
  %v465 = vpop.f32.mrf.mxu0
  %466 = vmatprep.mubr.bf16.mxu0 0
  %467 = vmatmul.mubr.bf16.gmra.mxu0 %v306
  %v468 = vpop.f32.mrf.mxu0
  %v469 = vadd.f32 %v381, %v468
  %v470 = vpop.f32.mrf.mxu0
  %v471 = vpop.f32.mrf.mxu0
  %v472 = vadd.f32 %v384, %v471
  %v473 = vpop.f32.mrf.mxu0
  %474 = vmatprep.mubr.bf16.mxu0 0
  %475 = vmatmul.mubr.bf16.gmra.mxu0 %v309
  %v476 = vpop.f32.mrf.mxu0
  %v477 = vadd.f32 %v389, %v476
  %v478 = vpop.f32.mrf.mxu0
  %v479 = vpop.f32.mrf.mxu0
  %v480 = vadd.f32 %v392, %v479
  %v481 = vpop.f32.mrf.mxu0
  %482 = vmatprep.mubr.bf16.mxu0 0
  %483 = vmatmul.mubr.bf16.gmra.mxu0 %v312
  %v484 = vpop.f32.mrf.mxu0
  %v485 = vadd.f32 %v397, %v484
  %v486 = vpop.f32.mrf.mxu0
  %v487 = vpop.f32.mrf.mxu0
  %v488 = vpop.f32.mrf.mxu0
  %489 = vdwg.mxu0
  %v490 = vmax.f32 %v437, 0.0
  %v491 = vmax.f32 %v440, 0.0
  %v492 = vmax.f32 %v445, 0.0
  %v493 = vmax.f32 %v448, 0.0
  %v494 = vmax.f32 %v453, 0.0
  %v495 = vmax.f32 %v456, 0.0
  %v496 = vmax.f32 %v461, 0.0
  %v497 = vmax.f32 %v464, 0.0
  %v498 = vmax.f32 %v469, 0.0
  %v499 = vmax.f32 %v472, 0.0
  %v500 = vmax.f32 %v477, 0.0
  %v501 = vmax.f32 %v480, 0.0
  %v502 = vmax.f32 %v485, 0.0
  %503 = vst [vmem:[%s3] sm:$0xff] %v490
  %504 = vst [vmem:[%s3 + $0x8] sm:$0xff] %v491
  %505 = vst [vmem:[%s3 + $0x10] sm:$0xff] %v492
  %506 = vst [vmem:[%s3 + $0x18] sm:$0xff] %v493
  %507 = vst [vmem:[%s3 + $0x20] sm:$0xff] %v494
  %508 = vst [vmem:[%s3 + $0x28] sm:$0xff] %v495
  %509 = vst [vmem:[%s3 + $0x30] sm:$0xff] %v496
  %510 = vst [vmem:[%s3 + $0x38] sm:$0xff] %v497
  %511 = vst [vmem:[%s3 + $0x40] sm:$0xff] %v498
  %512 = vst [vmem:[%s3 + $0x48] sm:$0xff] %v499
  %513 = vst [vmem:[%s3 + $0x50] sm:$0xff] %v500
  %514 = vst [vmem:[%s3 + $0x58] sm:$0xff] %v501
  %515 = vst [vmem:[%s3 + $0x60] sm:$0xff] %v502
  // Predicated region
  $region14: #{network_forward.18} parent=0 // pred_check
    _
  $region15: #{network_forward.18} parent=0 // pred_check_branch
    %517 = sbr.rel (0) target = $region17
  $region16: #{network_forward.18} parent=0 // pred_region
    _
  $region17: #{network_forward.18} parent=0 // pred_fallthru
    _
  // Predicated region
  $region18: #{network_forward.18} parent=0 // pred_check
    _
  $region19: #{network_forward.18} parent=0 // pred_check_branch
    %519 = sbr.rel (0) target = $region21
  $region20: #{network_forward.18} parent=0 // pred_region
    _
  $region21: #{network_forward.18} parent=0 // pred_fallthru
    _

// kernel: network_forward.19
$region0: #{network_forward.19}
  #allocation0 [shape = 'u32[]', space=smem, size = 0x4, offset = 0x4, fixed_abs, tag = 'smem constant byte address 0x4 - core index']
  #allocation1 [shape = 'u32[144,128]{1,0:T(1,128)}', space=vmem, size = 0x12000, scoped, tag = 'internal scratch']
  %s0 = inlined_call_operand.vmem [shape: bf16[392,144], index: 0, kind: input, shape index: {}]
  %s1 = inlined_call_operand.vmem [shape: bf16[144,128], index: 1, kind: input, shape index: {}]
  %s2 = inlined_call_operand.vmem [shape: f32[1,128], index: 2, kind: input, shape index: {}]
  %s3 = inlined_call_operand.vmem [shape: f32[392,128], index: 3, kind: output, shape index: {}]
  %s4 = sld [smem:[#allocation0]]
  $region22: #{network_forward.19} parent=0
    _
  %s6 = ssub.s32 1, %s4
  %s7 = scalar_select 0, %s6, %s4
  // Predicated region
  $region2: #{network_forward.19} parent=0 // pred_check
    _
  $region3: #{network_forward.19} parent=0 // pred_check_branch
    %9 = sbr.rel (0) target = $region5
  $region4: #{network_forward.19} parent=0 // pred_region
    _
  $region5: #{network_forward.19} parent=0 // pred_fallthru
    _
  // Predicated region
  $region6: #{network_forward.19} parent=0 // pred_check
    _
  $region7: #{network_forward.19} parent=0 // pred_check_branch
    %11 = sbr.rel (0) target = $region9
  $region8: #{network_forward.19} parent=0 // pred_region
    _
  $region9: #{network_forward.19} parent=0 // pred_fallthru
    _
  // Predicated region
  $region10: #{network_forward.19} parent=0 // pred_check
    _
  $region11: #{network_forward.19} parent=0 // pred_check_branch
    %13 = sbr.rel (0) target = $region13
  $region12: #{network_forward.19} parent=0 // pred_region
    _
  $region13: #{network_forward.19} parent=0 // pred_fallthru
    _
  %v15 = vld [vmem:[%s0] sm:$0xff]
  %v16 = vld [vmem:[%s0 + $0x8] sm:$0xff]
  %v17 = vld [vmem:[%s0 + $0x10] sm:$0xff]
  %v18 = vld [vmem:[%s0 + $0x18] sm:$0xff]
  %v19 = vld [vmem:[%s0 + $0x20] sm:$0xff]
  %v20 = vld [vmem:[%s0 + $0x28] sm:$0xff]
  %v21 = vld [vmem:[%s0 + $0x30] sm:$0xff]
  %v22 = vld [vmem:[%s0 + $0x38] sm:$0xff]
  %v23 = vld [vmem:[%s0 + $0x40] sm:$0xff]
  %v24 = vld [vmem:[%s0 + $0x48] sm:$0xff]
  %v25 = vld [vmem:[%s0 + $0x50] sm:$0xff]
  %v26 = vld [vmem:[%s0 + $0x58] sm:$0xff]
  %v27 = vld [vmem:[%s0 + $0x60] sm:$0xff]
  %v28 = vld [vmem:[%s0 + $0x68] sm:$0xff]
  %v29 = vld [vmem:[%s0 + $0x70] sm:$0xff]
  %v30 = vld [vmem:[%s0 + $0x78] sm:$0xff]
  %v31 = vld [vmem:[%s0 + $0x80] sm:$0xff]
  %v32 = vld [vmem:[%s0 + $0x88] sm:$0xff]
  %v33 = vld [vmem:[%s0 + $0x90] sm:$0xff]
  %v34 = vld [vmem:[%s0 + $0x98] sm:$0xff]
  %v35 = vld [vmem:[%s0 + $0xa0] sm:$0xff]
  %v36 = vld [vmem:[%s0 + $0xa8] sm:$0xff]
  %v37 = vld [vmem:[%s0 + $0xb0] sm:$0xff]
  %v38 = vld [vmem:[%s0 + $0xb8] sm:$0xff]
  %v39 = vld [vmem:[%s0 + $0xc0] sm:$0xff]
  %v40 = vld [vmem:[%s0 + $0xc8] sm:$0xff]
  %v41 = vld [vmem:[%s0 + $0xd0] sm:$0xff]
  %v42 = vld [vmem:[%s0 + $0xd8] sm:$0xff]
  %v43 = vld [vmem:[%s0 + $0xe0] sm:$0xff]
  %v44 = vld [vmem:[%s0 + $0xe8] sm:$0xff]
  %v45 = vld [vmem:[%s0 + $0xf0] sm:$0xff]
  %v46 = vld [vmem:[%s0 + $0xf8] sm:$0xff]
  %v47 = vld [vmem:[%s0 + $0x100] sm:$0xff]
  %v48 = vld [vmem:[%s0 + $0x108] sm:$0xff]
  %v49 = vld [vmem:[%s0 + $0x110] sm:$0xff]
  %v50 = vld [vmem:[%s0 + $0x118] sm:$0xff]
  %v51 = vld [vmem:[%s0 + $0x120] sm:$0xff]
  %v52 = vld [vmem:[%s0 + $0x128] sm:$0xff]
  %v53 = vld [vmem:[%s0 + $0x130] sm:$0xff]
  %v54 = vld [vmem:[%s0 + $0x138] sm:$0xff]
  %v55 = vld [vmem:[%s0 + $0x140] sm:$0xff]
  %v56 = vld [vmem:[%s0 + $0x148] sm:$0xff]
  %v57 = vld [vmem:[%s0 + $0x150] sm:$0xff]
  %v58 = vld [vmem:[%s0 + $0x158] sm:$0xff]
  %v59 = vld [vmem:[%s0 + $0x160] sm:$0xff]
  %v60 = vld [vmem:[%s0 + $0x168] sm:$0xff]
  %v61 = vld [vmem:[%s0 + $0x170] sm:$0xff]
  %v62 = vld [vmem:[%s0 + $0x178] sm:$0xff]
  %v63 = vld [vmem:[%s0 + $0x180] sm:$0xff]
  %v64 = vld [vmem:[%s1] sm:$0xf]
  %v65 = vld [vmem:[%s1 + $0x4] sm:$0xf]
  %v66 = vld [vmem:[%s1 + $0x8] sm:$0xf]
  %v67 = vld [vmem:[%s1 + $0xc] sm:$0xf]
  %v68 = vld [vmem:[%s1 + $0x10] sm:$0xf]
  %v69 = vld [vmem:[%s1 + $0x14] sm:$0xf]
  %v70 = vld [vmem:[%s1 + $0x18] sm:$0xf]
  %v71 = vld [vmem:[%s1 + $0x1c] sm:$0xf]
  %v72 = vld [vmem:[%s1 + $0x20] sm:$0xf]
  %v73 = vld [vmem:[%s1 + $0x24] sm:$0xf]
  %v74 = vld [vmem:[%s1 + $0x28] sm:$0xf]
  %v75 = vld [vmem:[%s1 + $0x2c] sm:$0xf]
  %v76 = vld [vmem:[%s1 + $0x30] sm:$0xf]
  %v77 = vld [vmem:[%s1 + $0x34] sm:$0xf]
  %v78 = vld [vmem:[%s1 + $0x38] sm:$0xf]
  %v79 = vld [vmem:[%s1 + $0x3c] sm:$0xf]
  %v80 = vld [vmem:[%s1 + $0x40] sm:$0xf]
  %v81 = vld [vmem:[%s1 + $0x44] sm:$0xf]
  %v82 = vld [vmem:[%s2] sm:$0x1]
  %v84 = vlaneseq
  %v85 = vshrl.u32 %v84, 7
  %v86 = vsub.s32 0, %v85
  %v87 = vrot.slane %v82, %v86
  %v138 = vunpack.c.l.b16 %v15
  %v139 = vunpack.c.h.b16 %v15
  %v140 = vunpack.c.l.b16 %v16
  %v141 = vunpack.c.h.b16 %v16
  %v142 = vunpack.c.l.b16 %v17
  %v143 = vunpack.c.h.b16 %v17
  %v144 = vunpack.c.l.b16 %v18
  %v145 = vunpack.c.h.b16 %v18
  %v146 = vunpack.c.l.b16 %v19
  %v147 = vunpack.c.h.b16 %v19
  %v148 = vunpack.c.l.b16 %v20
  %v149 = vunpack.c.h.b16 %v20
  %v150 = vunpack.c.l.b16 %v21
  %v151 = vunpack.c.h.b16 %v21
  %v152 = vunpack.c.l.b16 %v22
  %v153 = vunpack.c.h.b16 %v22
  %v154 = vunpack.c.l.b16 %v23
  %v155 = vunpack.c.h.b16 %v23
  %v156 = vunpack.c.l.b16 %v24
  %v157 = vunpack.c.h.b16 %v24
  %v158 = vunpack.c.l.b16 %v25
  %v159 = vunpack.c.h.b16 %v25
  %v160 = vunpack.c.l.b16 %v26
  %v161 = vunpack.c.h.b16 %v26
  %v162 = vunpack.c.l.b16 %v27
  %v163 = vunpack.c.h.b16 %v27
  %v164 = vunpack.c.l.b16 %v28
  %v165 = vunpack.c.h.b16 %v28
  %v166 = vunpack.c.l.b16 %v29
  %v167 = vunpack.c.h.b16 %v29
  %v168 = vunpack.c.l.b16 %v30
  %v169 = vunpack.c.h.b16 %v30
  %v170 = vunpack.c.l.b16 %v31
  %v171 = vunpack.c.h.b16 %v31
  %v172 = vunpack.c.l.b16 %v32
  %v173 = vunpack.c.h.b16 %v32
  %v174 = vunpack.c.l.b16 %v33
  %v175 = vunpack.c.h.b16 %v33
  %v176 = vunpack.c.l.b16 %v34
  %v177 = vunpack.c.h.b16 %v34
  %v178 = vunpack.c.l.b16 %v35
  %v179 = vunpack.c.h.b16 %v35
  %v180 = vunpack.c.l.b16 %v36
  %v181 = vunpack.c.h.b16 %v36
  %v182 = vunpack.c.l.b16 %v37
  %v183 = vunpack.c.h.b16 %v37
  %v184 = vunpack.c.l.b16 %v38
  %v185 = vunpack.c.h.b16 %v38
  %v186 = vunpack.c.l.b16 %v39
  %v187 = vunpack.c.h.b16 %v39
  %v188 = vunpack.c.l.b16 %v40
  %v189 = vunpack.c.h.b16 %v40
  %v190 = vunpack.c.l.b16 %v41
  %v191 = vunpack.c.h.b16 %v41
  %v192 = vunpack.c.l.b16 %v42
  %v193 = vunpack.c.h.b16 %v42
  %v194 = vunpack.c.l.b16 %v43
  %v195 = vunpack.c.h.b16 %v43
  %v196 = vunpack.c.l.b16 %v44
  %v197 = vunpack.c.h.b16 %v44
  %v198 = vunpack.c.l.b16 %v45
  %v199 = vunpack.c.h.b16 %v45
  %v200 = vunpack.c.l.b16 %v46
  %v201 = vunpack.c.h.b16 %v46
  %v202 = vunpack.c.l.b16 %v47
  %v203 = vunpack.c.h.b16 %v47
  %v204 = vunpack.c.l.b16 %v48
  %v205 = vunpack.c.h.b16 %v48
  %v206 = vunpack.c.l.b16 %v49
  %v207 = vunpack.c.h.b16 %v49
  %v208 = vunpack.c.l.b16 %v50
  %v209 = vunpack.c.h.b16 %v50
  %v210 = vunpack.c.l.b16 %v51
  %v211 = vunpack.c.h.b16 %v51
  %v212 = vunpack.c.l.b16 %v52
  %v213 = vunpack.c.h.b16 %v52
  %v214 = vunpack.c.l.b16 %v53
  %v215 = vunpack.c.h.b16 %v53
  %v216 = vunpack.c.l.b16 %v54
  %v217 = vunpack.c.h.b16 %v54
  %v218 = vunpack.c.l.b16 %v55
  %v219 = vunpack.c.h.b16 %v55
  %v220 = vunpack.c.l.b16 %v56
  %v221 = vunpack.c.h.b16 %v56
  %v222 = vunpack.c.l.b16 %v57
  %v223 = vunpack.c.h.b16 %v57
  %v224 = vunpack.c.l.b16 %v58
  %v225 = vunpack.c.h.b16 %v58
  %v226 = vunpack.c.l.b16 %v59
  %v227 = vunpack.c.h.b16 %v59
  %v228 = vunpack.c.l.b16 %v60
  %v229 = vunpack.c.h.b16 %v60
  %v230 = vunpack.c.l.b16 %v61
  %v231 = vunpack.c.h.b16 %v61
  %v232 = vunpack.c.l.b16 %v62
  %v233 = vunpack.c.h.b16 %v62
  %v234 = vunpack.c.l.b16 %v63
  %v235 = vunpack.c.h.b16 %v63
  %v236 = vpack.c.b16 %v140, %v138
  %v237 = vpack.c.b16 %v141, %v139
  %v238 = vpack.c.b16 %v144, %v142
  %v239 = vpack.c.b16 %v145, %v143
  %v240 = vpack.c.b16 %v148, %v146
  %v241 = vpack.c.b16 %v149, %v147
  %v242 = vpack.c.b16 %v152, %v150
  %v243 = vpack.c.b16 %v153, %v151
  %v244 = vpack.c.b16 %v156, %v154
  %v245 = vpack.c.b16 %v157, %v155
  %v246 = vpack.c.b16 %v160, %v158
  %v247 = vpack.c.b16 %v161, %v159
  %v248 = vpack.c.b16 %v164, %v162
  %v249 = vpack.c.b16 %v165, %v163
  %v250 = vpack.c.b16 %v168, %v166
  %v251 = vpack.c.b16 %v169, %v167
  %v252 = vpack.c.b16 %v172, %v170
  %v253 = vpack.c.b16 %v173, %v171
  %v254 = vpack.c.b16 %v176, %v174
  %v255 = vpack.c.b16 %v177, %v175
  %v256 = vpack.c.b16 %v180, %v178
  %v257 = vpack.c.b16 %v181, %v179
  %v258 = vpack.c.b16 %v184, %v182
  %v259 = vpack.c.b16 %v185, %v183
  %v260 = vpack.c.b16 %v188, %v186
  %v261 = vpack.c.b16 %v189, %v187
  %v262 = vpack.c.b16 %v192, %v190
  %v263 = vpack.c.b16 %v193, %v191
  %v264 = vpack.c.b16 %v196, %v194
  %v265 = vpack.c.b16 %v197, %v195
  %v266 = vpack.c.b16 %v200, %v198
  %v267 = vpack.c.b16 %v201, %v199
  %v268 = vpack.c.b16 %v204, %v202
  %v269 = vpack.c.b16 %v205, %v203
  %v270 = vpack.c.b16 %v208, %v206
  %v271 = vpack.c.b16 %v209, %v207
  %v272 = vpack.c.b16 %v212, %v210
  %v273 = vpack.c.b16 %v213, %v211
  %v274 = vpack.c.b16 %v216, %v214
  %v275 = vpack.c.b16 %v217, %v215
  %v276 = vpack.c.b16 %v220, %v218
  %v277 = vpack.c.b16 %v221, %v219
  %v278 = vpack.c.b16 %v224, %v222
  %v279 = vpack.c.b16 %v225, %v223
  %v280 = vpack.c.b16 %v228, %v226
  %v281 = vpack.c.b16 %v229, %v227
  %v282 = vpack.c.b16 %v232, %v230
  %v283 = vpack.c.b16 %v233, %v231
  %v284 = vpack.c.b16 %v234, %v234
  %v285 = vpack.c.b16 %v235, %v235
  %v329 = vunpack.c.l.b16 %v64
  %v330 = vunpack.c.l.b16 %v65
  %v331 = vunpack.c.l.b16 %v66
  %v332 = vunpack.c.l.b16 %v67
  %v333 = vunpack.c.l.b16 %v68
  %v334 = vunpack.c.l.b16 %v69
  %v335 = vunpack.c.l.b16 %v70
  %v336 = vunpack.c.l.b16 %v71
  %v337 = vunpack.c.l.b16 %v72
  %v338 = vunpack.c.l.b16 %v73
  %v339 = vunpack.c.l.b16 %v74
  %v340 = vunpack.c.l.b16 %v75
  %v341 = vunpack.c.l.b16 %v76
  %v342 = vunpack.c.l.b16 %v77
  %v343 = vunpack.c.l.b16 %v78
  %v344 = vunpack.c.l.b16 %v79
  %v345 = vunpack.c.l.b16 %v80
  %v346 = vunpack.c.l.b16 %v81
  %v347 = vpack.c.b16 %v330, %v329
  %v348 = vpack.c.b16 %v332, %v331
  %v349 = vpack.c.b16 %v334, %v333
  %v350 = vpack.c.b16 %v336, %v335
  %v351 = vpack.c.b16 %v338, %v337
  %v352 = vpack.c.b16 %v340, %v339
  %v353 = vpack.c.b16 %v342, %v341
  %v354 = vpack.c.b16 %v344, %v343
  %v355 = vpack.c.b16 %v346, %v345
  %vm365 = vcmask 130048
  %v367 = vsel %vm365, %v237, 0
  %v370 = vsel %vm365, %v239, 0
  %v373 = vsel %vm365, %v241, 0
  %v376 = vsel %vm365, %v243, 0
  %v379 = vsel %vm365, %v245, 0
  %v382 = vsel %vm365, %v247, 0
  %v385 = vsel %vm365, %v249, 0
  %v388 = vsel %vm365, %v251, 0
  %v391 = vsel %vm365, %v253, 0
  %v394 = vsel %vm365, %v255, 0
  %v397 = vsel %vm365, %v257, 0
  %v400 = vsel %vm365, %v259, 0
  %v403 = vsel %vm365, %v261, 0
  %v406 = vsel %vm365, %v263, 0
  %v409 = vsel %vm365, %v265, 0
  %v412 = vsel %vm365, %v267, 0
  %v415 = vsel %vm365, %v269, 0
  %v418 = vsel %vm365, %v271, 0
  %v421 = vsel %vm365, %v273, 0
  %v424 = vsel %vm365, %v275, 0
  %v427 = vsel %vm365, %v277, 0
  %v430 = vsel %vm365, %v279, 0
  %v433 = vsel %vm365, %v281, 0
  %v436 = vsel %vm365, %v283, 0
  %v439 = vsel %vm365, %v285, 0
  %441 = vmatprep.subr.bf16.mxu0 0
  %442 = vmatpush1.bf16.msra.mxu0 %v354
  %443 = vmatprep.subr.bf16.mxu0 0
  %444 = vmatpush1.bf16.msra.mxu0 %v353
  %445 = vmatprep.subr.bf16.mxu0 0
  %446 = vmatpush1.bf16.msra.mxu0 %v352
  %447 = vmatprep.subr.bf16.mxu0 0
  %448 = vmatpush1.bf16.msra.mxu0 %v351
  %449 = vmatprep.subr.bf16.mxu0 0
  %450 = vmatpush1.bf16.msra.mxu0 %v350
  %451 = vmatprep.subr.bf16.mxu0 0
  %452 = vmatpush1.bf16.msra.mxu0 %v349
  %453 = vmatprep.subr.bf16.mxu0 0
  %454 = vmatpush1.bf16.msra.mxu0 %v348
  %455 = vmatprep.subr.bf16.mxu0 0
  %456 = vmatpush1.bf16.msra.mxu0 %v347
  %457 = vmatprep.subr.bf16.mxu0 0
  %458 = vmatpush2.bf16.msra.mxu0 0
  %459 = vmatprep.subr.bf16.mxu0 0
  %460 = vmatpush2.bf16.msra.mxu0 0
  %461 = vmatprep.subr.bf16.mxu0 0
  %462 = vmatpush2.bf16.msra.mxu0 0
  %463 = vmatprep.subr.bf16.mxu0 0
  %464 = vmatpush2.bf16.msra.mxu0 0
  %465 = vmatprep.subr.bf16.mxu0 0
  %466 = vmatpush2.bf16.msra.mxu0 0
  %467 = vmatprep.subr.bf16.mxu0 0
  %468 = vmatpush2.bf16.msra.mxu0 0
  %469 = vmatprep.subr.bf16.mxu0 0
  %470 = vmatpush2.bf16.msra.mxu0 0
  %471 = vmatprep.subr.bf16.mxu0 0
  %472 = vmatpush2.bf16.msra.mxu0 %v355
  %473 = vmatprep.mubr.bf16.mxu0 %v367
  %474 = vmatmul.mubr.bf16.gmra.mxu0 %v236
  %v475 = vpop.f32.mrf.mxu0
  %v476 = vadd.f32 %v87, %v475
  %v477 = vpop.f32.mrf.mxu0
  %v478 = vpop.f32.mrf.mxu0
  %v479 = vadd.f32 %v87, %v478
  %v480 = vpop.f32.mrf.mxu0
  %481 = vmatprep.mubr.bf16.mxu0 %v370
  %482 = vmatmul.mubr.bf16.gmra.mxu0 %v238
  %v483 = vpop.f32.mrf.mxu0
  %v484 = vadd.f32 %v87, %v483
  %v485 = vpop.f32.mrf.mxu0
  %v486 = vpop.f32.mrf.mxu0
  %v487 = vadd.f32 %v87, %v486
  %v488 = vpop.f32.mrf.mxu0
  %489 = vmatprep.mubr.bf16.mxu0 %v373
  %490 = vmatmul.mubr.bf16.gmra.mxu0 %v240
  %v491 = vpop.f32.mrf.mxu0
  %v492 = vadd.f32 %v87, %v491
  %v493 = vpop.f32.mrf.mxu0
  %v494 = vpop.f32.mrf.mxu0
  %v495 = vadd.f32 %v87, %v494
  %v496 = vpop.f32.mrf.mxu0
  %497 = vmatprep.mubr.bf16.mxu0 %v376
  %498 = vmatmul.mubr.bf16.gmra.mxu0 %v242
  %v499 = vpop.f32.mrf.mxu0
  %v500 = vadd.f32 %v87, %v499
  %v501 = vpop.f32.mrf.mxu0
  %v502 = vpop.f32.mrf.mxu0
  %v503 = vadd.f32 %v87, %v502
  %v504 = vpop.f32.mrf.mxu0
  %505 = vmatprep.mubr.bf16.mxu0 %v379
  %506 = vmatmul.mubr.bf16.gmra.mxu0 %v244
  %v507 = vpop.f32.mrf.mxu0
  %v508 = vadd.f32 %v87, %v507
  %v509 = vpop.f32.mrf.mxu0
  %v510 = vpop.f32.mrf.mxu0
  %v511 = vadd.f32 %v87, %v510
  %v512 = vpop.f32.mrf.mxu0
  %513 = vmatprep.mubr.bf16.mxu0 %v382
  %514 = vmatmul.mubr.bf16.gmra.mxu0 %v246
  %v515 = vpop.f32.mrf.mxu0
  %v516 = vadd.f32 %v87, %v515
  %v517 = vpop.f32.mrf.mxu0
  %v518 = vpop.f32.mrf.mxu0
  %v519 = vadd.f32 %v87, %v518
  %v520 = vpop.f32.mrf.mxu0
  %521 = vmatprep.mubr.bf16.mxu0 %v385
  %522 = vmatmul.mubr.bf16.gmra.mxu0 %v248
  %v523 = vpop.f32.mrf.mxu0
  %v524 = vadd.f32 %v87, %v523
  %v525 = vpop.f32.mrf.mxu0
  %v526 = vpop.f32.mrf.mxu0
  %v527 = vadd.f32 %v87, %v526
  %v528 = vpop.f32.mrf.mxu0
  %529 = vmatprep.mubr.bf16.mxu0 %v388
  %530 = vmatmul.mubr.bf16.gmra.mxu0 %v250
  %v531 = vpop.f32.mrf.mxu0
  %v532 = vadd.f32 %v87, %v531
  %v533 = vpop.f32.mrf.mxu0
  %v534 = vpop.f32.mrf.mxu0
  %v535 = vadd.f32 %v87, %v534
  %v536 = vpop.f32.mrf.mxu0
  %537 = vmatprep.mubr.bf16.mxu0 %v391
  %538 = vmatmul.mubr.bf16.gmra.mxu0 %v252
  %v539 = vpop.f32.mrf.mxu0
  %v540 = vadd.f32 %v87, %v539
  %v541 = vpop.f32.mrf.mxu0
  %v542 = vpop.f32.mrf.mxu0
  %v543 = vadd.f32 %v87, %v542
  %v544 = vpop.f32.mrf.mxu0
  %545 = vmatprep.mubr.bf16.mxu0 %v394
  %546 = vmatmul.mubr.bf16.gmra.mxu0 %v254
  %v547 = vpop.f32.mrf.mxu0
  %v548 = vadd.f32 %v87, %v547
  %v549 = vpop.f32.mrf.mxu0
  %v550 = vpop.f32.mrf.mxu0
  %v551 = vadd.f32 %v87, %v550
  %v552 = vpop.f32.mrf.mxu0
  %553 = vmatprep.mubr.bf16.mxu0 %v397
  %554 = vmatmul.mubr.bf16.gmra.mxu0 %v256
  %v555 = vpop.f32.mrf.mxu0
  %v556 = vadd.f32 %v87, %v555
  %v557 = vpop.f32.mrf.mxu0
  %v558 = vpop.f32.mrf.mxu0
  %v559 = vadd.f32 %v87, %v558
  %v560 = vpop.f32.mrf.mxu0
  %561 = vmatprep.mubr.bf16.mxu0 %v400
  %562 = vmatmul.mubr.bf16.gmra.mxu0 %v258
  %v563 = vpop.f32.mrf.mxu0
  %v564 = vadd.f32 %v87, %v563
  %v565 = vpop.f32.mrf.mxu0
  %v566 = vpop.f32.mrf.mxu0
  %v567 = vadd.f32 %v87, %v566
  %v568 = vpop.f32.mrf.mxu0
  %569 = vmatprep.mubr.bf16.mxu0 %v403
  %570 = vmatmul.mubr.bf16.gmra.mxu0 %v260
  %v571 = vpop.f32.mrf.mxu0
  %v572 = vadd.f32 %v87, %v571
  %v573 = vpop.f32.mrf.mxu0
  %v574 = vpop.f32.mrf.mxu0
  %v575 = vadd.f32 %v87, %v574
  %v576 = vpop.f32.mrf.mxu0
  %577 = vmatprep.mubr.bf16.mxu0 %v406
  %578 = vmatmul.mubr.bf16.gmra.mxu0 %v262
  %v579 = vpop.f32.mrf.mxu0
  %v580 = vadd.f32 %v87, %v579
  %v581 = vpop.f32.mrf.mxu0
  %v582 = vpop.f32.mrf.mxu0
  %v583 = vadd.f32 %v87, %v582
  %v584 = vpop.f32.mrf.mxu0
  %585 = vmatprep.mubr.bf16.mxu0 %v409
  %586 = vmatmul.mubr.bf16.gmra.mxu0 %v264
  %v587 = vpop.f32.mrf.mxu0
  %v588 = vadd.f32 %v87, %v587
  %v589 = vpop.f32.mrf.mxu0
  %v590 = vpop.f32.mrf.mxu0
  %v591 = vadd.f32 %v87, %v590
  %v592 = vpop.f32.mrf.mxu0
  %593 = vmatprep.mubr.bf16.mxu0 %v412
  %594 = vmatmul.mubr.bf16.gmra.mxu0 %v266
  %v595 = vpop.f32.mrf.mxu0
  %v596 = vadd.f32 %v87, %v595
  %v597 = vpop.f32.mrf.mxu0
  %v598 = vpop.f32.mrf.mxu0
  %v599 = vadd.f32 %v87, %v598
  %v600 = vpop.f32.mrf.mxu0
  %601 = vmatprep.mubr.bf16.mxu0 %v415
  %602 = vmatmul.mubr.bf16.gmra.mxu0 %v268
  %v603 = vpop.f32.mrf.mxu0
  %v604 = vadd.f32 %v87, %v603
  %v605 = vpop.f32.mrf.mxu0
  %v606 = vpop.f32.mrf.mxu0
  %v607 = vadd.f32 %v87, %v606
  %v608 = vpop.f32.mrf.mxu0
  %609 = vmatprep.mubr.bf16.mxu0 %v418
  %610 = vmatmul.mubr.bf16.gmra.mxu0 %v270
  %v611 = vpop.f32.mrf.mxu0
  %v612 = vadd.f32 %v87, %v611
  %v613 = vpop.f32.mrf.mxu0
  %v614 = vpop.f32.mrf.mxu0
  %v615 = vadd.f32 %v87, %v614
  %v616 = vpop.f32.mrf.mxu0
  %617 = vmatprep.mubr.bf16.mxu0 %v421
  %618 = vmatmul.mubr.bf16.gmra.mxu0 %v272
  %v619 = vpop.f32.mrf.mxu0
  %v620 = vadd.f32 %v87, %v619
  %v621 = vpop.f32.mrf.mxu0
  %v622 = vpop.f32.mrf.mxu0
  %v623 = vadd.f32 %v87, %v622
  %v624 = vpop.f32.mrf.mxu0
  %625 = vmatprep.mubr.bf16.mxu0 %v424
  %626 = vmatmul.mubr.bf16.gmra.mxu0 %v274
  %v627 = vpop.f32.mrf.mxu0
  %v628 = vadd.f32 %v87, %v627
  %v629 = vpop.f32.mrf.mxu0
  %v630 = vpop.f32.mrf.mxu0
  %v631 = vadd.f32 %v87, %v630
  %v632 = vpop.f32.mrf.mxu0
  %633 = vmatprep.mubr.bf16.mxu0 %v427
  %634 = vmatmul.mubr.bf16.gmra.mxu0 %v276
  %v635 = vpop.f32.mrf.mxu0
  %v636 = vadd.f32 %v87, %v635
  %v637 = vpop.f32.mrf.mxu0
  %v638 = vpop.f32.mrf.mxu0
  %v639 = vadd.f32 %v87, %v638
  %v640 = vpop.f32.mrf.mxu0
  %641 = vmatprep.mubr.bf16.mxu0 %v430
  %642 = vmatmul.mubr.bf16.gmra.mxu0 %v278
  %v643 = vpop.f32.mrf.mxu0
  %v644 = vadd.f32 %v87, %v643
  %v645 = vpop.f32.mrf.mxu0
  %v646 = vpop.f32.mrf.mxu0
  %v647 = vadd.f32 %v87, %v646
  %v648 = vpop.f32.mrf.mxu0
  %649 = vmatprep.mubr.bf16.mxu0 %v433
  %650 = vmatmul.mubr.bf16.gmra.mxu0 %v280
  %v651 = vpop.f32.mrf.mxu0
  %v652 = vadd.f32 %v87, %v651
  %v653 = vpop.f32.mrf.mxu0
  %v654 = vpop.f32.mrf.mxu0
  %v655 = vadd.f32 %v87, %v654
  %v656 = vpop.f32.mrf.mxu0
  %657 = vmatprep.mubr.bf16.mxu0 %v436
  %658 = vmatmul.mubr.bf16.gmra.mxu0 %v282
  %v659 = vpop.f32.mrf.mxu0
  %v660 = vadd.f32 %v87, %v659
  %v661 = vpop.f32.mrf.mxu0
  %v662 = vpop.f32.mrf.mxu0
  %v663 = vadd.f32 %v87, %v662
  %v664 = vpop.f32.mrf.mxu0
  %665 = vmatprep.mubr.bf16.mxu0 %v439
  %666 = vmatmul.mubr.bf16.gmra.mxu0 %v284
  %v667 = vpop.f32.mrf.mxu0
  %v668 = vadd.f32 %v87, %v667
  %v669 = vpop.f32.mrf.mxu0
  %v670 = vpop.f32.mrf.mxu0
  %v671 = vpop.f32.mrf.mxu0
  %672 = vdwg.mxu0
  %v673 = vxor.u32 %v476, 2147483648
  %v674 = vxor.u32 %v479, 2147483648
  %v675 = vxor.u32 %v484, 2147483648
  %v676 = vxor.u32 %v487, 2147483648
  %v677 = vxor.u32 %v492, 2147483648
  %v678 = vxor.u32 %v495, 2147483648
  %v679 = vxor.u32 %v500, 2147483648
  %v680 = vxor.u32 %v503, 2147483648
  %v681 = vxor.u32 %v508, 2147483648
  %v682 = vxor.u32 %v511, 2147483648
  %v683 = vxor.u32 %v516, 2147483648
  %v684 = vxor.u32 %v519, 2147483648
  %v685 = vxor.u32 %v524, 2147483648
  %v686 = vxor.u32 %v527, 2147483648
  %v687 = vxor.u32 %v532, 2147483648
  %v688 = vxor.u32 %v535, 2147483648
  %v689 = vxor.u32 %v540, 2147483648
  %v690 = vxor.u32 %v543, 2147483648
  %v691 = vxor.u32 %v548, 2147483648
  %v692 = vxor.u32 %v551, 2147483648
  %v693 = vxor.u32 %v556, 2147483648
  %v694 = vxor.u32 %v559, 2147483648
  %v695 = vxor.u32 %v564, 2147483648
  %v696 = vxor.u32 %v567, 2147483648
  %v697 = vxor.u32 %v572, 2147483648
  %v698 = vxor.u32 %v575, 2147483648
  %v699 = vxor.u32 %v580, 2147483648
  %v700 = vxor.u32 %v583, 2147483648
  %v701 = vxor.u32 %v588, 2147483648
  %v702 = vxor.u32 %v591, 2147483648
  %v703 = vxor.u32 %v596, 2147483648
  %v704 = vxor.u32 %v599, 2147483648
  %v705 = vxor.u32 %v604, 2147483648
  %v706 = vxor.u32 %v607, 2147483648
  %v707 = vxor.u32 %v612, 2147483648
  %v708 = vxor.u32 %v615, 2147483648
  %v709 = vxor.u32 %v620, 2147483648
  %v710 = vxor.u32 %v623, 2147483648
  %v711 = vxor.u32 %v628, 2147483648
  %v712 = vxor.u32 %v631, 2147483648
  %v713 = vxor.u32 %v636, 2147483648
  %v714 = vxor.u32 %v639, 2147483648
  %v715 = vxor.u32 %v644, 2147483648
  %v716 = vxor.u32 %v647, 2147483648
  %v717 = vxor.u32 %v652, 2147483648
  %v718 = vxor.u32 %v655, 2147483648
  %v719 = vxor.u32 %v660, 2147483648
  %v720 = vxor.u32 %v663, 2147483648
  %v721 = vxor.u32 %v668, 2147483648
  %v722 = vmul.f32 %v673, 1.442695
  %v723 = vpow.pop %v722
  %v724 = vmul.f32 %v674, 1.442695
  %v725 = vpow.pop %v724
  %v726 = vmul.f32 %v675, 1.442695
  %v727 = vpow.pop %v726
  %v728 = vmul.f32 %v676, 1.442695
  %v729 = vpow.pop %v728
  %v730 = vmul.f32 %v677, 1.442695
  %v731 = vpow.pop %v730
  %v732 = vmul.f32 %v678, 1.442695
  %v733 = vpow.pop %v732
  %v734 = vmul.f32 %v679, 1.442695
  %v735 = vpow.pop %v734
  %v736 = vmul.f32 %v680, 1.442695
  %v737 = vpow.pop %v736
  %v738 = vmul.f32 %v681, 1.442695
  %v739 = vpow.pop %v738
  %v740 = vmul.f32 %v682, 1.442695
  %v741 = vpow.pop %v740
  %v742 = vmul.f32 %v683, 1.442695
  %v743 = vpow.pop %v742
  %v744 = vmul.f32 %v684, 1.442695
  %v745 = vpow.pop %v744
  %v746 = vmul.f32 %v685, 1.442695
  %v747 = vpow.pop %v746
  %v748 = vmul.f32 %v686, 1.442695
  %v749 = vpow.pop %v748
  %v750 = vmul.f32 %v687, 1.442695
  %v751 = vpow.pop %v750
  %v752 = vmul.f32 %v688, 1.442695
  %v753 = vpow.pop %v752
  %v754 = vmul.f32 %v689, 1.442695
  %v755 = vpow.pop %v754
  %v756 = vmul.f32 %v690, 1.442695
  %v757 = vpow.pop %v756
  %v758 = vmul.f32 %v691, 1.442695
  %v759 = vpow.pop %v758
  %v760 = vmul.f32 %v692, 1.442695
  %v761 = vpow.pop %v760
  %v762 = vmul.f32 %v693, 1.442695
  %v763 = vpow.pop %v762
  %v764 = vmul.f32 %v694, 1.442695
  %v765 = vpow.pop %v764
  %v766 = vmul.f32 %v695, 1.442695
  %v767 = vpow.pop %v766
  %v768 = vmul.f32 %v696, 1.442695
  %v769 = vpow.pop %v768
  %v770 = vmul.f32 %v697, 1.442695
  %v771 = vpow.pop %v770
  %v772 = vmul.f32 %v698, 1.442695
  %v773 = vpow.pop %v772
  %v774 = vmul.f32 %v699, 1.442695
  %v775 = vpow.pop %v774
  %v776 = vmul.f32 %v700, 1.442695
  %v777 = vpow.pop %v776
  %v778 = vmul.f32 %v701, 1.442695
  %v779 = vpow.pop %v778
  %v780 = vmul.f32 %v702, 1.442695
  %v781 = vpow.pop %v780
  %v782 = vmul.f32 %v703, 1.442695
  %v783 = vpow.pop %v782
  %v784 = vmul.f32 %v704, 1.442695
  %v785 = vpow.pop %v784
  %v786 = vmul.f32 %v705, 1.442695
  %v787 = vpow.pop %v786
  %v788 = vmul.f32 %v706, 1.442695
  %v789 = vpow.pop %v788
  %v790 = vmul.f32 %v707, 1.442695
  %v791 = vpow.pop %v790
  %v792 = vmul.f32 %v708, 1.442695
  %v793 = vpow.pop %v792
  %v794 = vmul.f32 %v709, 1.442695
  %v795 = vpow.pop %v794
  %v796 = vmul.f32 %v710, 1.442695
  %v797 = vpow.pop %v796
  %v798 = vmul.f32 %v711, 1.442695
  %v799 = vpow.pop %v798
  %v800 = vmul.f32 %v712, 1.442695
  %v801 = vpow.pop %v800
  %v802 = vmul.f32 %v713, 1.442695
  %v803 = vpow.pop %v802
  %v804 = vmul.f32 %v714, 1.442695
  %v805 = vpow.pop %v804
  %v806 = vmul.f32 %v715, 1.442695
  %v807 = vpow.pop %v806
  %v808 = vmul.f32 %v716, 1.442695
  %v809 = vpow.pop %v808
  %v810 = vmul.f32 %v717, 1.442695
  %v811 = vpow.pop %v810
  %v812 = vmul.f32 %v718, 1.442695
  %v813 = vpow.pop %v812
  %v814 = vmul.f32 %v719, 1.442695
  %v815 = vpow.pop %v814
  %v816 = vmul.f32 %v720, 1.442695
  %v817 = vpow.pop %v816
  %v818 = vmul.f32 %v721, 1.442695
  %v819 = vpow.pop %v818
  %v820 = vadd.f32 %v723, 1.0
  %v821 = vadd.f32 %v725, 1.0
  %v822 = vadd.f32 %v727, 1.0
  %v823 = vadd.f32 %v729, 1.0
  %v824 = vadd.f32 %v731, 1.0
  %v825 = vadd.f32 %v733, 1.0
  %v826 = vadd.f32 %v735, 1.0
  %v827 = vadd.f32 %v737, 1.0
  %v828 = vadd.f32 %v739, 1.0
  %v829 = vadd.f32 %v741, 1.0
  %v830 = vadd.f32 %v743, 1.0
  %v831 = vadd.f32 %v745, 1.0
  %v832 = vadd.f32 %v747, 1.0
  %v833 = vadd.f32 %v749, 1.0
  %v834 = vadd.f32 %v751, 1.0
  %v835 = vadd.f32 %v753, 1.0
  %v836 = vadd.f32 %v755, 1.0
  %v837 = vadd.f32 %v757, 1.0
  %v838 = vadd.f32 %v759, 1.0
  %v839 = vadd.f32 %v761, 1.0
  %v840 = vadd.f32 %v763, 1.0
  %v841 = vadd.f32 %v765, 1.0
  %v842 = vadd.f32 %v767, 1.0
  %v843 = vadd.f32 %v769, 1.0
  %v844 = vadd.f32 %v771, 1.0
  %v845 = vadd.f32 %v773, 1.0
  %v846 = vadd.f32 %v775, 1.0
  %v847 = vadd.f32 %v777, 1.0
  %v848 = vadd.f32 %v779, 1.0
  %v849 = vadd.f32 %v781, 1.0
  %v850 = vadd.f32 %v783, 1.0
  %v851 = vadd.f32 %v785, 1.0
  %v852 = vadd.f32 %v787, 1.0
  %v853 = vadd.f32 %v789, 1.0
  %v854 = vadd.f32 %v791, 1.0
  %v855 = vadd.f32 %v793, 1.0
  %v856 = vadd.f32 %v795, 1.0
  %v857 = vadd.f32 %v797, 1.0
  %v858 = vadd.f32 %v799, 1.0
  %v859 = vadd.f32 %v801, 1.0
  %v860 = vadd.f32 %v803, 1.0
  %v861 = vadd.f32 %v805, 1.0
  %v862 = vadd.f32 %v807, 1.0
  %v863 = vadd.f32 %v809, 1.0
  %v864 = vadd.f32 %v811, 1.0
  %v865 = vadd.f32 %v813, 1.0
  %v866 = vadd.f32 %v815, 1.0
  %v867 = vadd.f32 %v817, 1.0
  %v868 = vadd.f32 %v819, 1.0
  %v869 = vrcp.pop %v820
  %v870 = vmul.f32 1.0, %v869
  %v871 = vrcp.pop %v821
  %v872 = vmul.f32 1.0, %v871
  %v873 = vrcp.pop %v822
  %v874 = vmul.f32 1.0, %v873
  %v875 = vrcp.pop %v823
  %v876 = vmul.f32 1.0, %v875
  %v877 = vrcp.pop %v824
  %v878 = vmul.f32 1.0, %v877
  %v879 = vrcp.pop %v825
  %v880 = vmul.f32 1.0, %v879
  %v881 = vrcp.pop %v826
  %v882 = vmul.f32 1.0, %v881
  %v883 = vrcp.pop %v827
  %v884 = vmul.f32 1.0, %v883
  %v885 = vrcp.pop %v828
  %v886 = vmul.f32 1.0, %v885
  %v887 = vrcp.pop %v829
  %v888 = vmul.f32 1.0, %v887
  %v889 = vrcp.pop %v830
  %v890 = vmul.f32 1.0, %v889
  %v891 = vrcp.pop %v831
  %v892 = vmul.f32 1.0, %v891
  %v893 = vrcp.pop %v832
  %v894 = vmul.f32 1.0, %v893
  %v895 = vrcp.pop %v833
  %v896 = vmul.f32 1.0, %v895
  %v897 = vrcp.pop %v834
  %v898 = vmul.f32 1.0, %v897
  %v899 = vrcp.pop %v835
  %v900 = vmul.f32 1.0, %v899
  %v901 = vrcp.pop %v836
  %v902 = vmul.f32 1.0, %v901
  %v903 = vrcp.pop %v837
  %v904 = vmul.f32 1.0, %v903
  %v905 = vrcp.pop %v838
  %v906 = vmul.f32 1.0, %v905
  %v907 = vrcp.pop %v839
  %v908 = vmul.f32 1.0, %v907
  %v909 = vrcp.pop %v840
  %v910 = vmul.f32 1.0, %v909
  %v911 = vrcp.pop %v841
  %v912 = vmul.f32 1.0, %v911
  %v913 = vrcp.pop %v842
  %v914 = vmul.f32 1.0, %v913
  %v915 = vrcp.pop %v843
  %v916 = vmul.f32 1.0, %v915
  %v917 = vrcp.pop %v844
  %v918 = vmul.f32 1.0, %v917
  %v919 = vrcp.pop %v845
  %v920 = vmul.f32 1.0, %v919
  %v921 = vrcp.pop %v846
  %v922 = vmul.f32 1.0, %v921
  %v923 = vrcp.pop %v847
  %v924 = vmul.f32 1.0, %v923
  %v925 = vrcp.pop %v848
  %v926 = vmul.f32 1.0, %v925
  %v927 = vrcp.pop %v849
  %v928 = vmul.f32 1.0, %v927
  %v929 = vrcp.pop %v850
  %v930 = vmul.f32 1.0, %v929
  %v931 = vrcp.pop %v851
  %v932 = vmul.f32 1.0, %v931
  %v933 = vrcp.pop %v852
  %v934 = vmul.f32 1.0, %v933
  %v935 = vrcp.pop %v853
  %v936 = vmul.f32 1.0, %v935
  %v937 = vrcp.pop %v854
  %v938 = vmul.f32 1.0, %v937
  %v939 = vrcp.pop %v855
  %v940 = vmul.f32 1.0, %v939
  %v941 = vrcp.pop %v856
  %v942 = vmul.f32 1.0, %v941
  %v943 = vrcp.pop %v857
  %v944 = vmul.f32 1.0, %v943
  %v945 = vrcp.pop %v858
  %v946 = vmul.f32 1.0, %v945
  %v947 = vrcp.pop %v859
  %v948 = vmul.f32 1.0, %v947
  %v949 = vrcp.pop %v860
  %v950 = vmul.f32 1.0, %v949
  %v951 = vrcp.pop %v861
  %v952 = vmul.f32 1.0, %v951
  %v953 = vrcp.pop %v862
  %v954 = vmul.f32 1.0, %v953
  %v955 = vrcp.pop %v863
  %v956 = vmul.f32 1.0, %v955
  %v957 = vrcp.pop %v864
  %v958 = vmul.f32 1.0, %v957
  %v959 = vrcp.pop %v865
  %v960 = vmul.f32 1.0, %v959
  %v961 = vrcp.pop %v866
  %v962 = vmul.f32 1.0, %v961
  %v963 = vrcp.pop %v867
  %v964 = vmul.f32 1.0, %v963
  %v965 = vrcp.pop %v868
  %v966 = vmul.f32 1.0, %v965
  %967 = vst [vmem:[%s3] sm:$0xff] %v870
  %968 = vst [vmem:[%s3 + $0x8] sm:$0xff] %v872
  %969 = vst [vmem:[%s3 + $0x10] sm:$0xff] %v874
  %970 = vst [vmem:[%s3 + $0x18] sm:$0xff] %v876
  %971 = vst [vmem:[%s3 + $0x20] sm:$0xff] %v878
  %972 = vst [vmem:[%s3 + $0x28] sm:$0xff] %v880
  %973 = vst [vmem:[%s3 + $0x30] sm:$0xff] %v882
  %974 = vst [vmem:[%s3 + $0x38] sm:$0xff] %v884
  %975 = vst [vmem:[%s3 + $0x40] sm:$0xff] %v886
  %976 = vst [vmem:[%s3 + $0x48] sm:$0xff] %v888
  %977 = vst [vmem:[%s3 + $0x50] sm:$0xff] %v890
  %978 = vst [vmem:[%s3 + $0x58] sm:$0xff] %v892
  %979 = vst [vmem:[%s3 + $0x60] sm:$0xff] %v894
  %980 = vst [vmem:[%s3 + $0x68] sm:$0xff] %v896
  %981 = vst [vmem:[%s3 + $0x70] sm:$0xff] %v898
  %982 = vst [vmem:[%s3 + $0x78] sm:$0xff] %v900
  %983 = vst [vmem:[%s3 + $0x80] sm:$0xff] %v902
  %984 = vst [vmem:[%s3 + $0x88] sm:$0xff] %v904
  %985 = vst [vmem:[%s3 + $0x90] sm:$0xff] %v906
  %986 = vst [vmem:[%s3 + $0x98] sm:$0xff] %v908
  %987 = vst [vmem:[%s3 + $0xa0] sm:$0xff] %v910
  %988 = vst [vmem:[%s3 + $0xa8] sm:$0xff] %v912
  %989 = vst [vmem:[%s3 + $0xb0] sm:$0xff] %v914
  %990 = vst [vmem:[%s3 + $0xb8] sm:$0xff] %v916
  %991 = vst [vmem:[%s3 + $0xc0] sm:$0xff] %v918
  %992 = vst [vmem:[%s3 + $0xc8] sm:$0xff] %v920
  %993 = vst [vmem:[%s3 + $0xd0] sm:$0xff] %v922
  %994 = vst [vmem:[%s3 + $0xd8] sm:$0xff] %v924
  %995 = vst [vmem:[%s3 + $0xe0] sm:$0xff] %v926
  %996 = vst [vmem:[%s3 + $0xe8] sm:$0xff] %v928
  %997 = vst [vmem:[%s3 + $0xf0] sm:$0xff] %v930
  %998 = vst [vmem:[%s3 + $0xf8] sm:$0xff] %v932
  %999 = vst [vmem:[%s3 + $0x100] sm:$0xff] %v934
  %1000 = vst [vmem:[%s3 + $0x108] sm:$0xff] %v936
  %1001 = vst [vmem:[%s3 + $0x110] sm:$0xff] %v938
  %1002 = vst [vmem:[%s3 + $0x118] sm:$0xff] %v940
  %1003 = vst [vmem:[%s3 + $0x120] sm:$0xff] %v942
  %1004 = vst [vmem:[%s3 + $0x128] sm:$0xff] %v944
  %1005 = vst [vmem:[%s3 + $0x130] sm:$0xff] %v946
  %1006 = vst [vmem:[%s3 + $0x138] sm:$0xff] %v948
  %1007 = vst [vmem:[%s3 + $0x140] sm:$0xff] %v950
  %1008 = vst [vmem:[%s3 + $0x148] sm:$0xff] %v952
  %1009 = vst [vmem:[%s3 + $0x150] sm:$0xff] %v954
  %1010 = vst [vmem:[%s3 + $0x158] sm:$0xff] %v956
  %1011 = vst [vmem:[%s3 + $0x160] sm:$0xff] %v958
  %1012 = vst [vmem:[%s3 + $0x168] sm:$0xff] %v960
  %1013 = vst [vmem:[%s3 + $0x170] sm:$0xff] %v962
  %1014 = vst [vmem:[%s3 + $0x178] sm:$0xff] %v964
  %1015 = vst [vmem:[%s3 + $0x180] sm:$0xff] %v966
  // Predicated region
  $region14: #{network_forward.19} parent=0 // pred_check
    _
  $region15: #{network_forward.19} parent=0 // pred_check_branch
    %1017 = sbr.rel (0) target = $region17
  $region16: #{network_forward.19} parent=0 // pred_region
    _
  $region17: #{network_forward.19} parent=0 // pred_fallthru
    _
  // Predicated region
  $region18: #{network_forward.19} parent=0 // pred_check
    _
  $region19: #{network_forward.19} parent=0 // pred_check_branch
    %1019 = sbr.rel (0) target = $region21
  $region20: #{network_forward.19} parent=0 // pred_region
    _
  $region21: #{network_forward.19} parent=0 // pred_fallthru
    _

</llo_original>
